<compile_context>
chip_gen: v7x
topology: tpu7x:2x2x1
jax: 0.10.0
libtpu: 0.0.40
codegen_flags: <defaults>
</compile_context>

<pallas_src>
import functools

import jax
import jax.numpy as jnp
from jax.experimental import pallas as pl
from jax.experimental.pallas import tpu as pltpu

NUM_BLOCKS = 6           # forward uses block1, block3, block5, block7, block9, block11
C_IN = 512
C_BLK = 32
C_FC1 = 128
C_OUT = 2
PACK = 4                 # batch rows packed into the lane dimension
PK_IN = PACK * C_IN      # 2048
PK_BLK = PACK * C_BLK    # 128
PK_FC1 = PACK * C_FC1    # 512
EPS = 1e-5
NEG_SLOPE = 0.01


def _lrelu(x):
    return jnp.where(x > 0, x, NEG_SLOPE * x)


def _round_up(n, m):
    return ((n + m - 1) // m) * m


# ----------------------------------------------------------------------------- kernel
def spectrogram_head_kernel(
    x_ref,                    # [TBp, 2048] bf16   (4 batch rows packed per sublane row)
    w0_ref, b0_ref,           # [2048, 128] bf16, [1, 128] f32    conv1 center tap (bdiag)
    wcat_ref, bcat_ref,       # [6, 128, 256] bf16, [6, 256] f32  [conv1+bn1 | conv11]
    wc2_ref, bc2_ref,         # [6, 128, 128] bf16, [6, 128] f32  conv2 (last has bn folded)
    w1_ref, b1_ref,           # [128, 512] bf16, [1, 512] f32     fc1 (bdiag)
    wd_ref, bd_ref,           # [512, 128] bf16, [1, 128] f32     fc2 logit-diff (bdiag)
    out_ref,                  # [TBp, 128] f32  (log-probs at lanes 32g, 32g+1 per group g)
):
    f32 = jnp.float32
    bf16 = jnp.bfloat16

    # conv1: Conv2d(512, 32, k=3, s=1, p=1) on 1x1 input -> center-tap matmul + bias.
    h = jnp.dot(x_ref[...], w0_ref[...], preferred_element_type=f32) + b0_ref[...]

    # six ResNetBlocks (the reference block feeds `x`, not the pre_bn output, into
    # conv1 -- the pre_bn/lrelu result is discarded, so all blocks compute the same
    # expression regardless of `first`).  bn1 is pre-folded into the conv1 half of
    # wcat; the final BatchNorm is pre-folded into the last block's wc2 / conv11 half.
    for i in range(NUM_BLOCKS):
        z = (jnp.dot(h.astype(bf16), wcat_ref[i], preferred_element_type=f32)
             + bcat_ref[i:i + 1, :])              # [TBp, 256]
        t = _lrelu(z[:, :PK_BLK])                 # conv1 -> bn1 -> lrelu  (lanes 0..127)
        # Dropout(0.5): identity in eval mode.
        t = (jnp.dot(t.astype(bf16), wc2_ref[i], preferred_element_type=f32)
             + bc2_ref[i:i + 1, :])               # conv2
        h = t + z[:, PK_BLK:]                     # + conv11 residual     (lanes 128..255)

    # final BatchNorm already folded into the last block's weights; just leaky relu.
    h = _lrelu(h)

    # fc1 -> lrelu   (block-diagonal: group g occupies lanes [128g : 128g+128])
    h = _lrelu(jnp.dot(h.astype(bf16), w1_ref[...], preferred_element_type=f32)
               + b1_ref[...])                     # [TBp, 512]

    # fc2 + log_softmax over the 2 real classes, fused:
    #   d = logit1 - logit0 (broadcast over each group's 32 lanes)
    #   logp0 = -softplus(d),  logp1 = d - softplus(d)
    d = jnp.dot(h.astype(bf16), wd_ref[...], preferred_element_type=f32) + bd_ref[...]
    sp = jnp.maximum(d, 0.0) + jnp.log(1.0 + jnp.exp(-jnp.abs(d)))   # stable softplus
    lane = jax.lax.broadcasted_iota(jnp.int32, d.shape, 1)
    out_ref[...] = jnp.where(lane % C_BLK == 1, d - sp, -sp)


# ------------------------------------------------------------------------- parameters
def init_params(key):
    """Deterministic synthetic parameters matching the PyTorch module shapes."""
    ks = list(jax.random.split(key, 40))
    kit = iter(ks)

    def nrm(shape, scale):
        return jax.random.normal(next(kit), shape, dtype=jnp.float32) * scale

    p = {}
    # conv1: Conv2d(512, 32, 3, 3) + bias
    p["conv1_w"] = nrm((C_BLK, C_IN, 3, 3), 0.02)
    p["conv1_b"] = nrm((C_BLK,), 0.02)

    # 6 ResNetBlocks, each: conv1, bn1, conv2, conv11 (all 32->32, 3x3, with bias)
    p["blk_wc1"] = nrm((NUM_BLOCKS, C_BLK, C_BLK, 3, 3), 0.05)
    p["blk_b1"] = nrm((NUM_BLOCKS, C_BLK), 0.05)
    p["blk_bn_g"] = 1.0 + nrm((NUM_BLOCKS, C_BLK), 0.05)
    p["blk_bn_b"] = nrm((NUM_BLOCKS, C_BLK), 0.05)
    p["blk_bn_m"] = nrm((NUM_BLOCKS, C_BLK), 0.05)
    p["blk_bn_v"] = 1.0 + jnp.abs(nrm((NUM_BLOCKS, C_BLK), 0.05))
    p["blk_wc2"] = nrm((NUM_BLOCKS, C_BLK, C_BLK, 3, 3), 0.05)
    p["blk_b2"] = nrm((NUM_BLOCKS, C_BLK), 0.05)
    p["blk_w11"] = nrm((NUM_BLOCKS, C_BLK, C_BLK, 3, 3), 0.05)
    p["blk_b11"] = nrm((NUM_BLOCKS, C_BLK), 0.05)

    # final BatchNorm2d(32)
    p["bn_g"] = 1.0 + nrm((C_BLK,), 0.05)
    p["bn_b"] = nrm((C_BLK,), 0.05)
    p["bn_m"] = nrm((C_BLK,), 0.05)
    p["bn_v"] = 1.0 + jnp.abs(nrm((C_BLK,), 0.05))

    # fc1: Linear(32, 128), fc2: Linear(128, 2)  (PyTorch stores [out, in])
    p["fc1_w"] = nrm((C_FC1, C_BLK), 0.05)
    p["fc1_b"] = nrm((C_FC1,), 0.05)
    p["fc2_w"] = nrm((C_OUT, C_FC1), 0.05)
    p["fc2_b"] = nrm((C_OUT,), 0.05)
    return p


def prepare_weights(p):
    """One-time prep: center taps, eval-mode BN folding, lane-packing (block-diagonal
    weights for PACK batch rows per sublane row), bf16 cast.  Call once, reuse."""
    eye = jnp.eye(PACK, dtype=jnp.float32)

    def bdiag(w):                                        # [k, n] -> [PACK*k, PACK*n]
        return jnp.kron(eye, w)

    # center taps, (in, out) layout
    w0 = jnp.transpose(p["conv1_w"][:, :, 1, 1], (1, 0))          # [512, 32]
    b0 = p["conv1_b"]

    wc1 = jnp.transpose(p["blk_wc1"][:, :, :, 1, 1], (0, 2, 1))   # [6, 32, 32]
    wc2 = jnp.transpose(p["blk_wc2"][:, :, :, 1, 1], (0, 2, 1))
    w11 = jnp.transpose(p["blk_w11"][:, :, :, 1, 1], (0, 2, 1))
    bb1, bb2, bb11 = p["blk_b1"], p["blk_b2"], p["blk_b11"]

    # fold each block's eval-mode bn1 into the conv1 center tap / bias
    s_blk = p["blk_bn_g"] * jax.lax.rsqrt(p["blk_bn_v"] + EPS)    # [6, 32]
    wc1 = wc1 * s_blk[:, None, :]
    bb1 = (bb1 - p["blk_bn_m"]) * s_blk + p["blk_bn_b"]

    # fold the final eval-mode bn into the last block's conv2 / conv11 paths
    # (scale distributes over the residual sum; shift added once to the conv2 bias)
    s_f = p["bn_g"] * jax.lax.rsqrt(p["bn_v"] + EPS)              # [32]
    shift_f = p["bn_b"] - p["bn_m"] * s_f
    wc2 = wc2.at[-1].multiply(s_f[None, :])
    bb2 = bb2.at[-1].set(bb2[-1] * s_f + shift_f)
    w11 = w11.at[-1].multiply(s_f[None, :])
    bb11 = bb11.at[-1].set(bb11[-1] * s_f)

    # fc1 / fc2 (logit-difference form: log_softmax over 2 classes == +/- softplus(d))
    w1 = jnp.transpose(p["fc1_w"], (1, 0))                        # [32, 128]
    b1 = p["fc1_b"]
    wdiff = p["fc2_w"][1] - p["fc2_w"][0]                         # [128]
    bdiff = p["fc2_b"][1] - p["fc2_b"][0]                         # scalar

    # ---- lane-pack PACK batch rows via block-diagonal weights ----
    w0_bd = bdiag(w0)                                             # [2048, 128]
    b0_bd = jnp.tile(b0, PACK)[None, :]                           # [1, 128]

    wcat_bd = jnp.concatenate(
        [jnp.stack([bdiag(wc1[i]) for i in range(NUM_BLOCKS)]),
         jnp.stack([bdiag(w11[i]) for i in range(NUM_BLOCKS)])], axis=2)   # [6, 128, 256]
    bcat_bd = jnp.concatenate(
        [jnp.tile(bb1, (1, PACK)), jnp.tile(bb11, (1, PACK))], axis=1)     # [6, 256]
    wc2_bd = jnp.stack([bdiag(wc2[i]) for i in range(NUM_BLOCKS)])         # [6, 128, 128]
    bc2_bd = jnp.tile(bb2, (1, PACK))                                      # [6, 128]

    w1_bd = bdiag(w1)                                             # [128, 512]
    b1_bd = jnp.tile(b1, PACK)[None, :]                           # [1, 512]
    wd_bd = bdiag(jnp.tile(wdiff[:, None], (1, C_BLK)))           # [512, 128]
    bd_bd = jnp.full((1, PK_BLK), bdiff, jnp.float32)             # [1, 128]

    bf = jnp.bfloat16
    return dict(
        w0=w0_bd.astype(bf), b0=b0_bd,
        wcat=wcat_bd.astype(bf), bcat=bcat_bd,
        wc2=wc2_bd.astype(bf), bc2=bc2_bd,
        w1=w1_bd.astype(bf), b1=b1_bd,
        wd=wd_bd.astype(bf), bd=bd_bd,
    )


# ---------------------------------------------------------------------------- wrapper
@functools.partial(jax.jit, static_argnames=("max_batch_rows",))
def spectrogram_model_head(x_nchw, prep, *, max_batch_rows=4096):
    """x_nchw: [B, 512, 1, 1] float32 (documented output of the resnet backbone)."""
    B = x_nchw.shape[0]
    x = x_nchw.reshape(B, C_IN).astype(jnp.bfloat16)   # bf16 -> halves the HBM stream

    # pack 4 batch rows per sublane row; bf16 needs sublane tiles of 16
    bp = -(-B // PACK)
    max_tp = max(16, (max_batch_rows // PACK) // 16 * 16)
    # >= 2 grid steps for large B so both v7x TensorCores get work
    tp = min(max_tp, _round_up(max(-(-bp // 2), 1), 16))
    bp_pad = _round_up(bp, tp)

    x = jnp.pad(x, ((0, bp_pad * PACK - B), (0, 0)))
    x = x.reshape(bp_pad, PK_IN)                       # [Bp, 2048], free view

    weights = (prep["w0"], prep["b0"], prep["wcat"], prep["bcat"],
               prep["wc2"], prep["bc2"], prep["w1"], prep["b1"],
               prep["wd"], prep["bd"])

    def _const_spec(a):
        nd = a.ndim
        return pl.BlockSpec(a.shape, lambda i, _nd=nd: (0,) * _nd)

    out = pl.pallas_call(
        spectrogram_head_kernel,
        out_shape=jax.ShapeDtypeStruct((bp_pad, PK_BLK), jnp.float32),
        grid=(bp_pad // tp,),
        in_specs=[pl.BlockSpec((tp, PK_IN), lambda i: (i, 0))]
                 + [_const_spec(a) for a in weights],
        out_specs=pl.BlockSpec((tp, PK_BLK), lambda i: (i, 0)),
        compiler_params=pltpu.CompilerParams(
            dimension_semantics=("parallel",),
            vmem_limit_bytes=32 * 1024 * 1024),
    )(x, *weights)

    # unpack: group g of packed row r is batch row PACK*r + g, log-probs at lanes 0/1
    return out.reshape(bp_pad * PACK, C_BLK)[:B, :C_OUT]


# -------------------------------------------------------------------------- reference
def reference_head(x_nchw, p):
    """Pure-JAX f32 reference of the original (un-folded) math."""
    B = x_nchw.shape[0]
    h = x_nchw.reshape(B, C_IN) @ p["conv1_w"][:, :, 1, 1].T + p["conv1_b"]
    for i in range(NUM_BLOCKS):
        prev = h @ p["blk_w11"][i, :, :, 1, 1].T + p["blk_b11"][i]
        t = h @ p["blk_wc1"][i, :, :, 1, 1].T + p["blk_b1"][i]
        t = ((t - p["blk_bn_m"][i]) / jnp.sqrt(p["blk_bn_v"][i] + EPS)
             * p["blk_bn_g"][i] + p["blk_bn_b"][i])
        t = jnp.where(t > 0, t, NEG_SLOPE * t)
        t = t @ p["blk_wc2"][i, :, :, 1, 1].T + p["blk_b2"][i]
        h = t + prev
    h = (h - p["bn_m"]) / jnp.sqrt(p["bn_v"] + EPS) * p["bn_g"] + p["bn_b"]
    h = jnp.where(h > 0, h, NEG_SLOPE * h)
    h = h @ p["fc1_w"].T + p["fc1_b"]
    h = jnp.where(h > 0, h, NEG_SLOPE * h)
    h = h @ p["fc2_w"].T + p["fc2_b"]
    return jax.nn.log_softmax(h, axis=1)


if __name__ == "__main__":
    key = jax.random.PRNGKey(0)
    k_x, k_p = jax.random.split(key)

    B = 6   # deliberately not a multiple of PACK to exercise the padding path
    # Input to the head: documented resnet18_cbam feature output [B, 512, 1, 1].
    x = jax.random.normal(k_x, (B, C_IN, 1, 1), dtype=jnp.float32)
    params = init_params(k_p)

    prep = prepare_weights(params)          # one-time weight prep, hoisted out of forward
    out = spectrogram_model_head(x, prep)
    out = jax.block_until_ready(out)

    ref = reference_head(x, params)
    assert out.shape == (B, C_OUT)
    assert bool(jnp.all(jnp.isfinite(out)))
    # bf16 MXU operands -> compare against the f32 reference with a relaxed tolerance
    assert bool(jnp.max(jnp.abs(out - ref)) < 1e-2)
    print("KERNEL_OK")
</pallas_src>

<mosaic_0001>
module attributes {stable_mosaic.version = 11 : i64} {
  func.func @spectrogram_head_kernel(%arg0: i32, %arg1: memref<16x2048xbf16, #tpu.memory_space<vmem>>, %arg2: memref<2048x128xbf16, #tpu.memory_space<vmem>>, %arg3: memref<1x128xf32, #tpu.memory_space<vmem>>, %arg4: memref<6x128x256xbf16, #tpu.memory_space<vmem>>, %arg5: memref<6x256xf32, #tpu.memory_space<vmem>>, %arg6: memref<6x128x128xbf16, #tpu.memory_space<vmem>>, %arg7: memref<6x128xf32, #tpu.memory_space<vmem>>, %arg8: memref<128x512xbf16, #tpu.memory_space<vmem>>, %arg9: memref<1x512xf32, #tpu.memory_space<vmem>>, %arg10: memref<512x128xbf16, #tpu.memory_space<vmem>>, %arg11: memref<1x128xf32, #tpu.memory_space<vmem>>, %arg12: memref<16x128xf32, #tpu.memory_space<vmem>>) attributes {dimension_semantics = [#tpu.dimension_semantics<parallel>], iteration_bounds = array<i64: 1>, scalar_prefetch = 0 : i64, scratch_operands = 0 : i64, tpu.core_type = #tpu.core_type<tc>, window_params = [{transform_indices = @transform_0, window_bounds = array<i64: 16, 2048>}, {pipeline_mode = #tpu.pipeline_mode<synchronous>, transform_indices = @transform_1, window_bounds = array<i64: 2048, 128>}, {pipeline_mode = #tpu.pipeline_mode<synchronous>, transform_indices = @transform_2, window_bounds = array<i64: 1, 128>}, {pipeline_mode = #tpu.pipeline_mode<synchronous>, transform_indices = @transform_3, window_bounds = array<i64: 6, 128, 256>}, {pipeline_mode = #tpu.pipeline_mode<synchronous>, transform_indices = @transform_4, window_bounds = array<i64: 6, 256>}, {pipeline_mode = #tpu.pipeline_mode<synchronous>, transform_indices = @transform_5, window_bounds = array<i64: 6, 128, 128>}, {pipeline_mode = #tpu.pipeline_mode<synchronous>, transform_indices = @transform_6, window_bounds = array<i64: 6, 128>}, {pipeline_mode = #tpu.pipeline_mode<synchronous>, transform_indices = @transform_7, window_bounds = array<i64: 128, 512>}, {pipeline_mode = #tpu.pipeline_mode<synchronous>, transform_indices = @transform_8, window_bounds = array<i64: 1, 512>}, {pipeline_mode = #tpu.pipeline_mode<synchronous>, transform_indices = @transform_9, window_bounds = array<i64: 512, 128>}, {pipeline_mode = #tpu.pipeline_mode<synchronous>, transform_indices = @transform_10, window_bounds = array<i64: 1, 128>}, {transform_indices = @transform_11, window_bounds = array<i64: 16, 128>}]} {
    %c0 = arith.constant 0 : index
    %c0_0 = arith.constant 0 : index
    %0 = vector.load %arg1[%c0, %c0_0] : memref<16x2048xbf16, #tpu.memory_space<vmem>>, vector<16x2048xbf16>
    %c0_1 = arith.constant 0 : index
    %c0_2 = arith.constant 0 : index
    %1 = vector.load %arg2[%c0_1, %c0_2] : memref<2048x128xbf16, #tpu.memory_space<vmem>>, vector<2048x128xbf16>
    %cst = arith.constant dense<0.000000e+00> : vector<16x128xf32>
    %2 = tpu.matmul %0, %1, %cst {dimension_numbers = #tpu.dot_dimension_numbers<[1], [0], [0], [1], [0, 0, 1, 1], [], []>} : vector<16x2048xbf16>, vector<2048x128xbf16>, vector<16x128xf32> -> vector<16x128xf32>
    %c0_3 = arith.constant 0 : index
    %c0_4 = arith.constant 0 : index
    %3 = vector.load %arg3[%c0_3, %c0_4] : memref<1x128xf32, #tpu.memory_space<vmem>>, vector<1x128xf32>
    %4 = vector.broadcast %3 : vector<1x128xf32> to vector<16x128xf32>
    %5 = arith.addf %2, %4 : vector<16x128xf32>
    %6 = arith.truncf %5 : vector<16x128xf32> to vector<16x128xbf16>
    %c0_5 = arith.constant 0 : index
    %c0_6 = arith.constant 0 : index
    %c0_7 = arith.constant 0 : index
    %7 = vector.load %arg4[%c0_5, %c0_6, %c0_7] : memref<6x128x256xbf16, #tpu.memory_space<vmem>>, vector<1x128x256xbf16>
    %8 = vector.shape_cast %7 : vector<1x128x256xbf16> to vector<128x256xbf16>
    %cst_8 = arith.constant dense<0.000000e+00> : vector<16x256xf32>
    %9 = tpu.matmul %6, %8, %cst_8 {dimension_numbers = #tpu.dot_dimension_numbers<[1], [0], [0], [1], [0, 0, 1, 1], [], []>} : vector<16x128xbf16>, vector<128x256xbf16>, vector<16x256xf32> -> vector<16x256xf32>
    %c0_9 = arith.constant 0 : index
    %c0_10 = arith.constant 0 : index
    %10 = vector.load %arg5[%c0_9, %c0_10] : memref<6x256xf32, #tpu.memory_space<vmem>>, vector<1x256xf32>
    %11 = vector.broadcast %10 : vector<1x256xf32> to vector<16x256xf32>
    %12 = arith.addf %9, %11 : vector<16x256xf32>
    %13 = vector.extract_strided_slice %12 {offsets = [0, 0], sizes = [16, 128], strides = [1, 1]} : vector<16x256xf32> to vector<16x128xf32>
    %cst_11 = arith.constant 0.000000e+00 : f32
    %14 = vector.broadcast %cst_11 : f32 to vector<16x128xf32>
    %15 = arith.cmpf ogt, %13, %14 : vector<16x128xf32>
    %cst_12 = arith.constant 0.00999999977 : f32
    %16 = vector.broadcast %cst_12 : f32 to vector<16x128xf32>
    %17 = arith.mulf %16, %13 : vector<16x128xf32>
    %18 = arith.select %15, %13, %17 : vector<16x128xi1>, vector<16x128xf32>
    %19 = arith.truncf %18 : vector<16x128xf32> to vector<16x128xbf16>
    %c0_13 = arith.constant 0 : index
    %c0_14 = arith.constant 0 : index
    %c0_15 = arith.constant 0 : index
    %20 = vector.load %arg6[%c0_13, %c0_14, %c0_15] : memref<6x128x128xbf16, #tpu.memory_space<vmem>>, vector<1x128x128xbf16>
    %21 = vector.shape_cast %20 : vector<1x128x128xbf16> to vector<128x128xbf16>
    %cst_16 = arith.constant dense<0.000000e+00> : vector<16x128xf32>
    %22 = tpu.matmul %19, %21, %cst_16 {dimension_numbers = #tpu.dot_dimension_numbers<[1], [0], [0], [1], [0, 0, 1, 1], [], []>} : vector<16x128xbf16>, vector<128x128xbf16>, vector<16x128xf32> -> vector<16x128xf32>
    %c0_17 = arith.constant 0 : index
    %c0_18 = arith.constant 0 : index
    %23 = vector.load %arg7[%c0_17, %c0_18] : memref<6x128xf32, #tpu.memory_space<vmem>>, vector<1x128xf32>
    %24 = vector.broadcast %23 : vector<1x128xf32> to vector<16x128xf32>
    %25 = arith.addf %22, %24 : vector<16x128xf32>
    %26 = vector.extract_strided_slice %12 {offsets = [0, 128], sizes = [16, 128], strides = [1, 1]} : vector<16x256xf32> to vector<16x128xf32>
    %27 = arith.addf %25, %26 : vector<16x128xf32>
    %28 = arith.truncf %27 : vector<16x128xf32> to vector<16x128xbf16>
    %c1 = arith.constant 1 : index
    %c0_19 = arith.constant 0 : index
    %c0_20 = arith.constant 0 : index
    %29 = vector.load %arg4[%c1, %c0_19, %c0_20] : memref<6x128x256xbf16, #tpu.memory_space<vmem>>, vector<1x128x256xbf16>
    %30 = vector.shape_cast %29 : vector<1x128x256xbf16> to vector<128x256xbf16>
    %cst_21 = arith.constant dense<0.000000e+00> : vector<16x256xf32>
    %31 = tpu.matmul %28, %30, %cst_21 {dimension_numbers = #tpu.dot_dimension_numbers<[1], [0], [0], [1], [0, 0, 1, 1], [], []>} : vector<16x128xbf16>, vector<128x256xbf16>, vector<16x256xf32> -> vector<16x256xf32>
    %c1_22 = arith.constant 1 : index
    %c0_23 = arith.constant 0 : index
    %32 = vector.load %arg5[%c1_22, %c0_23] : memref<6x256xf32, #tpu.memory_space<vmem>>, vector<1x256xf32>
    %33 = vector.broadcast %32 : vector<1x256xf32> to vector<16x256xf32>
    %34 = arith.addf %31, %33 : vector<16x256xf32>
    %35 = vector.extract_strided_slice %34 {offsets = [0, 0], sizes = [16, 128], strides = [1, 1]} : vector<16x256xf32> to vector<16x128xf32>
    %cst_24 = arith.constant 0.000000e+00 : f32
    %36 = vector.broadcast %cst_24 : f32 to vector<16x128xf32>
    %37 = arith.cmpf ogt, %35, %36 : vector<16x128xf32>
    %cst_25 = arith.constant 0.00999999977 : f32
    %38 = vector.broadcast %cst_25 : f32 to vector<16x128xf32>
    %39 = arith.mulf %38, %35 : vector<16x128xf32>
    %40 = arith.select %37, %35, %39 : vector<16x128xi1>, vector<16x128xf32>
    %41 = arith.truncf %40 : vector<16x128xf32> to vector<16x128xbf16>
    %c1_26 = arith.constant 1 : index
    %c0_27 = arith.constant 0 : index
    %c0_28 = arith.constant 0 : index
    %42 = vector.load %arg6[%c1_26, %c0_27, %c0_28] : memref<6x128x128xbf16, #tpu.memory_space<vmem>>, vector<1x128x128xbf16>
    %43 = vector.shape_cast %42 : vector<1x128x128xbf16> to vector<128x128xbf16>
    %cst_29 = arith.constant dense<0.000000e+00> : vector<16x128xf32>
    %44 = tpu.matmul %41, %43, %cst_29 {dimension_numbers = #tpu.dot_dimension_numbers<[1], [0], [0], [1], [0, 0, 1, 1], [], []>} : vector<16x128xbf16>, vector<128x128xbf16>, vector<16x128xf32> -> vector<16x128xf32>
    %c1_30 = arith.constant 1 : index
    %c0_31 = arith.constant 0 : index
    %45 = vector.load %arg7[%c1_30, %c0_31] : memref<6x128xf32, #tpu.memory_space<vmem>>, vector<1x128xf32>
    %46 = vector.broadcast %45 : vector<1x128xf32> to vector<16x128xf32>
    %47 = arith.addf %44, %46 : vector<16x128xf32>
    %48 = vector.extract_strided_slice %34 {offsets = [0, 128], sizes = [16, 128], strides = [1, 1]} : vector<16x256xf32> to vector<16x128xf32>
    %49 = arith.addf %47, %48 : vector<16x128xf32>
    %50 = arith.truncf %49 : vector<16x128xf32> to vector<16x128xbf16>
    %c2 = arith.constant 2 : index
    %c0_32 = arith.constant 0 : index
    %c0_33 = arith.constant 0 : index
    %51 = vector.load %arg4[%c2, %c0_32, %c0_33] : memref<6x128x256xbf16, #tpu.memory_space<vmem>>, vector<1x128x256xbf16>
    %52 = vector.shape_cast %51 : vector<1x128x256xbf16> to vector<128x256xbf16>
    %cst_34 = arith.constant dense<0.000000e+00> : vector<16x256xf32>
    %53 = tpu.matmul %50, %52, %cst_34 {dimension_numbers = #tpu.dot_dimension_numbers<[1], [0], [0], [1], [0, 0, 1, 1], [], []>} : vector<16x128xbf16>, vector<128x256xbf16>, vector<16x256xf32> -> vector<16x256xf32>
    %c2_35 = arith.constant 2 : index
    %c0_36 = arith.constant 0 : index
    %54 = vector.load %arg5[%c2_35, %c0_36] : memref<6x256xf32, #tpu.memory_space<vmem>>, vector<1x256xf32>
    %55 = vector.broadcast %54 : vector<1x256xf32> to vector<16x256xf32>
    %56 = arith.addf %53, %55 : vector<16x256xf32>
    %57 = vector.extract_strided_slice %56 {offsets = [0, 0], sizes = [16, 128], strides = [1, 1]} : vector<16x256xf32> to vector<16x128xf32>
    %cst_37 = arith.constant 0.000000e+00 : f32
    %58 = vector.broadcast %cst_37 : f32 to vector<16x128xf32>
    %59 = arith.cmpf ogt, %57, %58 : vector<16x128xf32>
    %cst_38 = arith.constant 0.00999999977 : f32
    %60 = vector.broadcast %cst_38 : f32 to vector<16x128xf32>
    %61 = arith.mulf %60, %57 : vector<16x128xf32>
    %62 = arith.select %59, %57, %61 : vector<16x128xi1>, vector<16x128xf32>
    %63 = arith.truncf %62 : vector<16x128xf32> to vector<16x128xbf16>
    %c2_39 = arith.constant 2 : index
    %c0_40 = arith.constant 0 : index
    %c0_41 = arith.constant 0 : index
    %64 = vector.load %arg6[%c2_39, %c0_40, %c0_41] : memref<6x128x128xbf16, #tpu.memory_space<vmem>>, vector<1x128x128xbf16>
    %65 = vector.shape_cast %64 : vector<1x128x128xbf16> to vector<128x128xbf16>
    %cst_42 = arith.constant dense<0.000000e+00> : vector<16x128xf32>
    %66 = tpu.matmul %63, %65, %cst_42 {dimension_numbers = #tpu.dot_dimension_numbers<[1], [0], [0], [1], [0, 0, 1, 1], [], []>} : vector<16x128xbf16>, vector<128x128xbf16>, vector<16x128xf32> -> vector<16x128xf32>
    %c2_43 = arith.constant 2 : index
    %c0_44 = arith.constant 0 : index
    %67 = vector.load %arg7[%c2_43, %c0_44] : memref<6x128xf32, #tpu.memory_space<vmem>>, vector<1x128xf32>
    %68 = vector.broadcast %67 : vector<1x128xf32> to vector<16x128xf32>
    %69 = arith.addf %66, %68 : vector<16x128xf32>
    %70 = vector.extract_strided_slice %56 {offsets = [0, 128], sizes = [16, 128], strides = [1, 1]} : vector<16x256xf32> to vector<16x128xf32>
    %71 = arith.addf %69, %70 : vector<16x128xf32>
    %72 = arith.truncf %71 : vector<16x128xf32> to vector<16x128xbf16>
    %c3 = arith.constant 3 : index
    %c0_45 = arith.constant 0 : index
    %c0_46 = arith.constant 0 : index
    %73 = vector.load %arg4[%c3, %c0_45, %c0_46] : memref<6x128x256xbf16, #tpu.memory_space<vmem>>, vector<1x128x256xbf16>
    %74 = vector.shape_cast %73 : vector<1x128x256xbf16> to vector<128x256xbf16>
    %cst_47 = arith.constant dense<0.000000e+00> : vector<16x256xf32>
    %75 = tpu.matmul %72, %74, %cst_47 {dimension_numbers = #tpu.dot_dimension_numbers<[1], [0], [0], [1], [0, 0, 1, 1], [], []>} : vector<16x128xbf16>, vector<128x256xbf16>, vector<16x256xf32> -> vector<16x256xf32>
    %c3_48 = arith.constant 3 : index
    %c0_49 = arith.constant 0 : index
    %76 = vector.load %arg5[%c3_48, %c0_49] : memref<6x256xf32, #tpu.memory_space<vmem>>, vector<1x256xf32>
    %77 = vector.broadcast %76 : vector<1x256xf32> to vector<16x256xf32>
    %78 = arith.addf %75, %77 : vector<16x256xf32>
    %79 = vector.extract_strided_slice %78 {offsets = [0, 0], sizes = [16, 128], strides = [1, 1]} : vector<16x256xf32> to vector<16x128xf32>
    %cst_50 = arith.constant 0.000000e+00 : f32
    %80 = vector.broadcast %cst_50 : f32 to vector<16x128xf32>
    %81 = arith.cmpf ogt, %79, %80 : vector<16x128xf32>
    %cst_51 = arith.constant 0.00999999977 : f32
    %82 = vector.broadcast %cst_51 : f32 to vector<16x128xf32>
    %83 = arith.mulf %82, %79 : vector<16x128xf32>
    %84 = arith.select %81, %79, %83 : vector<16x128xi1>, vector<16x128xf32>
    %85 = arith.truncf %84 : vector<16x128xf32> to vector<16x128xbf16>
    %c3_52 = arith.constant 3 : index
    %c0_53 = arith.constant 0 : index
    %c0_54 = arith.constant 0 : index
    %86 = vector.load %arg6[%c3_52, %c0_53, %c0_54] : memref<6x128x128xbf16, #tpu.memory_space<vmem>>, vector<1x128x128xbf16>
    %87 = vector.shape_cast %86 : vector<1x128x128xbf16> to vector<128x128xbf16>
    %cst_55 = arith.constant dense<0.000000e+00> : vector<16x128xf32>
    %88 = tpu.matmul %85, %87, %cst_55 {dimension_numbers = #tpu.dot_dimension_numbers<[1], [0], [0], [1], [0, 0, 1, 1], [], []>} : vector<16x128xbf16>, vector<128x128xbf16>, vector<16x128xf32> -> vector<16x128xf32>
    %c3_56 = arith.constant 3 : index
    %c0_57 = arith.constant 0 : index
    %89 = vector.load %arg7[%c3_56, %c0_57] : memref<6x128xf32, #tpu.memory_space<vmem>>, vector<1x128xf32>
    %90 = vector.broadcast %89 : vector<1x128xf32> to vector<16x128xf32>
    %91 = arith.addf %88, %90 : vector<16x128xf32>
    %92 = vector.extract_strided_slice %78 {offsets = [0, 128], sizes = [16, 128], strides = [1, 1]} : vector<16x256xf32> to vector<16x128xf32>
    %93 = arith.addf %91, %92 : vector<16x128xf32>
    %94 = arith.truncf %93 : vector<16x128xf32> to vector<16x128xbf16>
    %c4 = arith.constant 4 : index
    %c0_58 = arith.constant 0 : index
    %c0_59 = arith.constant 0 : index
    %95 = vector.load %arg4[%c4, %c0_58, %c0_59] : memref<6x128x256xbf16, #tpu.memory_space<vmem>>, vector<1x128x256xbf16>
    %96 = vector.shape_cast %95 : vector<1x128x256xbf16> to vector<128x256xbf16>
    %cst_60 = arith.constant dense<0.000000e+00> : vector<16x256xf32>
    %97 = tpu.matmul %94, %96, %cst_60 {dimension_numbers = #tpu.dot_dimension_numbers<[1], [0], [0], [1], [0, 0, 1, 1], [], []>} : vector<16x128xbf16>, vector<128x256xbf16>, vector<16x256xf32> -> vector<16x256xf32>
    %c4_61 = arith.constant 4 : index
    %c0_62 = arith.constant 0 : index
    %98 = vector.load %arg5[%c4_61, %c0_62] : memref<6x256xf32, #tpu.memory_space<vmem>>, vector<1x256xf32>
    %99 = vector.broadcast %98 : vector<1x256xf32> to vector<16x256xf32>
    %100 = arith.addf %97, %99 : vector<16x256xf32>
    %101 = vector.extract_strided_slice %100 {offsets = [0, 0], sizes = [16, 128], strides = [1, 1]} : vector<16x256xf32> to vector<16x128xf32>
    %cst_63 = arith.constant 0.000000e+00 : f32
    %102 = vector.broadcast %cst_63 : f32 to vector<16x128xf32>
    %103 = arith.cmpf ogt, %101, %102 : vector<16x128xf32>
    %cst_64 = arith.constant 0.00999999977 : f32
    %104 = vector.broadcast %cst_64 : f32 to vector<16x128xf32>
    %105 = arith.mulf %104, %101 : vector<16x128xf32>
    %106 = arith.select %103, %101, %105 : vector<16x128xi1>, vector<16x128xf32>
    %107 = arith.truncf %106 : vector<16x128xf32> to vector<16x128xbf16>
    %c4_65 = arith.constant 4 : index
    %c0_66 = arith.constant 0 : index
    %c0_67 = arith.constant 0 : index
    %108 = vector.load %arg6[%c4_65, %c0_66, %c0_67] : memref<6x128x128xbf16, #tpu.memory_space<vmem>>, vector<1x128x128xbf16>
    %109 = vector.shape_cast %108 : vector<1x128x128xbf16> to vector<128x128xbf16>
    %cst_68 = arith.constant dense<0.000000e+00> : vector<16x128xf32>
    %110 = tpu.matmul %107, %109, %cst_68 {dimension_numbers = #tpu.dot_dimension_numbers<[1], [0], [0], [1], [0, 0, 1, 1], [], []>} : vector<16x128xbf16>, vector<128x128xbf16>, vector<16x128xf32> -> vector<16x128xf32>
    %c4_69 = arith.constant 4 : index
    %c0_70 = arith.constant 0 : index
    %111 = vector.load %arg7[%c4_69, %c0_70] : memref<6x128xf32, #tpu.memory_space<vmem>>, vector<1x128xf32>
    %112 = vector.broadcast %111 : vector<1x128xf32> to vector<16x128xf32>
    %113 = arith.addf %110, %112 : vector<16x128xf32>
    %114 = vector.extract_strided_slice %100 {offsets = [0, 128], sizes = [16, 128], strides = [1, 1]} : vector<16x256xf32> to vector<16x128xf32>
    %115 = arith.addf %113, %114 : vector<16x128xf32>
    %116 = arith.truncf %115 : vector<16x128xf32> to vector<16x128xbf16>
    %c5 = arith.constant 5 : index
    %c0_71 = arith.constant 0 : index
    %c0_72 = arith.constant 0 : index
    %117 = vector.load %arg4[%c5, %c0_71, %c0_72] : memref<6x128x256xbf16, #tpu.memory_space<vmem>>, vector<1x128x256xbf16>
    %118 = vector.shape_cast %117 : vector<1x128x256xbf16> to vector<128x256xbf16>
    %cst_73 = arith.constant dense<0.000000e+00> : vector<16x256xf32>
    %119 = tpu.matmul %116, %118, %cst_73 {dimension_numbers = #tpu.dot_dimension_numbers<[1], [0], [0], [1], [0, 0, 1, 1], [], []>} : vector<16x128xbf16>, vector<128x256xbf16>, vector<16x256xf32> -> vector<16x256xf32>
    %c5_74 = arith.constant 5 : index
    %c0_75 = arith.constant 0 : index
    %120 = vector.load %arg5[%c5_74, %c0_75] : memref<6x256xf32, #tpu.memory_space<vmem>>, vector<1x256xf32>
    %121 = vector.broadcast %120 : vector<1x256xf32> to vector<16x256xf32>
    %122 = arith.addf %119, %121 : vector<16x256xf32>
    %123 = vector.extract_strided_slice %122 {offsets = [0, 0], sizes = [16, 128], strides = [1, 1]} : vector<16x256xf32> to vector<16x128xf32>
    %cst_76 = arith.constant 0.000000e+00 : f32
    %124 = vector.broadcast %cst_76 : f32 to vector<16x128xf32>
    %125 = arith.cmpf ogt, %123, %124 : vector<16x128xf32>
    %cst_77 = arith.constant 0.00999999977 : f32
    %126 = vector.broadcast %cst_77 : f32 to vector<16x128xf32>
    %127 = arith.mulf %126, %123 : vector<16x128xf32>
    %128 = arith.select %125, %123, %127 : vector<16x128xi1>, vector<16x128xf32>
    %129 = arith.truncf %128 : vector<16x128xf32> to vector<16x128xbf16>
    %c5_78 = arith.constant 5 : index
    %c0_79 = arith.constant 0 : index
    %c0_80 = arith.constant 0 : index
    %130 = vector.load %arg6[%c5_78, %c0_79, %c0_80] : memref<6x128x128xbf16, #tpu.memory_space<vmem>>, vector<1x128x128xbf16>
    %131 = vector.shape_cast %130 : vector<1x128x128xbf16> to vector<128x128xbf16>
    %cst_81 = arith.constant dense<0.000000e+00> : vector<16x128xf32>
    %132 = tpu.matmul %129, %131, %cst_81 {dimension_numbers = #tpu.dot_dimension_numbers<[1], [0], [0], [1], [0, 0, 1, 1], [], []>} : vector<16x128xbf16>, vector<128x128xbf16>, vector<16x128xf32> -> vector<16x128xf32>
    %c5_82 = arith.constant 5 : index
    %c0_83 = arith.constant 0 : index
    %133 = vector.load %arg7[%c5_82, %c0_83] : memref<6x128xf32, #tpu.memory_space<vmem>>, vector<1x128xf32>
    %134 = vector.broadcast %133 : vector<1x128xf32> to vector<16x128xf32>
    %135 = arith.addf %132, %134 : vector<16x128xf32>
    %136 = vector.extract_strided_slice %122 {offsets = [0, 128], sizes = [16, 128], strides = [1, 1]} : vector<16x256xf32> to vector<16x128xf32>
    %137 = arith.addf %135, %136 : vector<16x128xf32>
    %cst_84 = arith.constant 0.000000e+00 : f32
    %138 = vector.broadcast %cst_84 : f32 to vector<16x128xf32>
    %139 = arith.cmpf ogt, %137, %138 : vector<16x128xf32>
    %cst_85 = arith.constant 0.00999999977 : f32
    %140 = vector.broadcast %cst_85 : f32 to vector<16x128xf32>
    %141 = arith.mulf %140, %137 : vector<16x128xf32>
    %142 = arith.select %139, %137, %141 : vector<16x128xi1>, vector<16x128xf32>
    %143 = arith.truncf %142 : vector<16x128xf32> to vector<16x128xbf16>
    %c0_86 = arith.constant 0 : index
    %c0_87 = arith.constant 0 : index
    %144 = vector.load %arg8[%c0_86, %c0_87] : memref<128x512xbf16, #tpu.memory_space<vmem>>, vector<128x512xbf16>
    %cst_88 = arith.constant dense<0.000000e+00> : vector<16x512xf32>
    %145 = tpu.matmul %143, %144, %cst_88 {dimension_numbers = #tpu.dot_dimension_numbers<[1], [0], [0], [1], [0, 0, 1, 1], [], []>} : vector<16x128xbf16>, vector<128x512xbf16>, vector<16x512xf32> -> vector<16x512xf32>
    %c0_89 = arith.constant 0 : index
    %c0_90 = arith.constant 0 : index
    %146 = vector.load %arg9[%c0_89, %c0_90] : memref<1x512xf32, #tpu.memory_space<vmem>>, vector<1x512xf32>
    %147 = vector.broadcast %146 : vector<1x512xf32> to vector<16x512xf32>
    %148 = arith.addf %145, %147 : vector<16x512xf32>
    %cst_91 = arith.constant 0.000000e+00 : f32
    %149 = vector.broadcast %cst_91 : f32 to vector<16x512xf32>
    %150 = arith.cmpf ogt, %148, %149 : vector<16x512xf32>
    %cst_92 = arith.constant 0.00999999977 : f32
    %151 = vector.broadcast %cst_92 : f32 to vector<16x512xf32>
    %152 = arith.mulf %151, %148 : vector<16x512xf32>
    %153 = arith.select %150, %148, %152 : vector<16x512xi1>, vector<16x512xf32>
    %154 = arith.truncf %153 : vector<16x512xf32> to vector<16x512xbf16>
    %c0_93 = arith.constant 0 : index
    %c0_94 = arith.constant 0 : index
    %155 = vector.load %arg10[%c0_93, %c0_94] : memref<512x128xbf16, #tpu.memory_space<vmem>>, vector<512x128xbf16>
    %cst_95 = arith.constant dense<0.000000e+00> : vector<16x128xf32>
    %156 = tpu.matmul %154, %155, %cst_95 {dimension_numbers = #tpu.dot_dimension_numbers<[1], [0], [0], [1], [0, 0, 1, 1], [], []>} : vector<16x512xbf16>, vector<512x128xbf16>, vector<16x128xf32> -> vector<16x128xf32>
    %c0_96 = arith.constant 0 : index
    %c0_97 = arith.constant 0 : index
    %157 = vector.load %arg11[%c0_96, %c0_97] : memref<1x128xf32, #tpu.memory_space<vmem>>, vector<1x128xf32>
    %158 = vector.broadcast %157 : vector<1x128xf32> to vector<16x128xf32>
    %159 = arith.addf %156, %158 : vector<16x128xf32>
    %cst_98 = arith.constant 0.000000e+00 : f32
    %160 = vector.broadcast %cst_98 : f32 to vector<16x128xf32>
    %161 = arith.maximumf %159, %160 : vector<16x128xf32>
    %162 = math.absf %159 : vector<16x128xf32>
    %cst_99 = arith.constant 0.000000e+00 : f32
    %163 = vector.broadcast %cst_99 : f32 to vector<16x128xf32>
    %164 = arith.subf %163, %162 : vector<16x128xf32>
    %165 = math.exp %164 : vector<16x128xf32>
    %cst_100 = arith.constant 1.000000e+00 : f32
    %166 = vector.broadcast %cst_100 : f32 to vector<16x128xf32>
    %167 = arith.addf %166, %165 : vector<16x128xf32>
    %168 = math.log %167 : vector<16x128xf32>
    %169 = arith.addf %161, %168 : vector<16x128xf32>
    %170 = tpu.iota {dimensions = array<i32: 1>} : vector<16x128xi32>
    %c32_i32 = arith.constant 32 : i32
    %c0_i32 = arith.constant 0 : i32
    %171 = arith.cmpi eq, %c32_i32, %c0_i32 : i32
    %c1_i32 = arith.constant 1 : i32
    %172 = arith.select %171, %c1_i32, %c32_i32 : i32
    %173 = vector.broadcast %172 : i32 to vector<16x128xi32>
    %174 = arith.remsi %170, %173 : vector<16x128xi32>
    %c0_i32_101 = arith.constant 0 : i32
    %175 = vector.broadcast %c0_i32_101 : i32 to vector<16x128xi32>
    %176 = arith.cmpi ne, %174, %175 : vector<16x128xi32>
    %c0_i32_102 = arith.constant 0 : i32
    %177 = vector.broadcast %c0_i32_102 : i32 to vector<16x128xi32>
    %178 = arith.cmpi slt, %174, %177 : vector<16x128xi32>
    %c0_i32_103 = arith.constant 0 : i32
    %179 = arith.cmpi slt, %172, %c0_i32_103 : i32
    %180 = vector.broadcast %179 : i1 to vector<16x128xi1>
    %181 = vector.broadcast %180 : vector<16x128xi1> to vector<16x128xi1>
    %182 = arith.xori %178, %181 : vector<16x128xi1>
    %183 = arith.andi %182, %176 : vector<16x128xi1>
    %184 = vector.broadcast %172 : i32 to vector<16x128xi32>
    %185 = arith.addi %174, %184 : vector<16x128xi32>
    %186 = arith.select %183, %185, %174 : vector<16x128xi1>, vector<16x128xi32>
    %c1_i32_104 = arith.constant 1 : i32
    %187 = vector.broadcast %c1_i32_104 : i32 to vector<16x128xi32>
    %188 = arith.cmpi eq, %186, %187 : vector<16x128xi32>
    %189 = arith.subf %159, %169 : vector<16x128xf32>
    %cst_105 = arith.constant 0.000000e+00 : f32
    %190 = vector.broadcast %cst_105 : f32 to vector<16x128xf32>
    %191 = arith.subf %190, %169 : vector<16x128xf32>
    %192 = arith.select %188, %189, %191 : vector<16x128xi1>, vector<16x128xf32>
    %c0_106 = arith.constant 0 : index
    %c0_107 = arith.constant 0 : index
    %193 = vector.load %arg12[%c0_106, %c0_107] : memref<16x128xf32, #tpu.memory_space<vmem>>, vector<16x128xf32>
    tpu.vector_store %arg12[%c0_106, %c0_107], %192 {strides = array<i32>} : memref<16x128xf32, #tpu.memory_space<vmem>>, vector<16x128xf32>,
    return
  }
  func.func @transform_0(%arg0: i32) -> (i32, i32) {
    %c0_i32 = arith.constant 0 : i32
    %c0_i32_0 = arith.constant 0 : i32
    return %arg0, %c0_i32 : i32, i32
  }
  func.func @transform_1(%arg0: i32) -> (i32, i32) {
    %c0_i32 = arith.constant 0 : i32
    %c0_i32_0 = arith.constant 0 : i32
    %c0_i32_1 = arith.constant 0 : i32
    return %c0_i32, %c0_i32_0 : i32, i32
  }
  func.func @transform_2(%arg0: i32) -> (i32, i32) {
    %c0_i32 = arith.constant 0 : i32
    %c0_i32_0 = arith.constant 0 : i32
    %c0_i32_1 = arith.constant 0 : i32
    return %c0_i32, %c0_i32_0 : i32, i32
  }
  func.func @transform_3(%arg0: i32) -> (i32, i32, i32) {
    %c0_i32 = arith.constant 0 : i32
    %c0_i32_0 = arith.constant 0 : i32
    %c0_i32_1 = arith.constant 0 : i32
    %c0_i32_2 = arith.constant 0 : i32
    return %c0_i32, %c0_i32_0, %c0_i32_1 : i32, i32, i32
  }
  func.func @transform_4(%arg0: i32) -> (i32, i32) {
    %c0_i32 = arith.constant 0 : i32
    %c0_i32_0 = arith.constant 0 : i32
    %c0_i32_1 = arith.constant 0 : i32
    return %c0_i32, %c0_i32_0 : i32, i32
  }
  func.func @transform_5(%arg0: i32) -> (i32, i32, i32) {
    %c0_i32 = arith.constant 0 : i32
    %c0_i32_0 = arith.constant 0 : i32
    %c0_i32_1 = arith.constant 0 : i32
    %c0_i32_2 = arith.constant 0 : i32
    return %c0_i32, %c0_i32_0, %c0_i32_1 : i32, i32, i32
  }
  func.func @transform_6(%arg0: i32) -> (i32, i32) {
    %c0_i32 = arith.constant 0 : i32
    %c0_i32_0 = arith.constant 0 : i32
    %c0_i32_1 = arith.constant 0 : i32
    return %c0_i32, %c0_i32_0 : i32, i32
  }
  func.func @transform_7(%arg0: i32) -> (i32, i32) {
    %c0_i32 = arith.constant 0 : i32
    %c0_i32_0 = arith.constant 0 : i32
    %c0_i32_1 = arith.constant 0 : i32
    return %c0_i32, %c0_i32_0 : i32, i32
  }
  func.func @transform_8(%arg0: i32) -> (i32, i32) {
    %c0_i32 = arith.constant 0 : i32
    %c0_i32_0 = arith.constant 0 : i32
    %c0_i32_1 = arith.constant 0 : i32
    return %c0_i32, %c0_i32_0 : i32, i32
  }
  func.func @transform_9(%arg0: i32) -> (i32, i32) {
    %c0_i32 = arith.constant 0 : i32
    %c0_i32_0 = arith.constant 0 : i32
    %c0_i32_1 = arith.constant 0 : i32
    return %c0_i32, %c0_i32_0 : i32, i32
  }
  func.func @transform_10(%arg0: i32) -> (i32, i32) {
    %c0_i32 = arith.constant 0 : i32
    %c0_i32_0 = arith.constant 0 : i32
    %c0_i32_1 = arith.constant 0 : i32
    return %c0_i32, %c0_i32_0 : i32, i32
  }
  func.func @transform_11(%arg0: i32) -> (i32, i32) {
    %c0_i32 = arith.constant 0 : i32
    %c0_i32_0 = arith.constant 0 : i32
    return %arg0, %c0_i32 : i32, i32
  }
}

</mosaic_0001>

<llo_original>
// kernel: spectrogram_model_head.1
$region0: #{spectrogram_model_head.1}
  #allocation0 [shape = 'u32[]', space=smem, size = 0x4, offset = 0x4, fixed_abs, tag = 'smem constant byte address 0x4 - core index']
  #allocation1 [shape = 'u32[144,128]{1,0:T(1,128)}', space=vmem, size = 0x12000, scoped, tag = 'internal scratch']
  %s0 = inlined_call_operand.vmem [shape: bf16[16,2048], index: 0, kind: input, shape index: {}]
  %s1 = inlined_call_operand.hbm [shape: bf16[2048,128], index: 1, kind: input, shape index: {}]
  %s2 = inlined_call_operand.vmem [shape: f32[1,128], index: 2, kind: input, shape index: {}]
  %s3 = inlined_call_operand.hbm [shape: bf16[6,128,256], index: 3, kind: input, shape index: {}]
  %s4 = inlined_call_operand.vmem [shape: f32[6,256], index: 4, kind: input, shape index: {}]
  %s5 = inlined_call_operand.vmem [shape: bf16[6,128,128], index: 5, kind: input, shape index: {}]
  %s6 = inlined_call_operand.vmem [shape: f32[6,128], index: 6, kind: input, shape index: {}]
  %s7 = inlined_call_operand.hbm [shape: bf16[128,512], index: 7, kind: input, shape index: {}]
  %s8 = inlined_call_operand.vmem [shape: f32[1,512], index: 8, kind: input, shape index: {}]
  %s9 = inlined_call_operand.hbm [shape: bf16[512,128], index: 9, kind: input, shape index: {}]
  %s10 = inlined_call_operand.vmem [shape: f32[1,128], index: 10, kind: input, shape index: {}]
  %s11 = inlined_call_operand.vmem [shape: f32[16,128], index: 11, kind: output, shape index: {}]
  %s12 = sld [smem:[#allocation0]]
  $region70: #{spectrogram_model_head.1} parent=0
    _
  %s14 = ssub.s32 1, %s12
  %s15 = scalar_select 0, %s14, %s12
  $region1: #{spectrogram_model_head.1} parent=0
    #allocation2 [shape = 'u8[524288]{0}', space=vmem, size = 0x80000, scoped, tag = 'input window, operand 1, single buffered']
    #allocation3 [shape = 's32[1]{0}', space=sflag, size = 0x4, scoped, tag = 'scoped memory for spectrogram_model_head.1']
    #allocation4 [shape = 'u8[393216]{0}', space=vmem, size = 0x60000, scoped, tag = 'input window, operand 3, single buffered']
    #allocation5 [shape = 's32[1]{0}', space=sflag, size = 0x4, scoped, tag = 'scoped memory for spectrogram_model_head.1']
    #allocation6 [shape = 'u8[131072]{0}', space=vmem, size = 0x20000, scoped, tag = 'input window, operand 7, single buffered']
    #allocation7 [shape = 'u8[131072]{0}', space=vmem, size = 0x20000, scoped, tag = 'input window, operand 9, single buffered']
    #allocation8 [shape = 's32[1]{0}', space=sflag, size = 0x4, scoped, tag = 'scoped memory for spectrogram_model_head.1']
    %16 = vsyncpa [#allocation3], 0
    %17 = vsyncpa [#allocation5], 0
    %18 = vsyncpa [#allocation8], 0
    // Predicated region
    $region2: #{spectrogram_model_head.1} parent=1 // pred_check
      _
    $region3: #{spectrogram_model_head.1} parent=1 // pred_check_branch
      %20 = sbr.rel (0) target = $region5
    $region4: #{spectrogram_model_head.1} parent=1 // pred_region
      _
    $region5: #{spectrogram_model_head.1} parent=1 // pred_fallthru
      _
    // Predicated region
    $region6: #{spectrogram_model_head.1} parent=1 // pred_check
      _
    $region7: #{spectrogram_model_head.1} parent=1 // pred_check_branch
      %22 = sbr.rel (0) target = $region9
    $region8: #{spectrogram_model_head.1} parent=1 // pred_region
      %s24 = ssub.s32 16384, 16384
      %25 = vsyncadd [#allocation3], %s24
      %s26 = sshll.u32 [#allocation2], 4
      %s27 = int_to_ptr.vmem [resolvable:$true] %s26
      %32 = dma.hbm_to_vmem [thread:$0]  %s1, 16384, %s27, [#allocation3], 64, 64, 4
    $region9: #{spectrogram_model_head.1} parent=1 // pred_fallthru
      _
    // Predicated region
    $region10: #{spectrogram_model_head.1} parent=1 // pred_check
      _
    $region11: #{spectrogram_model_head.1} parent=1 // pred_check_branch
      %34 = sbr.rel (0) target = $region13
    $region12: #{spectrogram_model_head.1} parent=1 // pred_region
      _
    $region13: #{spectrogram_model_head.1} parent=1 // pred_fallthru
      _
    // Predicated region
    $region14: #{spectrogram_model_head.1} parent=1 // pred_check
      _
    $region15: #{spectrogram_model_head.1} parent=1 // pred_check_branch
      %36 = sbr.rel (0) target = $region17
    $region16: #{spectrogram_model_head.1} parent=1 // pred_region
      %s38 = ssub.s32 12288, 12288
      %39 = vsyncadd [#allocation5], %s38
      %s40 = sshll.u32 [#allocation4], 4
      %s41 = int_to_ptr.vmem [resolvable:$true] %s40
      %46 = dma.hbm_to_vmem [thread:$0]  %s3, 12288, %s41, [#allocation5], 128, 128, 8
    $region17: #{spectrogram_model_head.1} parent=1 // pred_fallthru
      _
    // Predicated region
    $region18: #{spectrogram_model_head.1} parent=1 // pred_check
      _
    $region19: #{spectrogram_model_head.1} parent=1 // pred_check_branch
      %48 = sbr.rel (0) target = $region21
    $region20: #{spectrogram_model_head.1} parent=1 // pred_region
      _
    $region21: #{spectrogram_model_head.1} parent=1 // pred_fallthru
      _
    // Predicated region
    $region22: #{spectrogram_model_head.1} parent=1 // pred_check
      _
    $region23: #{spectrogram_model_head.1} parent=1 // pred_check_branch
      %50 = sbr.rel (0) target = $region25
    $region24: #{spectrogram_model_head.1} parent=1 // pred_region
      _
    $region25: #{spectrogram_model_head.1} parent=1 // pred_fallthru
      _
    // Predicated region
    $region26: #{spectrogram_model_head.1} parent=1 // pred_check
      _
    $region27: #{spectrogram_model_head.1} parent=1 // pred_check_branch
      %52 = sbr.rel (0) target = $region29
    $region28: #{spectrogram_model_head.1} parent=1 // pred_region
      _
    $region29: #{spectrogram_model_head.1} parent=1 // pred_fallthru
      _
    // Predicated region
    $region30: #{spectrogram_model_head.1} parent=1 // pred_check
      _
    $region31: #{spectrogram_model_head.1} parent=1 // pred_check_branch
      %54 = sbr.rel (0) target = $region33
    $region32: #{spectrogram_model_head.1} parent=1 // pred_region
      %s56 = ssub.s32 4096, 4096
      %57 = vsyncadd [#allocation5], %s56
      %s58 = sshll.u32 [#allocation6], 4
      %s59 = int_to_ptr.vmem [resolvable:$true] %s58
      %64 = dma.hbm_to_vmem [thread:$0]  %s7, 4096, %s59, [#allocation5], 256, 256, 16
    $region33: #{spectrogram_model_head.1} parent=1 // pred_fallthru
      _
    // Predicated region
    $region34: #{spectrogram_model_head.1} parent=1 // pred_check
      _
    $region35: #{spectrogram_model_head.1} parent=1 // pred_check_branch
      %66 = sbr.rel (0) target = $region37
    $region36: #{spectrogram_model_head.1} parent=1 // pred_region
      _
    $region37: #{spectrogram_model_head.1} parent=1 // pred_fallthru
      _
    // Predicated region
    $region38: #{spectrogram_model_head.1} parent=1 // pred_check
      _
    $region39: #{spectrogram_model_head.1} parent=1 // pred_check_branch
      %68 = sbr.rel (0) target = $region41
    $region40: #{spectrogram_model_head.1} parent=1 // pred_region
      %s70 = ssub.s32 4096, 4096
      %71 = vsyncadd [#allocation8], %s70
      %s72 = sshll.u32 [#allocation7], 4
      %s73 = int_to_ptr.vmem [resolvable:$true] %s72
      %78 = dma.hbm_to_vmem [thread:$0]  %s9, 4096, %s73, [#allocation8], 64, 64, 4
    $region41: #{spectrogram_model_head.1} parent=1 // pred_fallthru
      _
    // Predicated region
    $region42: #{spectrogram_model_head.1} parent=1 // pred_check
      _
    $region43: #{spectrogram_model_head.1} parent=1 // pred_check_branch
      %80 = sbr.rel (0) target = $region45
    $region44: #{spectrogram_model_head.1} parent=1 // pred_region
      _
    $region45: #{spectrogram_model_head.1} parent=1 // pred_fallthru
      _
    // Predicated region
    $region46: #{spectrogram_model_head.1} parent=1 // pred_check
      _
    $region47: #{spectrogram_model_head.1} parent=1 // pred_check_branch
      %82 = sbr.rel (0) target = $region49
    $region48: #{spectrogram_model_head.1} parent=1 // pred_region
      %83 = dma.done [#allocation3], 16384
    $region49: #{spectrogram_model_head.1} parent=1 // pred_fallthru
      _
    // Predicated region
    $region50: #{spectrogram_model_head.1} parent=1 // pred_check
      _
    $region51: #{spectrogram_model_head.1} parent=1 // pred_check_branch
      %85 = sbr.rel (0) target = $region53
    $region52: #{spectrogram_model_head.1} parent=1 // pred_region
      %86 = dma.done [#allocation5], 12288
    $region53: #{spectrogram_model_head.1} parent=1 // pred_fallthru
      _
    // Predicated region
    $region54: #{spectrogram_model_head.1} parent=1 // pred_check
      _
    $region55: #{spectrogram_model_head.1} parent=1 // pred_check_branch
      %88 = sbr.rel (0) target = $region57
    $region56: #{spectrogram_model_head.1} parent=1 // pred_region
      %89 = dma.done [#allocation5], 4096
    $region57: #{spectrogram_model_head.1} parent=1 // pred_fallthru
      _
    // Predicated region
    $region58: #{spectrogram_model_head.1} parent=1 // pred_check
      _
    $region59: #{spectrogram_model_head.1} parent=1 // pred_check_branch
      %91 = sbr.rel (0) target = $region61
    $region60: #{spectrogram_model_head.1} parent=1 // pred_region
      %92 = dma.done [#allocation8], 4096
    $region61: #{spectrogram_model_head.1} parent=1 // pred_fallthru
      _
    %v94 = vld [vmem:[%s0] sm:$0xff]
    %v95 = vld [vmem:[%s0 + $0x8] sm:$0xff]
    %v96 = vld [vmem:[%s0 + $0x10] sm:$0xff]
    %v97 = vld [vmem:[%s0 + $0x18] sm:$0xff]
    %v98 = vld [vmem:[%s0 + $0x20] sm:$0xff]
    %v99 = vld [vmem:[%s0 + $0x28] sm:$0xff]
    %v100 = vld [vmem:[%s0 + $0x30] sm:$0xff]
    %v101 = vld [vmem:[%s0 + $0x38] sm:$0xff]
    %v102 = vld [vmem:[%s0 + $0x40] sm:$0xff]
    %v103 = vld [vmem:[%s0 + $0x48] sm:$0xff]
    %v104 = vld [vmem:[%s0 + $0x50] sm:$0xff]
    %v105 = vld [vmem:[%s0 + $0x58] sm:$0xff]
    %v106 = vld [vmem:[%s0 + $0x60] sm:$0xff]
    %v107 = vld [vmem:[%s0 + $0x68] sm:$0xff]
    %v108 = vld [vmem:[%s0 + $0x70] sm:$0xff]
    %v109 = vld [vmem:[%s0 + $0x78] sm:$0xff]
    %v110 = vld [vmem:[#allocation2] sm:$0xf]
    %v111 = vld [vmem:[#allocation2 + $0x4] sm:$0xf]
    %v112 = vld [vmem:[#allocation2 + $0x8] sm:$0xf]
    %v113 = vld [vmem:[#allocation2 + $0xc] sm:$0xf]
    %v114 = vld [vmem:[#allocation2 + $0x10] sm:$0xf]
    %v115 = vld [vmem:[#allocation2 + $0x14] sm:$0xf]
    %v116 = vld [vmem:[#allocation2 + $0x18] sm:$0xf]
    %v117 = vld [vmem:[#allocation2 + $0x1c] sm:$0xf]
    %v118 = vld [vmem:[#allocation2 + $0x20] sm:$0xf]
    %v119 = vld [vmem:[#allocation2 + $0x24] sm:$0xf]
    %v120 = vld [vmem:[#allocation2 + $0x28] sm:$0xf]
    %v121 = vld [vmem:[#allocation2 + $0x2c] sm:$0xf]
    %v122 = vld [vmem:[#allocation2 + $0x30] sm:$0xf]
    %v123 = vld [vmem:[#allocation2 + $0x34] sm:$0xf]
    %v124 = vld [vmem:[#allocation2 + $0x38] sm:$0xf]
    %v125 = vld [vmem:[#allocation2 + $0x3c] sm:$0xf]
    %v126 = vld [vmem:[#allocation2 + $0x40] sm:$0xf]
    %v127 = vld [vmem:[#allocation2 + $0x44] sm:$0xf]
    %v128 = vld [vmem:[#allocation2 + $0x48] sm:$0xf]
    %v129 = vld [vmem:[#allocation2 + $0x4c] sm:$0xf]
    %v130 = vld [vmem:[#allocation2 + $0x50] sm:$0xf]
    %v131 = vld [vmem:[#allocation2 + $0x54] sm:$0xf]
    %v132 = vld [vmem:[#allocation2 + $0x58] sm:$0xf]
    %v133 = vld [vmem:[#allocation2 + $0x5c] sm:$0xf]
    %v134 = vld [vmem:[#allocation2 + $0x60] sm:$0xf]
    %v135 = vld [vmem:[#allocation2 + $0x64] sm:$0xf]
    %v136 = vld [vmem:[#allocation2 + $0x68] sm:$0xf]
    %v137 = vld [vmem:[#allocation2 + $0x6c] sm:$0xf]
    %v138 = vld [vmem:[#allocation2 + $0x70] sm:$0xf]
    %v139 = vld [vmem:[#allocation2 + $0x74] sm:$0xf]
    %v140 = vld [vmem:[#allocation2 + $0x78] sm:$0xf]
    %v141 = vld [vmem:[#allocation2 + $0x7c] sm:$0xf]
    %v142 = vld [vmem:[#allocation2 + $0x80] sm:$0xf]
    %v143 = vld [vmem:[#allocation2 + $0x84] sm:$0xf]
    %v144 = vld [vmem:[#allocation2 + $0x88] sm:$0xf]
    %v145 = vld [vmem:[#allocation2 + $0x8c] sm:$0xf]
    %v146 = vld [vmem:[#allocation2 + $0x90] sm:$0xf]
    %v147 = vld [vmem:[#allocation2 + $0x94] sm:$0xf]
    %v148 = vld [vmem:[#allocation2 + $0x98] sm:$0xf]
    %v149 = vld [vmem:[#allocation2 + $0x9c] sm:$0xf]
    %v150 = vld [vmem:[#allocation2 + $0xa0] sm:$0xf]
    %v151 = vld [vmem:[#allocation2 + $0xa4] sm:$0xf]
    %v152 = vld [vmem:[#allocation2 + $0xa8] sm:$0xf]
    %v153 = vld [vmem:[#allocation2 + $0xac] sm:$0xf]
    %v154 = vld [vmem:[#allocation2 + $0xb0] sm:$0xf]
    %v155 = vld [vmem:[#allocation2 + $0xb4] sm:$0xf]
    %v156 = vld [vmem:[#allocation2 + $0xb8] sm:$0xf]
    %v157 = vld [vmem:[#allocation2 + $0xbc] sm:$0xf]
    %v158 = vld [vmem:[#allocation2 + $0xc0] sm:$0xf]
    %v159 = vld [vmem:[#allocation2 + $0xc4] sm:$0xf]
    %v160 = vld [vmem:[#allocation2 + $0xc8] sm:$0xf]
    %v161 = vld [vmem:[#allocation2 + $0xcc] sm:$0xf]
    %v162 = vld [vmem:[#allocation2 + $0xd0] sm:$0xf]
    %v163 = vld [vmem:[#allocation2 + $0xd4] sm:$0xf]
    %v164 = vld [vmem:[#allocation2 + $0xd8] sm:$0xf]
    %v165 = vld [vmem:[#allocation2 + $0xdc] sm:$0xf]
    %v166 = vld [vmem:[#allocation2 + $0xe0] sm:$0xf]
    %v167 = vld [vmem:[#allocation2 + $0xe4] sm:$0xf]
    %v168 = vld [vmem:[#allocation2 + $0xe8] sm:$0xf]
    %v169 = vld [vmem:[#allocation2 + $0xec] sm:$0xf]
    %v170 = vld [vmem:[#allocation2 + $0xf0] sm:$0xf]
    %v171 = vld [vmem:[#allocation2 + $0xf4] sm:$0xf]
    %v172 = vld [vmem:[#allocation2 + $0xf8] sm:$0xf]
    %v173 = vld [vmem:[#allocation2 + $0xfc] sm:$0xf]
    %v174 = vld [vmem:[#allocation2 + $0x100] sm:$0xf]
    %v175 = vld [vmem:[#allocation2 + $0x104] sm:$0xf]
    %v176 = vld [vmem:[#allocation2 + $0x108] sm:$0xf]
    %v177 = vld [vmem:[#allocation2 + $0x10c] sm:$0xf]
    %v178 = vld [vmem:[#allocation2 + $0x110] sm:$0xf]
    %v179 = vld [vmem:[#allocation2 + $0x114] sm:$0xf]
    %v180 = vld [vmem:[#allocation2 + $0x118] sm:$0xf]
    %v181 = vld [vmem:[#allocation2 + $0x11c] sm:$0xf]
    %v182 = vld [vmem:[#allocation2 + $0x120] sm:$0xf]
    %v183 = vld [vmem:[#allocation2 + $0x124] sm:$0xf]
    %v184 = vld [vmem:[#allocation2 + $0x128] sm:$0xf]
    %v185 = vld [vmem:[#allocation2 + $0x12c] sm:$0xf]
    %v186 = vld [vmem:[#allocation2 + $0x130] sm:$0xf]
    %v187 = vld [vmem:[#allocation2 + $0x134] sm:$0xf]
    %v188 = vld [vmem:[#allocation2 + $0x138] sm:$0xf]
    %v189 = vld [vmem:[#allocation2 + $0x13c] sm:$0xf]
    %v190 = vld [vmem:[#allocation2 + $0x140] sm:$0xf]
    %v191 = vld [vmem:[#allocation2 + $0x144] sm:$0xf]
    %v192 = vld [vmem:[#allocation2 + $0x148] sm:$0xf]
    %v193 = vld [vmem:[#allocation2 + $0x14c] sm:$0xf]
    %v194 = vld [vmem:[#allocation2 + $0x150] sm:$0xf]
    %v195 = vld [vmem:[#allocation2 + $0x154] sm:$0xf]
    %v196 = vld [vmem:[#allocation2 + $0x158] sm:$0xf]
    %v197 = vld [vmem:[#allocation2 + $0x15c] sm:$0xf]
    %v198 = vld [vmem:[#allocation2 + $0x160] sm:$0xf]
    %v199 = vld [vmem:[#allocation2 + $0x164] sm:$0xf]
    %v200 = vld [vmem:[#allocation2 + $0x168] sm:$0xf]
    %v201 = vld [vmem:[#allocation2 + $0x16c] sm:$0xf]
    %v202 = vld [vmem:[#allocation2 + $0x170] sm:$0xf]
    %v203 = vld [vmem:[#allocation2 + $0x174] sm:$0xf]
    %v204 = vld [vmem:[#allocation2 + $0x178] sm:$0xf]
    %v205 = vld [vmem:[#allocation2 + $0x17c] sm:$0xf]
    %v206 = vld [vmem:[#allocation2 + $0x180] sm:$0xf]
    %v207 = vld [vmem:[#allocation2 + $0x184] sm:$0xf]
    %v208 = vld [vmem:[#allocation2 + $0x188] sm:$0xf]
    %v209 = vld [vmem:[#allocation2 + $0x18c] sm:$0xf]
    %v210 = vld [vmem:[#allocation2 + $0x190] sm:$0xf]
    %v211 = vld [vmem:[#allocation2 + $0x194] sm:$0xf]
    %v212 = vld [vmem:[#allocation2 + $0x198] sm:$0xf]
    %v213 = vld [vmem:[#allocation2 + $0x19c] sm:$0xf]
    %v214 = vld [vmem:[#allocation2 + $0x1a0] sm:$0xf]
    %v215 = vld [vmem:[#allocation2 + $0x1a4] sm:$0xf]
    %v216 = vld [vmem:[#allocation2 + $0x1a8] sm:$0xf]
    %v217 = vld [vmem:[#allocation2 + $0x1ac] sm:$0xf]
    %v218 = vld [vmem:[#allocation2 + $0x1b0] sm:$0xf]
    %v219 = vld [vmem:[#allocation2 + $0x1b4] sm:$0xf]
    %v220 = vld [vmem:[#allocation2 + $0x1b8] sm:$0xf]
    %v221 = vld [vmem:[#allocation2 + $0x1bc] sm:$0xf]
    %v222 = vld [vmem:[#allocation2 + $0x1c0] sm:$0xf]
    %v223 = vld [vmem:[#allocation2 + $0x1c4] sm:$0xf]
    %v224 = vld [vmem:[#allocation2 + $0x1c8] sm:$0xf]
    %v225 = vld [vmem:[#allocation2 + $0x1cc] sm:$0xf]
    %v226 = vld [vmem:[#allocation2 + $0x1d0] sm:$0xf]
    %v227 = vld [vmem:[#allocation2 + $0x1d4] sm:$0xf]
    %v228 = vld [vmem:[#allocation2 + $0x1d8] sm:$0xf]
    %v229 = vld [vmem:[#allocation2 + $0x1dc] sm:$0xf]
    %v230 = vld [vmem:[#allocation2 + $0x1e0] sm:$0xf]
    %v231 = vld [vmem:[#allocation2 + $0x1e4] sm:$0xf]
    %v232 = vld [vmem:[#allocation2 + $0x1e8] sm:$0xf]
    %v233 = vld [vmem:[#allocation2 + $0x1ec] sm:$0xf]
    %v234 = vld [vmem:[#allocation2 + $0x1f0] sm:$0xf]
    %v235 = vld [vmem:[#allocation2 + $0x1f4] sm:$0xf]
    %v236 = vld [vmem:[#allocation2 + $0x1f8] sm:$0xf]
    %v237 = vld [vmem:[#allocation2 + $0x1fc] sm:$0xf]
    %v238 = vld [vmem:[#allocation2 + $0x200] sm:$0xf]
    %v239 = vld [vmem:[#allocation2 + $0x204] sm:$0xf]
    %v240 = vld [vmem:[#allocation2 + $0x208] sm:$0xf]
    %v241 = vld [vmem:[#allocation2 + $0x20c] sm:$0xf]
    %v242 = vld [vmem:[#allocation2 + $0x210] sm:$0xf]
    %v243 = vld [vmem:[#allocation2 + $0x214] sm:$0xf]
    %v244 = vld [vmem:[#allocation2 + $0x218] sm:$0xf]
    %v245 = vld [vmem:[#allocation2 + $0x21c] sm:$0xf]
    %v246 = vld [vmem:[#allocation2 + $0x220] sm:$0xf]
    %v247 = vld [vmem:[#allocation2 + $0x224] sm:$0xf]
    %v248 = vld [vmem:[#allocation2 + $0x228] sm:$0xf]
    %v249 = vld [vmem:[#allocation2 + $0x22c] sm:$0xf]
    %v250 = vld [vmem:[#allocation2 + $0x230] sm:$0xf]
    %v251 = vld [vmem:[#allocation2 + $0x234] sm:$0xf]
    %v252 = vld [vmem:[#allocation2 + $0x238] sm:$0xf]
    %v253 = vld [vmem:[#allocation2 + $0x23c] sm:$0xf]
    %v254 = vld [vmem:[#allocation2 + $0x240] sm:$0xf]
    %v255 = vld [vmem:[#allocation2 + $0x244] sm:$0xf]
    %v256 = vld [vmem:[#allocation2 + $0x248] sm:$0xf]
    %v257 = vld [vmem:[#allocation2 + $0x24c] sm:$0xf]
    %v258 = vld [vmem:[#allocation2 + $0x250] sm:$0xf]
    %v259 = vld [vmem:[#allocation2 + $0x254] sm:$0xf]
    %v260 = vld [vmem:[#allocation2 + $0x258] sm:$0xf]
    %v261 = vld [vmem:[#allocation2 + $0x25c] sm:$0xf]
    %v262 = vld [vmem:[#allocation2 + $0x260] sm:$0xf]
    %v263 = vld [vmem:[#allocation2 + $0x264] sm:$0xf]
    %v264 = vld [vmem:[#allocation2 + $0x268] sm:$0xf]
    %v265 = vld [vmem:[#allocation2 + $0x26c] sm:$0xf]
    %v266 = vld [vmem:[#allocation2 + $0x270] sm:$0xf]
    %v267 = vld [vmem:[#allocation2 + $0x274] sm:$0xf]
    %v268 = vld [vmem:[#allocation2 + $0x278] sm:$0xf]
    %v269 = vld [vmem:[#allocation2 + $0x27c] sm:$0xf]
    %v270 = vld [vmem:[#allocation2 + $0x280] sm:$0xf]
    %v271 = vld [vmem:[#allocation2 + $0x284] sm:$0xf]
    %v272 = vld [vmem:[#allocation2 + $0x288] sm:$0xf]
    %v273 = vld [vmem:[#allocation2 + $0x28c] sm:$0xf]
    %v274 = vld [vmem:[#allocation2 + $0x290] sm:$0xf]
    %v275 = vld [vmem:[#allocation2 + $0x294] sm:$0xf]
    %v276 = vld [vmem:[#allocation2 + $0x298] sm:$0xf]
    %v277 = vld [vmem:[#allocation2 + $0x29c] sm:$0xf]
    %v278 = vld [vmem:[#allocation2 + $0x2a0] sm:$0xf]
    %v279 = vld [vmem:[#allocation2 + $0x2a4] sm:$0xf]
    %v280 = vld [vmem:[#allocation2 + $0x2a8] sm:$0xf]
    %v281 = vld [vmem:[#allocation2 + $0x2ac] sm:$0xf]
    %v282 = vld [vmem:[#allocation2 + $0x2b0] sm:$0xf]
    %v283 = vld [vmem:[#allocation2 + $0x2b4] sm:$0xf]
    %v284 = vld [vmem:[#allocation2 + $0x2b8] sm:$0xf]
    %v285 = vld [vmem:[#allocation2 + $0x2bc] sm:$0xf]
    %v286 = vld [vmem:[#allocation2 + $0x2c0] sm:$0xf]
    %v287 = vld [vmem:[#allocation2 + $0x2c4] sm:$0xf]
    %v288 = vld [vmem:[#allocation2 + $0x2c8] sm:$0xf]
    %v289 = vld [vmem:[#allocation2 + $0x2cc] sm:$0xf]
    %v290 = vld [vmem:[#allocation2 + $0x2d0] sm:$0xf]
    %v291 = vld [vmem:[#allocation2 + $0x2d4] sm:$0xf]
    %v292 = vld [vmem:[#allocation2 + $0x2d8] sm:$0xf]
    %v293 = vld [vmem:[#allocation2 + $0x2dc] sm:$0xf]
    %v294 = vld [vmem:[#allocation2 + $0x2e0] sm:$0xf]
    %v295 = vld [vmem:[#allocation2 + $0x2e4] sm:$0xf]
    %v296 = vld [vmem:[#allocation2 + $0x2e8] sm:$0xf]
    %v297 = vld [vmem:[#allocation2 + $0x2ec] sm:$0xf]
    %v298 = vld [vmem:[#allocation2 + $0x2f0] sm:$0xf]
    %v299 = vld [vmem:[#allocation2 + $0x2f4] sm:$0xf]
    %v300 = vld [vmem:[#allocation2 + $0x2f8] sm:$0xf]
    %v301 = vld [vmem:[#allocation2 + $0x2fc] sm:$0xf]
    %v302 = vld [vmem:[#allocation2 + $0x300] sm:$0xf]
    %v303 = vld [vmem:[#allocation2 + $0x304] sm:$0xf]
    %v304 = vld [vmem:[#allocation2 + $0x308] sm:$0xf]
    %v305 = vld [vmem:[#allocation2 + $0x30c] sm:$0xf]
    %v306 = vld [vmem:[#allocation2 + $0x310] sm:$0xf]
    %v307 = vld [vmem:[#allocation2 + $0x314] sm:$0xf]
    %v308 = vld [vmem:[#allocation2 + $0x318] sm:$0xf]
    %v309 = vld [vmem:[#allocation2 + $0x31c] sm:$0xf]
    %v310 = vld [vmem:[#allocation2 + $0x320] sm:$0xf]
    %v311 = vld [vmem:[#allocation2 + $0x324] sm:$0xf]
    %v312 = vld [vmem:[#allocation2 + $0x328] sm:$0xf]
    %v313 = vld [vmem:[#allocation2 + $0x32c] sm:$0xf]
    %v314 = vld [vmem:[#allocation2 + $0x330] sm:$0xf]
    %v315 = vld [vmem:[#allocation2 + $0x334] sm:$0xf]
    %v316 = vld [vmem:[#allocation2 + $0x338] sm:$0xf]
    %v317 = vld [vmem:[#allocation2 + $0x33c] sm:$0xf]
    %v318 = vld [vmem:[#allocation2 + $0x340] sm:$0xf]
    %v319 = vld [vmem:[#allocation2 + $0x344] sm:$0xf]
    %v320 = vld [vmem:[#allocation2 + $0x348] sm:$0xf]
    %v321 = vld [vmem:[#allocation2 + $0x34c] sm:$0xf]
    %v322 = vld [vmem:[#allocation2 + $0x350] sm:$0xf]
    %v323 = vld [vmem:[#allocation2 + $0x354] sm:$0xf]
    %v324 = vld [vmem:[#allocation2 + $0x358] sm:$0xf]
    %v325 = vld [vmem:[#allocation2 + $0x35c] sm:$0xf]
    %v326 = vld [vmem:[#allocation2 + $0x360] sm:$0xf]
    %v327 = vld [vmem:[#allocation2 + $0x364] sm:$0xf]
    %v328 = vld [vmem:[#allocation2 + $0x368] sm:$0xf]
    %v329 = vld [vmem:[#allocation2 + $0x36c] sm:$0xf]
    %v330 = vld [vmem:[#allocation2 + $0x370] sm:$0xf]
    %v331 = vld [vmem:[#allocation2 + $0x374] sm:$0xf]
    %v332 = vld [vmem:[#allocation2 + $0x378] sm:$0xf]
    %v333 = vld [vmem:[#allocation2 + $0x37c] sm:$0xf]
    %v334 = vld [vmem:[#allocation2 + $0x380] sm:$0xf]
    %v335 = vld [vmem:[#allocation2 + $0x384] sm:$0xf]
    %v336 = vld [vmem:[#allocation2 + $0x388] sm:$0xf]
    %v337 = vld [vmem:[#allocation2 + $0x38c] sm:$0xf]
    %v338 = vld [vmem:[#allocation2 + $0x390] sm:$0xf]
    %v339 = vld [vmem:[#allocation2 + $0x394] sm:$0xf]
    %v340 = vld [vmem:[#allocation2 + $0x398] sm:$0xf]
    %v341 = vld [vmem:[#allocation2 + $0x39c] sm:$0xf]
    %v342 = vld [vmem:[#allocation2 + $0x3a0] sm:$0xf]
    %v343 = vld [vmem:[#allocation2 + $0x3a4] sm:$0xf]
    %v344 = vld [vmem:[#allocation2 + $0x3a8] sm:$0xf]
    %v345 = vld [vmem:[#allocation2 + $0x3ac] sm:$0xf]
    %v346 = vld [vmem:[#allocation2 + $0x3b0] sm:$0xf]
    %v347 = vld [vmem:[#allocation2 + $0x3b4] sm:$0xf]
    %v348 = vld [vmem:[#allocation2 + $0x3b8] sm:$0xf]
    %v349 = vld [vmem:[#allocation2 + $0x3bc] sm:$0xf]
    %v350 = vld [vmem:[#allocation2 + $0x3c0] sm:$0xf]
    %v351 = vld [vmem:[#allocation2 + $0x3c4] sm:$0xf]
    %v352 = vld [vmem:[#allocation2 + $0x3c8] sm:$0xf]
    %v353 = vld [vmem:[#allocation2 + $0x3cc] sm:$0xf]
    %v354 = vld [vmem:[#allocation2 + $0x3d0] sm:$0xf]
    %v355 = vld [vmem:[#allocation2 + $0x3d4] sm:$0xf]
    %v356 = vld [vmem:[#allocation2 + $0x3d8] sm:$0xf]
    %v357 = vld [vmem:[#allocation2 + $0x3dc] sm:$0xf]
    %v358 = vld [vmem:[#allocation2 + $0x3e0] sm:$0xf]
    %v359 = vld [vmem:[#allocation2 + $0x3e4] sm:$0xf]
    %v360 = vld [vmem:[#allocation2 + $0x3e8] sm:$0xf]
    %v361 = vld [vmem:[#allocation2 + $0x3ec] sm:$0xf]
    %v362 = vld [vmem:[#allocation2 + $0x3f0] sm:$0xf]
    %v363 = vld [vmem:[#allocation2 + $0x3f4] sm:$0xf]
    %v364 = vld [vmem:[#allocation2 + $0x3f8] sm:$0xf]
    %v365 = vld [vmem:[#allocation2 + $0x3fc] sm:$0xf]
    %v366 = vld [vmem:[%s2] sm:$0x1]
    %v368 = vlaneseq
    %v369 = vshrl.u32 %v368, 7
    %v370 = vsub.s32 0, %v369
    %v371 = vrot.slane %v366, %v370
    %v389 = vunpack.c.l.b16 %v94
    %v390 = vunpack.c.h.b16 %v94
    %v391 = vunpack.c.l.b16 %v95
    %v392 = vunpack.c.h.b16 %v95
    %v393 = vunpack.c.l.b16 %v96
    %v394 = vunpack.c.h.b16 %v96
    %v395 = vunpack.c.l.b16 %v97
    %v396 = vunpack.c.h.b16 %v97
    %v397 = vunpack.c.l.b16 %v98
    %v398 = vunpack.c.h.b16 %v98
    %v399 = vunpack.c.l.b16 %v99
    %v400 = vunpack.c.h.b16 %v99
    %v401 = vunpack.c.l.b16 %v100
    %v402 = vunpack.c.h.b16 %v100
    %v403 = vunpack.c.l.b16 %v101
    %v404 = vunpack.c.h.b16 %v101
    %v405 = vunpack.c.l.b16 %v102
    %v406 = vunpack.c.h.b16 %v102
    %v407 = vunpack.c.l.b16 %v103
    %v408 = vunpack.c.h.b16 %v103
    %v409 = vunpack.c.l.b16 %v104
    %v410 = vunpack.c.h.b16 %v104
    %v411 = vunpack.c.l.b16 %v105
    %v412 = vunpack.c.h.b16 %v105
    %v413 = vunpack.c.l.b16 %v106
    %v414 = vunpack.c.h.b16 %v106
    %v415 = vunpack.c.l.b16 %v107
    %v416 = vunpack.c.h.b16 %v107
    %v417 = vunpack.c.l.b16 %v108
    %v418 = vunpack.c.h.b16 %v108
    %v419 = vunpack.c.l.b16 %v109
    %v420 = vunpack.c.h.b16 %v109
    %v421 = vpack.c.b16 %v405, %v389
    %v422 = vpack.c.b16 %v406, %v390
    %v423 = vpack.c.b16 %v407, %v391
    %v424 = vpack.c.b16 %v408, %v392
    %v425 = vpack.c.b16 %v409, %v393
    %v426 = vpack.c.b16 %v410, %v394
    %v427 = vpack.c.b16 %v411, %v395
    %v428 = vpack.c.b16 %v412, %v396
    %v429 = vpack.c.b16 %v413, %v397
    %v430 = vpack.c.b16 %v414, %v398
    %v431 = vpack.c.b16 %v415, %v399
    %v432 = vpack.c.b16 %v416, %v400
    %v433 = vpack.c.b16 %v417, %v401
    %v434 = vpack.c.b16 %v418, %v402
    %v435 = vpack.c.b16 %v419, %v403
    %v436 = vpack.c.b16 %v420, %v404
    %v709 = vunpack.c.l.b16 %v110
    %v710 = vunpack.c.l.b16 %v111
    %v711 = vunpack.c.l.b16 %v112
    %v712 = vunpack.c.l.b16 %v113
    %v713 = vunpack.c.l.b16 %v114
    %v714 = vunpack.c.l.b16 %v115
    %v715 = vunpack.c.l.b16 %v116
    %v716 = vunpack.c.l.b16 %v117
    %v717 = vunpack.c.l.b16 %v118
    %v718 = vunpack.c.l.b16 %v119
    %v719 = vunpack.c.l.b16 %v120
    %v720 = vunpack.c.l.b16 %v121
    %v721 = vunpack.c.l.b16 %v122
    %v722 = vunpack.c.l.b16 %v123
    %v723 = vunpack.c.l.b16 %v124
    %v724 = vunpack.c.l.b16 %v125
    %v725 = vunpack.c.l.b16 %v126
    %v726 = vunpack.c.l.b16 %v127
    %v727 = vunpack.c.l.b16 %v128
    %v728 = vunpack.c.l.b16 %v129
    %v729 = vunpack.c.l.b16 %v130
    %v730 = vunpack.c.l.b16 %v131
    %v731 = vunpack.c.l.b16 %v132
    %v732 = vunpack.c.l.b16 %v133
    %v733 = vunpack.c.l.b16 %v134
    %v734 = vunpack.c.l.b16 %v135
    %v735 = vunpack.c.l.b16 %v136
    %v736 = vunpack.c.l.b16 %v137
    %v737 = vunpack.c.l.b16 %v138
    %v738 = vunpack.c.l.b16 %v139
    %v739 = vunpack.c.l.b16 %v140
    %v740 = vunpack.c.l.b16 %v141
    %v741 = vunpack.c.l.b16 %v142
    %v742 = vunpack.c.l.b16 %v143
    %v743 = vunpack.c.l.b16 %v144
    %v744 = vunpack.c.l.b16 %v145
    %v745 = vunpack.c.l.b16 %v146
    %v746 = vunpack.c.l.b16 %v147
    %v747 = vunpack.c.l.b16 %v148
    %v748 = vunpack.c.l.b16 %v149
    %v749 = vunpack.c.l.b16 %v150
    %v750 = vunpack.c.l.b16 %v151
    %v751 = vunpack.c.l.b16 %v152
    %v752 = vunpack.c.l.b16 %v153
    %v753 = vunpack.c.l.b16 %v154
    %v754 = vunpack.c.l.b16 %v155
    %v755 = vunpack.c.l.b16 %v156
    %v756 = vunpack.c.l.b16 %v157
    %v757 = vunpack.c.l.b16 %v158
    %v758 = vunpack.c.l.b16 %v159
    %v759 = vunpack.c.l.b16 %v160
    %v760 = vunpack.c.l.b16 %v161
    %v761 = vunpack.c.l.b16 %v162
    %v762 = vunpack.c.l.b16 %v163
    %v763 = vunpack.c.l.b16 %v164
    %v764 = vunpack.c.l.b16 %v165
    %v765 = vunpack.c.l.b16 %v166
    %v766 = vunpack.c.l.b16 %v167
    %v767 = vunpack.c.l.b16 %v168
    %v768 = vunpack.c.l.b16 %v169
    %v769 = vunpack.c.l.b16 %v170
    %v770 = vunpack.c.l.b16 %v171
    %v771 = vunpack.c.l.b16 %v172
    %v772 = vunpack.c.l.b16 %v173
    %v773 = vunpack.c.l.b16 %v174
    %v774 = vunpack.c.l.b16 %v175
    %v775 = vunpack.c.l.b16 %v176
    %v776 = vunpack.c.l.b16 %v177
    %v777 = vunpack.c.l.b16 %v178
    %v778 = vunpack.c.l.b16 %v179
    %v779 = vunpack.c.l.b16 %v180
    %v780 = vunpack.c.l.b16 %v181
    %v781 = vunpack.c.l.b16 %v182
    %v782 = vunpack.c.l.b16 %v183
    %v783 = vunpack.c.l.b16 %v184
    %v784 = vunpack.c.l.b16 %v185
    %v785 = vunpack.c.l.b16 %v186
    %v786 = vunpack.c.l.b16 %v187
    %v787 = vunpack.c.l.b16 %v188
    %v788 = vunpack.c.l.b16 %v189
    %v789 = vunpack.c.l.b16 %v190
    %v790 = vunpack.c.l.b16 %v191
    %v791 = vunpack.c.l.b16 %v192
    %v792 = vunpack.c.l.b16 %v193
    %v793 = vunpack.c.l.b16 %v194
    %v794 = vunpack.c.l.b16 %v195
    %v795 = vunpack.c.l.b16 %v196
    %v796 = vunpack.c.l.b16 %v197
    %v797 = vunpack.c.l.b16 %v198
    %v798 = vunpack.c.l.b16 %v199
    %v799 = vunpack.c.l.b16 %v200
    %v800 = vunpack.c.l.b16 %v201
    %v801 = vunpack.c.l.b16 %v202
    %v802 = vunpack.c.l.b16 %v203
    %v803 = vunpack.c.l.b16 %v204
    %v804 = vunpack.c.l.b16 %v205
    %v805 = vunpack.c.l.b16 %v206
    %v806 = vunpack.c.l.b16 %v207
    %v807 = vunpack.c.l.b16 %v208
    %v808 = vunpack.c.l.b16 %v209
    %v809 = vunpack.c.l.b16 %v210
    %v810 = vunpack.c.l.b16 %v211
    %v811 = vunpack.c.l.b16 %v212
    %v812 = vunpack.c.l.b16 %v213
    %v813 = vunpack.c.l.b16 %v214
    %v814 = vunpack.c.l.b16 %v215
    %v815 = vunpack.c.l.b16 %v216
    %v816 = vunpack.c.l.b16 %v217
    %v817 = vunpack.c.l.b16 %v218
    %v818 = vunpack.c.l.b16 %v219
    %v819 = vunpack.c.l.b16 %v220
    %v820 = vunpack.c.l.b16 %v221
    %v821 = vunpack.c.l.b16 %v222
    %v822 = vunpack.c.l.b16 %v223
    %v823 = vunpack.c.l.b16 %v224
    %v824 = vunpack.c.l.b16 %v225
    %v825 = vunpack.c.l.b16 %v226
    %v826 = vunpack.c.l.b16 %v227
    %v827 = vunpack.c.l.b16 %v228
    %v828 = vunpack.c.l.b16 %v229
    %v829 = vunpack.c.l.b16 %v230
    %v830 = vunpack.c.l.b16 %v231
    %v831 = vunpack.c.l.b16 %v232
    %v832 = vunpack.c.l.b16 %v233
    %v833 = vunpack.c.l.b16 %v234
    %v834 = vunpack.c.l.b16 %v235
    %v835 = vunpack.c.l.b16 %v236
    %v836 = vunpack.c.l.b16 %v237
    %v837 = vunpack.c.l.b16 %v238
    %v838 = vunpack.c.l.b16 %v239
    %v839 = vunpack.c.l.b16 %v240
    %v840 = vunpack.c.l.b16 %v241
    %v841 = vunpack.c.l.b16 %v242
    %v842 = vunpack.c.l.b16 %v243
    %v843 = vunpack.c.l.b16 %v244
    %v844 = vunpack.c.l.b16 %v245
    %v845 = vunpack.c.l.b16 %v246
    %v846 = vunpack.c.l.b16 %v247
    %v847 = vunpack.c.l.b16 %v248
    %v848 = vunpack.c.l.b16 %v249
    %v849 = vunpack.c.l.b16 %v250
    %v850 = vunpack.c.l.b16 %v251
    %v851 = vunpack.c.l.b16 %v252
    %v852 = vunpack.c.l.b16 %v253
    %v853 = vunpack.c.l.b16 %v254
    %v854 = vunpack.c.l.b16 %v255
    %v855 = vunpack.c.l.b16 %v256
    %v856 = vunpack.c.l.b16 %v257
    %v857 = vunpack.c.l.b16 %v258
    %v858 = vunpack.c.l.b16 %v259
    %v859 = vunpack.c.l.b16 %v260
    %v860 = vunpack.c.l.b16 %v261
    %v861 = vunpack.c.l.b16 %v262
    %v862 = vunpack.c.l.b16 %v263
    %v863 = vunpack.c.l.b16 %v264
    %v864 = vunpack.c.l.b16 %v265
    %v865 = vunpack.c.l.b16 %v266
    %v866 = vunpack.c.l.b16 %v267
    %v867 = vunpack.c.l.b16 %v268
    %v868 = vunpack.c.l.b16 %v269
    %v869 = vunpack.c.l.b16 %v270
    %v870 = vunpack.c.l.b16 %v271
    %v871 = vunpack.c.l.b16 %v272
    %v872 = vunpack.c.l.b16 %v273
    %v873 = vunpack.c.l.b16 %v274
    %v874 = vunpack.c.l.b16 %v275
    %v875 = vunpack.c.l.b16 %v276
    %v876 = vunpack.c.l.b16 %v277
    %v877 = vunpack.c.l.b16 %v278
    %v878 = vunpack.c.l.b16 %v279
    %v879 = vunpack.c.l.b16 %v280
    %v880 = vunpack.c.l.b16 %v281
    %v881 = vunpack.c.l.b16 %v282
    %v882 = vunpack.c.l.b16 %v283
    %v883 = vunpack.c.l.b16 %v284
    %v884 = vunpack.c.l.b16 %v285
    %v885 = vunpack.c.l.b16 %v286
    %v886 = vunpack.c.l.b16 %v287
    %v887 = vunpack.c.l.b16 %v288
    %v888 = vunpack.c.l.b16 %v289
    %v889 = vunpack.c.l.b16 %v290
    %v890 = vunpack.c.l.b16 %v291
    %v891 = vunpack.c.l.b16 %v292
    %v892 = vunpack.c.l.b16 %v293
    %v893 = vunpack.c.l.b16 %v294
    %v894 = vunpack.c.l.b16 %v295
    %v895 = vunpack.c.l.b16 %v296
    %v896 = vunpack.c.l.b16 %v297
    %v897 = vunpack.c.l.b16 %v298
    %v898 = vunpack.c.l.b16 %v299
    %v899 = vunpack.c.l.b16 %v300
    %v900 = vunpack.c.l.b16 %v301
    %v901 = vunpack.c.l.b16 %v302
    %v902 = vunpack.c.l.b16 %v303
    %v903 = vunpack.c.l.b16 %v304
    %v904 = vunpack.c.l.b16 %v305
    %v905 = vunpack.c.l.b16 %v306
    %v906 = vunpack.c.l.b16 %v307
    %v907 = vunpack.c.l.b16 %v308
    %v908 = vunpack.c.l.b16 %v309
    %v909 = vunpack.c.l.b16 %v310
    %v910 = vunpack.c.l.b16 %v311
    %v911 = vunpack.c.l.b16 %v312
    %v912 = vunpack.c.l.b16 %v313
    %v913 = vunpack.c.l.b16 %v314
    %v914 = vunpack.c.l.b16 %v315
    %v915 = vunpack.c.l.b16 %v316
    %v916 = vunpack.c.l.b16 %v317
    %v917 = vunpack.c.l.b16 %v318
    %v918 = vunpack.c.l.b16 %v319
    %v919 = vunpack.c.l.b16 %v320
    %v920 = vunpack.c.l.b16 %v321
    %v921 = vunpack.c.l.b16 %v322
    %v922 = vunpack.c.l.b16 %v323
    %v923 = vunpack.c.l.b16 %v324
    %v924 = vunpack.c.l.b16 %v325
    %v925 = vunpack.c.l.b16 %v326
    %v926 = vunpack.c.l.b16 %v327
    %v927 = vunpack.c.l.b16 %v328
    %v928 = vunpack.c.l.b16 %v329
    %v929 = vunpack.c.l.b16 %v330
    %v930 = vunpack.c.l.b16 %v331
    %v931 = vunpack.c.l.b16 %v332
    %v932 = vunpack.c.l.b16 %v333
    %v933 = vunpack.c.l.b16 %v334
    %v934 = vunpack.c.l.b16 %v335
    %v935 = vunpack.c.l.b16 %v336
    %v936 = vunpack.c.l.b16 %v337
    %v937 = vunpack.c.l.b16 %v338
    %v938 = vunpack.c.l.b16 %v339
    %v939 = vunpack.c.l.b16 %v340
    %v940 = vunpack.c.l.b16 %v341
    %v941 = vunpack.c.l.b16 %v342
    %v942 = vunpack.c.l.b16 %v343
    %v943 = vunpack.c.l.b16 %v344
    %v944 = vunpack.c.l.b16 %v345
    %v945 = vunpack.c.l.b16 %v346
    %v946 = vunpack.c.l.b16 %v347
    %v947 = vunpack.c.l.b16 %v348
    %v948 = vunpack.c.l.b16 %v349
    %v949 = vunpack.c.l.b16 %v350
    %v950 = vunpack.c.l.b16 %v351
    %v951 = vunpack.c.l.b16 %v352
    %v952 = vunpack.c.l.b16 %v353
    %v953 = vunpack.c.l.b16 %v354
    %v954 = vunpack.c.l.b16 %v355
    %v955 = vunpack.c.l.b16 %v356
    %v956 = vunpack.c.l.b16 %v357
    %v957 = vunpack.c.l.b16 %v358
    %v958 = vunpack.c.l.b16 %v359
    %v959 = vunpack.c.l.b16 %v360
    %v960 = vunpack.c.l.b16 %v361
    %v961 = vunpack.c.l.b16 %v362
    %v962 = vunpack.c.l.b16 %v363
    %v963 = vunpack.c.l.b16 %v364
    %v964 = vunpack.c.l.b16 %v365
    %v965 = vpack.c.b16 %v710, %v709
    %v966 = vpack.c.b16 %v712, %v711
    %v967 = vpack.c.b16 %v714, %v713
    %v968 = vpack.c.b16 %v716, %v715
    %v969 = vpack.c.b16 %v718, %v717
    %v970 = vpack.c.b16 %v720, %v719
    %v971 = vpack.c.b16 %v722, %v721
    %v972 = vpack.c.b16 %v724, %v723
    %v973 = vpack.c.b16 %v726, %v725
    %v974 = vpack.c.b16 %v728, %v727
    %v975 = vpack.c.b16 %v730, %v729
    %v976 = vpack.c.b16 %v732, %v731
    %v977 = vpack.c.b16 %v734, %v733
    %v978 = vpack.c.b16 %v736, %v735
    %v979 = vpack.c.b16 %v738, %v737
    %v980 = vpack.c.b16 %v740, %v739
    %v981 = vpack.c.b16 %v742, %v741
    %v982 = vpack.c.b16 %v744, %v743
    %v983 = vpack.c.b16 %v746, %v745
    %v984 = vpack.c.b16 %v748, %v747
    %v985 = vpack.c.b16 %v750, %v749
    %v986 = vpack.c.b16 %v752, %v751
    %v987 = vpack.c.b16 %v754, %v753
    %v988 = vpack.c.b16 %v756, %v755
    %v989 = vpack.c.b16 %v758, %v757
    %v990 = vpack.c.b16 %v760, %v759
    %v991 = vpack.c.b16 %v762, %v761
    %v992 = vpack.c.b16 %v764, %v763
    %v993 = vpack.c.b16 %v766, %v765
    %v994 = vpack.c.b16 %v768, %v767
    %v995 = vpack.c.b16 %v770, %v769
    %v996 = vpack.c.b16 %v772, %v771
    %v997 = vpack.c.b16 %v774, %v773
    %v998 = vpack.c.b16 %v776, %v775
    %v999 = vpack.c.b16 %v778, %v777
    %v1000 = vpack.c.b16 %v780, %v779
    %v1001 = vpack.c.b16 %v782, %v781
    %v1002 = vpack.c.b16 %v784, %v783
    %v1003 = vpack.c.b16 %v786, %v785
    %v1004 = vpack.c.b16 %v788, %v787
    %v1005 = vpack.c.b16 %v790, %v789
    %v1006 = vpack.c.b16 %v792, %v791
    %v1007 = vpack.c.b16 %v794, %v793
    %v1008 = vpack.c.b16 %v796, %v795
    %v1009 = vpack.c.b16 %v798, %v797
    %v1010 = vpack.c.b16 %v800, %v799
    %v1011 = vpack.c.b16 %v802, %v801
    %v1012 = vpack.c.b16 %v804, %v803
    %v1013 = vpack.c.b16 %v806, %v805
    %v1014 = vpack.c.b16 %v808, %v807
    %v1015 = vpack.c.b16 %v810, %v809
    %v1016 = vpack.c.b16 %v812, %v811
    %v1017 = vpack.c.b16 %v814, %v813
    %v1018 = vpack.c.b16 %v816, %v815
    %v1019 = vpack.c.b16 %v818, %v817
    %v1020 = vpack.c.b16 %v820, %v819
    %v1021 = vpack.c.b16 %v822, %v821
    %v1022 = vpack.c.b16 %v824, %v823
    %v1023 = vpack.c.b16 %v826, %v825
    %v1024 = vpack.c.b16 %v828, %v827
    %v1025 = vpack.c.b16 %v830, %v829
    %v1026 = vpack.c.b16 %v832, %v831
    %v1027 = vpack.c.b16 %v834, %v833
    %v1028 = vpack.c.b16 %v836, %v835
    %v1029 = vpack.c.b16 %v838, %v837
    %v1030 = vpack.c.b16 %v840, %v839
    %v1031 = vpack.c.b16 %v842, %v841
    %v1032 = vpack.c.b16 %v844, %v843
    %v1033 = vpack.c.b16 %v846, %v845
    %v1034 = vpack.c.b16 %v848, %v847
    %v1035 = vpack.c.b16 %v850, %v849
    %v1036 = vpack.c.b16 %v852, %v851
    %v1037 = vpack.c.b16 %v854, %v853
    %v1038 = vpack.c.b16 %v856, %v855
    %v1039 = vpack.c.b16 %v858, %v857
    %v1040 = vpack.c.b16 %v860, %v859
    %v1041 = vpack.c.b16 %v862, %v861
    %v1042 = vpack.c.b16 %v864, %v863
    %v1043 = vpack.c.b16 %v866, %v865
    %v1044 = vpack.c.b16 %v868, %v867
    %v1045 = vpack.c.b16 %v870, %v869
    %v1046 = vpack.c.b16 %v872, %v871
    %v1047 = vpack.c.b16 %v874, %v873
    %v1048 = vpack.c.b16 %v876, %v875
    %v1049 = vpack.c.b16 %v878, %v877
    %v1050 = vpack.c.b16 %v880, %v879
    %v1051 = vpack.c.b16 %v882, %v881
    %v1052 = vpack.c.b16 %v884, %v883
    %v1053 = vpack.c.b16 %v886, %v885
    %v1054 = vpack.c.b16 %v888, %v887
    %v1055 = vpack.c.b16 %v890, %v889
    %v1056 = vpack.c.b16 %v892, %v891
    %v1057 = vpack.c.b16 %v894, %v893
    %v1058 = vpack.c.b16 %v896, %v895
    %v1059 = vpack.c.b16 %v898, %v897
    %v1060 = vpack.c.b16 %v900, %v899
    %v1061 = vpack.c.b16 %v902, %v901
    %v1062 = vpack.c.b16 %v904, %v903
    %v1063 = vpack.c.b16 %v906, %v905
    %v1064 = vpack.c.b16 %v908, %v907
    %v1065 = vpack.c.b16 %v910, %v909
    %v1066 = vpack.c.b16 %v912, %v911
    %v1067 = vpack.c.b16 %v914, %v913
    %v1068 = vpack.c.b16 %v916, %v915
    %v1069 = vpack.c.b16 %v918, %v917
    %v1070 = vpack.c.b16 %v920, %v919
    %v1071 = vpack.c.b16 %v922, %v921
    %v1072 = vpack.c.b16 %v924, %v923
    %v1073 = vpack.c.b16 %v926, %v925
    %v1074 = vpack.c.b16 %v928, %v927
    %v1075 = vpack.c.b16 %v930, %v929
    %v1076 = vpack.c.b16 %v932, %v931
    %v1077 = vpack.c.b16 %v934, %v933
    %v1078 = vpack.c.b16 %v936, %v935
    %v1079 = vpack.c.b16 %v938, %v937
    %v1080 = vpack.c.b16 %v940, %v939
    %v1081 = vpack.c.b16 %v942, %v941
    %v1082 = vpack.c.b16 %v944, %v943
    %v1083 = vpack.c.b16 %v946, %v945
    %v1084 = vpack.c.b16 %v948, %v947
    %v1085 = vpack.c.b16 %v950, %v949
    %v1086 = vpack.c.b16 %v952, %v951
    %v1087 = vpack.c.b16 %v954, %v953
    %v1088 = vpack.c.b16 %v956, %v955
    %v1089 = vpack.c.b16 %v958, %v957
    %v1090 = vpack.c.b16 %v960, %v959
    %v1091 = vpack.c.b16 %v962, %v961
    %v1092 = vpack.c.b16 %v964, %v963
    %1221 = vmatprep.subr.bf16.mxu0 0
    %1222 = vmatpush1.bf16.msra.mxu0 %v965
    %1223 = vmatprep.subr.bf16.mxu0 0
    %1224 = vmatpush1.bf16.msra.mxu0 %v966
    %1225 = vmatprep.subr.bf16.mxu0 0
    %1226 = vmatpush1.bf16.msra.mxu0 %v967
    %1227 = vmatprep.subr.bf16.mxu0 0
    %1228 = vmatpush1.bf16.msra.mxu0 %v968
    %1229 = vmatprep.subr.bf16.mxu0 0
    %1230 = vmatpush1.bf16.msra.mxu0 %v969
    %1231 = vmatprep.subr.bf16.mxu0 0
    %1232 = vmatpush1.bf16.msra.mxu0 %v970
    %1233 = vmatprep.subr.bf16.mxu0 0
    %1234 = vmatpush1.bf16.msra.mxu0 %v971
    %1235 = vmatprep.subr.bf16.mxu0 0
    %1236 = vmatpush1.bf16.msra.mxu0 %v972
    %1237 = vmatprep.subr.bf16.mxu0 0
    %1238 = vmatpush1.bf16.msra.mxu0 %v973
    %1239 = vmatprep.subr.bf16.mxu0 0
    %1240 = vmatpush1.bf16.msra.mxu0 %v974
    %1241 = vmatprep.subr.bf16.mxu0 0
    %1242 = vmatpush1.bf16.msra.mxu0 %v975
    %1243 = vmatprep.subr.bf16.mxu0 0
    %1244 = vmatpush1.bf16.msra.mxu0 %v976
    %1245 = vmatprep.subr.bf16.mxu0 0
    %1246 = vmatpush1.bf16.msra.mxu0 %v977
    %1247 = vmatprep.subr.bf16.mxu0 0
    %1248 = vmatpush1.bf16.msra.mxu0 %v978
    %1249 = vmatprep.subr.bf16.mxu0 0
    %1250 = vmatpush1.bf16.msra.mxu0 %v979
    %1251 = vmatprep.subr.bf16.mxu0 0
    %1252 = vmatpush1.bf16.msra.mxu0 %v980
    %1253 = vmatprep.mubr.bf16.mxu0 %v422
    %1254 = vmatmul.mubr.bf16.gmra.mrb[0].mxu0 %v421
    %v1255 = vpop.f32.mrb[0].mxu0
    %v1256 = vadd.f32 %v371, %v1255
    %v1257 = vpop.f32.mrb[0].mxu0
    %v1258 = vpop.f32.mrb[0].mxu0
    %v1259 = vadd.f32 %v371, %v1258
    %v1260 = vpop.f32.mrb[0].mxu0
    %1261 = vdwg.mxu0
    %1262 = vmatprep.subr.bf16.mxu0 0
    %1263 = vmatpush1.bf16.msra.mxu0 %v981
    %1264 = vmatprep.subr.bf16.mxu0 0
    %1265 = vmatpush1.bf16.msra.mxu0 %v982
    %1266 = vmatprep.subr.bf16.mxu0 0
    %1267 = vmatpush1.bf16.msra.mxu0 %v983
    %1268 = vmatprep.subr.bf16.mxu0 0
    %1269 = vmatpush1.bf16.msra.mxu0 %v984
    %1270 = vmatprep.subr.bf16.mxu0 0
    %1271 = vmatpush1.bf16.msra.mxu0 %v985
    %1272 = vmatprep.subr.bf16.mxu0 0
    %1273 = vmatpush1.bf16.msra.mxu0 %v986
    %1274 = vmatprep.subr.bf16.mxu0 0
    %1275 = vmatpush1.bf16.msra.mxu0 %v987
    %1276 = vmatprep.subr.bf16.mxu0 0
    %1277 = vmatpush1.bf16.msra.mxu0 %v988
    %1278 = vmatprep.subr.bf16.mxu0 0
    %1279 = vmatpush1.bf16.msra.mxu0 %v989
    %1280 = vmatprep.subr.bf16.mxu0 0
    %1281 = vmatpush1.bf16.msra.mxu0 %v990
    %1282 = vmatprep.subr.bf16.mxu0 0
    %1283 = vmatpush1.bf16.msra.mxu0 %v991
    %1284 = vmatprep.subr.bf16.mxu0 0
    %1285 = vmatpush1.bf16.msra.mxu0 %v992
    %1286 = vmatprep.subr.bf16.mxu0 0
    %1287 = vmatpush1.bf16.msra.mxu0 %v993
    %1288 = vmatprep.subr.bf16.mxu0 0
    %1289 = vmatpush1.bf16.msra.mxu0 %v994
    %1290 = vmatprep.subr.bf16.mxu0 0
    %1291 = vmatpush1.bf16.msra.mxu0 %v995
    %1292 = vmatprep.subr.bf16.mxu0 0
    %1293 = vmatpush1.bf16.msra.mxu0 %v996
    %1294 = vmatprep.mubr.bf16.mxu0 %v424
    %1295 = vmatmul.mubr.bf16.gmra.mrb[0].mxu0 %v423
    %v1296 = vpop.f32.mrb[0].mxu0
    %v1297 = vadd.f32 %v1256, %v1296
    %v1298 = vpop.f32.mrb[0].mxu0
    %v1299 = vpop.f32.mrb[0].mxu0
    %v1300 = vadd.f32 %v1259, %v1299
    %v1301 = vpop.f32.mrb[0].mxu0
    %1302 = vdwg.mxu0
    %1303 = vmatprep.subr.bf16.mxu0 0
    %1304 = vmatpush1.bf16.msra.mxu0 %v997
    %1305 = vmatprep.subr.bf16.mxu0 0
    %1306 = vmatpush1.bf16.msra.mxu0 %v998
    %1307 = vmatprep.subr.bf16.mxu0 0
    %1308 = vmatpush1.bf16.msra.mxu0 %v999
    %1309 = vmatprep.subr.bf16.mxu0 0
    %1310 = vmatpush1.bf16.msra.mxu0 %v1000
    %1311 = vmatprep.subr.bf16.mxu0 0
    %1312 = vmatpush1.bf16.msra.mxu0 %v1001
    %1313 = vmatprep.subr.bf16.mxu0 0
    %1314 = vmatpush1.bf16.msra.mxu0 %v1002
    %1315 = vmatprep.subr.bf16.mxu0 0
    %1316 = vmatpush1.bf16.msra.mxu0 %v1003
    %1317 = vmatprep.subr.bf16.mxu0 0
    %1318 = vmatpush1.bf16.msra.mxu0 %v1004
    %1319 = vmatprep.subr.bf16.mxu0 0
    %1320 = vmatpush1.bf16.msra.mxu0 %v1005
    %1321 = vmatprep.subr.bf16.mxu0 0
    %1322 = vmatpush1.bf16.msra.mxu0 %v1006
    %1323 = vmatprep.subr.bf16.mxu0 0
    %1324 = vmatpush1.bf16.msra.mxu0 %v1007
    %1325 = vmatprep.subr.bf16.mxu0 0
    %1326 = vmatpush1.bf16.msra.mxu0 %v1008
    %1327 = vmatprep.subr.bf16.mxu0 0
    %1328 = vmatpush1.bf16.msra.mxu0 %v1009
    %1329 = vmatprep.subr.bf16.mxu0 0
    %1330 = vmatpush1.bf16.msra.mxu0 %v1010
    %1331 = vmatprep.subr.bf16.mxu0 0
    %1332 = vmatpush1.bf16.msra.mxu0 %v1011
    %1333 = vmatprep.subr.bf16.mxu0 0
    %1334 = vmatpush1.bf16.msra.mxu0 %v1012
    %1335 = vmatprep.mubr.bf16.mxu0 %v426
    %1336 = vmatmul.mubr.bf16.gmra.mrb[0].mxu0 %v425
    %v1337 = vpop.f32.mrb[0].mxu0
    %v1338 = vadd.f32 %v1297, %v1337
    %v1339 = vpop.f32.mrb[0].mxu0
    %v1340 = vpop.f32.mrb[0].mxu0
    %v1341 = vadd.f32 %v1300, %v1340
    %v1342 = vpop.f32.mrb[0].mxu0
    %1343 = vdwg.mxu0
    %1344 = vmatprep.subr.bf16.mxu0 0
    %1345 = vmatpush1.bf16.msra.mxu0 %v1013
    %1346 = vmatprep.subr.bf16.mxu0 0
    %1347 = vmatpush1.bf16.msra.mxu0 %v1014
    %1348 = vmatprep.subr.bf16.mxu0 0
    %1349 = vmatpush1.bf16.msra.mxu0 %v1015
    %1350 = vmatprep.subr.bf16.mxu0 0
    %1351 = vmatpush1.bf16.msra.mxu0 %v1016
    %1352 = vmatprep.subr.bf16.mxu0 0
    %1353 = vmatpush1.bf16.msra.mxu0 %v1017
    %1354 = vmatprep.subr.bf16.mxu0 0
    %1355 = vmatpush1.bf16.msra.mxu0 %v1018
    %1356 = vmatprep.subr.bf16.mxu0 0
    %1357 = vmatpush1.bf16.msra.mxu0 %v1019
    %1358 = vmatprep.subr.bf16.mxu0 0
    %1359 = vmatpush1.bf16.msra.mxu0 %v1020
    %1360 = vmatprep.subr.bf16.mxu0 0
    %1361 = vmatpush1.bf16.msra.mxu0 %v1021
    %1362 = vmatprep.subr.bf16.mxu0 0
    %1363 = vmatpush1.bf16.msra.mxu0 %v1022
    %1364 = vmatprep.subr.bf16.mxu0 0
    %1365 = vmatpush1.bf16.msra.mxu0 %v1023
    %1366 = vmatprep.subr.bf16.mxu0 0
    %1367 = vmatpush1.bf16.msra.mxu0 %v1024
    %1368 = vmatprep.subr.bf16.mxu0 0
    %1369 = vmatpush1.bf16.msra.mxu0 %v1025
    %1370 = vmatprep.subr.bf16.mxu0 0
    %1371 = vmatpush1.bf16.msra.mxu0 %v1026
    %1372 = vmatprep.subr.bf16.mxu0 0
    %1373 = vmatpush1.bf16.msra.mxu0 %v1027
    %1374 = vmatprep.subr.bf16.mxu0 0
    %1375 = vmatpush1.bf16.msra.mxu0 %v1028
    %1376 = vmatprep.mubr.bf16.mxu0 %v428
    %1377 = vmatmul.mubr.bf16.gmra.mrb[0].mxu0 %v427
    %v1378 = vpop.f32.mrb[0].mxu0
    %v1379 = vadd.f32 %v1338, %v1378
    %v1380 = vpop.f32.mrb[0].mxu0
    %v1381 = vpop.f32.mrb[0].mxu0
    %v1382 = vadd.f32 %v1341, %v1381
    %v1383 = vpop.f32.mrb[0].mxu0
    %1384 = vdwg.mxu0
    %1385 = vmatprep.subr.bf16.mxu0 0
    %1386 = vmatpush1.bf16.msra.mxu0 %v1029
    %1387 = vmatprep.subr.bf16.mxu0 0
    %1388 = vmatpush1.bf16.msra.mxu0 %v1030
    %1389 = vmatprep.subr.bf16.mxu0 0
    %1390 = vmatpush1.bf16.msra.mxu0 %v1031
    %1391 = vmatprep.subr.bf16.mxu0 0
    %1392 = vmatpush1.bf16.msra.mxu0 %v1032
    %1393 = vmatprep.subr.bf16.mxu0 0
    %1394 = vmatpush1.bf16.msra.mxu0 %v1033
    %1395 = vmatprep.subr.bf16.mxu0 0
    %1396 = vmatpush1.bf16.msra.mxu0 %v1034
    %1397 = vmatprep.subr.bf16.mxu0 0
    %1398 = vmatpush1.bf16.msra.mxu0 %v1035
    %1399 = vmatprep.subr.bf16.mxu0 0
    %1400 = vmatpush1.bf16.msra.mxu0 %v1036
    %1401 = vmatprep.subr.bf16.mxu0 0
    %1402 = vmatpush1.bf16.msra.mxu0 %v1037
    %1403 = vmatprep.subr.bf16.mxu0 0
    %1404 = vmatpush1.bf16.msra.mxu0 %v1038
    %1405 = vmatprep.subr.bf16.mxu0 0
    %1406 = vmatpush1.bf16.msra.mxu0 %v1039
    %1407 = vmatprep.subr.bf16.mxu0 0
    %1408 = vmatpush1.bf16.msra.mxu0 %v1040
    %1409 = vmatprep.subr.bf16.mxu0 0
    %1410 = vmatpush1.bf16.msra.mxu0 %v1041
    %1411 = vmatprep.subr.bf16.mxu0 0
    %1412 = vmatpush1.bf16.msra.mxu0 %v1042
    %1413 = vmatprep.subr.bf16.mxu0 0
    %1414 = vmatpush1.bf16.msra.mxu0 %v1043
    %1415 = vmatprep.subr.bf16.mxu0 0
    %1416 = vmatpush1.bf16.msra.mxu0 %v1044
    %1417 = vmatprep.mubr.bf16.mxu0 %v430
    %1418 = vmatmul.mubr.bf16.gmra.mrb[0].mxu0 %v429
    %v1419 = vpop.f32.mrb[0].mxu0
    %v1420 = vadd.f32 %v1379, %v1419
    %v1421 = vpop.f32.mrb[0].mxu0
    %v1422 = vpop.f32.mrb[0].mxu0
    %v1423 = vadd.f32 %v1382, %v1422
    %v1424 = vpop.f32.mrb[0].mxu0
    %1425 = vdwg.mxu0
    %1426 = vmatprep.subr.bf16.mxu0 0
    %1427 = vmatpush1.bf16.msra.mxu0 %v1045
    %1428 = vmatprep.subr.bf16.mxu0 0
    %1429 = vmatpush1.bf16.msra.mxu0 %v1046
    %1430 = vmatprep.subr.bf16.mxu0 0
    %1431 = vmatpush1.bf16.msra.mxu0 %v1047
    %1432 = vmatprep.subr.bf16.mxu0 0
    %1433 = vmatpush1.bf16.msra.mxu0 %v1048
    %1434 = vmatprep.subr.bf16.mxu0 0
    %1435 = vmatpush1.bf16.msra.mxu0 %v1049
    %1436 = vmatprep.subr.bf16.mxu0 0
    %1437 = vmatpush1.bf16.msra.mxu0 %v1050
    %1438 = vmatprep.subr.bf16.mxu0 0
    %1439 = vmatpush1.bf16.msra.mxu0 %v1051
    %1440 = vmatprep.subr.bf16.mxu0 0
    %1441 = vmatpush1.bf16.msra.mxu0 %v1052
    %1442 = vmatprep.subr.bf16.mxu0 0
    %1443 = vmatpush1.bf16.msra.mxu0 %v1053
    %1444 = vmatprep.subr.bf16.mxu0 0
    %1445 = vmatpush1.bf16.msra.mxu0 %v1054
    %1446 = vmatprep.subr.bf16.mxu0 0
    %1447 = vmatpush1.bf16.msra.mxu0 %v1055
    %1448 = vmatprep.subr.bf16.mxu0 0
    %1449 = vmatpush1.bf16.msra.mxu0 %v1056
    %1450 = vmatprep.subr.bf16.mxu0 0
    %1451 = vmatpush1.bf16.msra.mxu0 %v1057
    %1452 = vmatprep.subr.bf16.mxu0 0
    %1453 = vmatpush1.bf16.msra.mxu0 %v1058
    %1454 = vmatprep.subr.bf16.mxu0 0
    %1455 = vmatpush1.bf16.msra.mxu0 %v1059
    %1456 = vmatprep.subr.bf16.mxu0 0
    %1457 = vmatpush1.bf16.msra.mxu0 %v1060
    %1458 = vmatprep.mubr.bf16.mxu0 %v432
    %1459 = vmatmul.mubr.bf16.gmra.mrb[0].mxu0 %v431
    %v1460 = vpop.f32.mrb[0].mxu0
    %v1461 = vadd.f32 %v1420, %v1460
    %v1462 = vpop.f32.mrb[0].mxu0
    %v1463 = vpop.f32.mrb[0].mxu0
    %v1464 = vadd.f32 %v1423, %v1463
    %v1465 = vpop.f32.mrb[0].mxu0
    %1466 = vdwg.mxu0
    %1467 = vmatprep.subr.bf16.mxu0 0
    %1468 = vmatpush1.bf16.msra.mxu0 %v1061
    %1469 = vmatprep.subr.bf16.mxu0 0
    %1470 = vmatpush1.bf16.msra.mxu0 %v1062
    %1471 = vmatprep.subr.bf16.mxu0 0
    %1472 = vmatpush1.bf16.msra.mxu0 %v1063
    %1473 = vmatprep.subr.bf16.mxu0 0
    %1474 = vmatpush1.bf16.msra.mxu0 %v1064
    %1475 = vmatprep.subr.bf16.mxu0 0
    %1476 = vmatpush1.bf16.msra.mxu0 %v1065
    %1477 = vmatprep.subr.bf16.mxu0 0
    %1478 = vmatpush1.bf16.msra.mxu0 %v1066
    %1479 = vmatprep.subr.bf16.mxu0 0
    %1480 = vmatpush1.bf16.msra.mxu0 %v1067
    %1481 = vmatprep.subr.bf16.mxu0 0
    %1482 = vmatpush1.bf16.msra.mxu0 %v1068
    %1483 = vmatprep.subr.bf16.mxu0 0
    %1484 = vmatpush1.bf16.msra.mxu0 %v1069
    %1485 = vmatprep.subr.bf16.mxu0 0
    %1486 = vmatpush1.bf16.msra.mxu0 %v1070
    %1487 = vmatprep.subr.bf16.mxu0 0
    %1488 = vmatpush1.bf16.msra.mxu0 %v1071
    %1489 = vmatprep.subr.bf16.mxu0 0
    %1490 = vmatpush1.bf16.msra.mxu0 %v1072
    %1491 = vmatprep.subr.bf16.mxu0 0
    %1492 = vmatpush1.bf16.msra.mxu0 %v1073
    %1493 = vmatprep.subr.bf16.mxu0 0
    %1494 = vmatpush1.bf16.msra.mxu0 %v1074
    %1495 = vmatprep.subr.bf16.mxu0 0
    %1496 = vmatpush1.bf16.msra.mxu0 %v1075
    %1497 = vmatprep.subr.bf16.mxu0 0
    %1498 = vmatpush1.bf16.msra.mxu0 %v1076
    %1499 = vmatprep.mubr.bf16.mxu0 %v434
    %1500 = vmatmul.mubr.bf16.gmra.mrb[0].mxu0 %v433
    %v1501 = vpop.f32.mrb[0].mxu0
    %v1502 = vadd.f32 %v1461, %v1501
    %v1503 = vpop.f32.mrb[0].mxu0
    %v1504 = vpop.f32.mrb[0].mxu0
    %v1505 = vadd.f32 %v1464, %v1504
    %v1506 = vpop.f32.mrb[0].mxu0
    %1507 = vdwg.mxu0
    %1508 = vmatprep.subr.bf16.mxu0 0
    %1509 = vmatpush1.bf16.msra.mxu0 %v1077
    %1510 = vmatprep.subr.bf16.mxu0 0
    %1511 = vmatpush1.bf16.msra.mxu0 %v1078
    %1512 = vmatprep.subr.bf16.mxu0 0
    %1513 = vmatpush1.bf16.msra.mxu0 %v1079
    %1514 = vmatprep.subr.bf16.mxu0 0
    %1515 = vmatpush1.bf16.msra.mxu0 %v1080
    %1516 = vmatprep.subr.bf16.mxu0 0
    %1517 = vmatpush1.bf16.msra.mxu0 %v1081
    %1518 = vmatprep.subr.bf16.mxu0 0
    %1519 = vmatpush1.bf16.msra.mxu0 %v1082
    %1520 = vmatprep.subr.bf16.mxu0 0
    %1521 = vmatpush1.bf16.msra.mxu0 %v1083
    %1522 = vmatprep.subr.bf16.mxu0 0
    %1523 = vmatpush1.bf16.msra.mxu0 %v1084
    %1524 = vmatprep.subr.bf16.mxu0 0
    %1525 = vmatpush1.bf16.msra.mxu0 %v1085
    %1526 = vmatprep.subr.bf16.mxu0 0
    %1527 = vmatpush1.bf16.msra.mxu0 %v1086
    %1528 = vmatprep.subr.bf16.mxu0 0
    %1529 = vmatpush1.bf16.msra.mxu0 %v1087
    %1530 = vmatprep.subr.bf16.mxu0 0
    %1531 = vmatpush1.bf16.msra.mxu0 %v1088
    %1532 = vmatprep.subr.bf16.mxu0 0
    %1533 = vmatpush1.bf16.msra.mxu0 %v1089
    %1534 = vmatprep.subr.bf16.mxu0 0
    %1535 = vmatpush1.bf16.msra.mxu0 %v1090
    %1536 = vmatprep.subr.bf16.mxu0 0
    %1537 = vmatpush1.bf16.msra.mxu0 %v1091
    %1538 = vmatprep.subr.bf16.mxu0 0
    %1539 = vmatpush1.bf16.msra.mxu0 %v1092
    %1540 = vmatprep.mubr.bf16.mxu0 %v436
    %1541 = vmatmul.mubr.bf16.gmra.mrb[0].mxu0 %v435
    %v1542 = vpop.f32.mrb[0].mxu0
    %v1543 = vadd.f32 %v1502, %v1542
    %v1544 = vpop.f32.mrb[0].mxu0
    %v1545 = vpop.f32.mrb[0].mxu0
    %v1546 = vadd.f32 %v1505, %v1545
    %v1547 = vpop.f32.mrb[0].mxu0
    %1548 = vdwg.mxu0
    %v1549 = vpack.c.bf16 %v1546, %v1543
    %v1550 = vld [vmem:[#allocation4] sm:$0xff]
    %v1551 = vld [vmem:[#allocation4 + $0x8] sm:$0xff]
    %v1552 = vld [vmem:[#allocation4 + $0x10] sm:$0xff]
    %v1553 = vld [vmem:[#allocation4 + $0x18] sm:$0xff]
    %v1554 = vld [vmem:[#allocation4 + $0x20] sm:$0xff]
    %v1555 = vld [vmem:[#allocation4 + $0x28] sm:$0xff]
    %v1556 = vld [vmem:[#allocation4 + $0x30] sm:$0xff]
    %v1557 = vld [vmem:[#allocation4 + $0x38] sm:$0xff]
    %v1558 = vld [vmem:[#allocation4 + $0x40] sm:$0xff]
    %v1559 = vld [vmem:[#allocation4 + $0x48] sm:$0xff]
    %v1560 = vld [vmem:[#allocation4 + $0x50] sm:$0xff]
    %v1561 = vld [vmem:[#allocation4 + $0x58] sm:$0xff]
    %v1562 = vld [vmem:[#allocation4 + $0x60] sm:$0xff]
    %v1563 = vld [vmem:[#allocation4 + $0x68] sm:$0xff]
    %v1564 = vld [vmem:[#allocation4 + $0x70] sm:$0xff]
    %v1565 = vld [vmem:[#allocation4 + $0x78] sm:$0xff]
    %v1566 = vld [vmem:[%s4] ss:$8 sm:$0x3]
    %v1568 = vlaneseq
    %v1569 = vshrl.u32 %v1568, 7
    %v1570 = vsub.s32 0, %v1569
    %v1571 = vrot.slane %v1566, %v1570
    %v1572 = vlaneseq
    %v1573 = vshrl.u32 %v1572, 7
    %v1574 = vsub.s32 1, %v1573
    %v1575 = vrot.slane %v1566, %v1574
    %v1594 = vunpack.c.l.b16 %v1550
    %v1595 = vunpack.c.h.b16 %v1550
    %v1596 = vunpack.c.l.b16 %v1551
    %v1597 = vunpack.c.h.b16 %v1551
    %v1598 = vunpack.c.l.b16 %v1552
    %v1599 = vunpack.c.h.b16 %v1552
    %v1600 = vunpack.c.l.b16 %v1553
    %v1601 = vunpack.c.h.b16 %v1553
    %v1602 = vunpack.c.l.b16 %v1554
    %v1603 = vunpack.c.h.b16 %v1554
    %v1604 = vunpack.c.l.b16 %v1555
    %v1605 = vunpack.c.h.b16 %v1555
    %v1606 = vunpack.c.l.b16 %v1556
    %v1607 = vunpack.c.h.b16 %v1556
    %v1608 = vunpack.c.l.b16 %v1557
    %v1609 = vunpack.c.h.b16 %v1557
    %v1610 = vunpack.c.l.b16 %v1558
    %v1611 = vunpack.c.h.b16 %v1558
    %v1612 = vunpack.c.l.b16 %v1559
    %v1613 = vunpack.c.h.b16 %v1559
    %v1614 = vunpack.c.l.b16 %v1560
    %v1615 = vunpack.c.h.b16 %v1560
    %v1616 = vunpack.c.l.b16 %v1561
    %v1617 = vunpack.c.h.b16 %v1561
    %v1618 = vunpack.c.l.b16 %v1562
    %v1619 = vunpack.c.h.b16 %v1562
    %v1620 = vunpack.c.l.b16 %v1563
    %v1621 = vunpack.c.h.b16 %v1563
    %v1622 = vunpack.c.l.b16 %v1564
    %v1623 = vunpack.c.h.b16 %v1564
    %v1624 = vunpack.c.l.b16 %v1565
    %v1625 = vunpack.c.h.b16 %v1565
    %v1626 = vpack.c.b16 %v1596, %v1594
    %v1627 = vpack.c.b16 %v1597, %v1595
    %v1628 = vpack.c.b16 %v1600, %v1598
    %v1629 = vpack.c.b16 %v1601, %v1599
    %v1630 = vpack.c.b16 %v1604, %v1602
    %v1631 = vpack.c.b16 %v1605, %v1603
    %v1632 = vpack.c.b16 %v1608, %v1606
    %v1633 = vpack.c.b16 %v1609, %v1607
    %v1634 = vpack.c.b16 %v1612, %v1610
    %v1635 = vpack.c.b16 %v1613, %v1611
    %v1636 = vpack.c.b16 %v1616, %v1614
    %v1637 = vpack.c.b16 %v1617, %v1615
    %v1638 = vpack.c.b16 %v1620, %v1618
    %v1639 = vpack.c.b16 %v1621, %v1619
    %v1640 = vpack.c.b16 %v1624, %v1622
    %v1641 = vpack.c.b16 %v1625, %v1623
    %1658 = vmatprep.subr.bf16.mxu0 %v1627
    %1659 = vmatpush1.bf16.msra.mxu0 %v1626
    %1660 = vmatprep.subr.bf16.mxu0 %v1629
    %1661 = vmatpush1.bf16.msra.mxu0 %v1628
    %1662 = vmatprep.subr.bf16.mxu0 %v1631
    %1663 = vmatpush1.bf16.msra.mxu0 %v1630
    %1664 = vmatprep.subr.bf16.mxu0 %v1633
    %1665 = vmatpush1.bf16.msra.mxu0 %v1632
    %1666 = vmatprep.subr.bf16.mxu0 %v1635
    %1667 = vmatpush1.bf16.msra.mxu0 %v1634
    %1668 = vmatprep.subr.bf16.mxu0 %v1637
    %1669 = vmatpush1.bf16.msra.mxu0 %v1636
    %1670 = vmatprep.subr.bf16.mxu0 %v1639
    %1671 = vmatpush1.bf16.msra.mxu0 %v1638
    %1672 = vmatprep.subr.bf16.mxu0 %v1641
    %1673 = vmatpush1.bf16.msra.mxu0 %v1640
    %1674 = vmatprep.subr.bf16.mxu0 0
    %1675 = vmatpush1.bf16.msra.mxu0 0
    %1676 = vmatprep.subr.bf16.mxu0 0
    %1677 = vmatpush1.bf16.msra.mxu0 0
    %1678 = vmatprep.subr.bf16.mxu0 0
    %1679 = vmatpush1.bf16.msra.mxu0 0
    %1680 = vmatprep.subr.bf16.mxu0 0
    %1681 = vmatpush1.bf16.msra.mxu0 0
    %1682 = vmatprep.subr.bf16.mxu0 0
    %1683 = vmatpush1.bf16.msra.mxu0 0
    %1684 = vmatprep.subr.bf16.mxu0 0
    %1685 = vmatpush1.bf16.msra.mxu0 0
    %1686 = vmatprep.subr.bf16.mxu0 0
    %1687 = vmatpush1.bf16.msra.mxu0 0
    %1688 = vmatprep.subr.bf16.mxu0 0
    %1689 = vmatpush1.bf16.msra.mxu0 0
    %1690 = vmatprep.mubr.bf16.mxu0 0
    %1691 = vmatmul.mubr.bf16.gmra.mrb[0].mxu0 %v1549
    %v1692 = vpop.f32.mrb[0].mxu0
    %v1693 = vadd.f32 %v1571, %v1692
    %v1694 = vpop.f32.mrb[0].mxu0
    %v1695 = vadd.f32 %v1575, %v1694
    %v1696 = vpop.f32.mrb[0].mxu0
    %v1697 = vadd.f32 %v1571, %v1696
    %v1698 = vpop.f32.mrb[0].mxu0
    %v1699 = vadd.f32 %v1575, %v1698
    %1700 = vdwg.mxu0
    %vm1701 = vcmp.gt.f32.partialorder %v1693, 0.0
    %vm1702 = vcmp.gt.f32.partialorder %v1697, 0.0
    %v1703 = vmul.f32 %v1693, 0.01
    %v1704 = vmul.f32 %v1697, 0.01
    %v1705 = vsel %vm1701, %v1693, %v1703
    %v1706 = vsel %vm1702, %v1697, %v1704
    %v1707 = vpack.c.bf16 %v1706, %v1705
    %v1708 = vld [vmem:[%s5] sm:$0xf]
    %v1709 = vld [vmem:[%s5 + $0x4] sm:$0xf]
    %v1710 = vld [vmem:[%s5 + $0x8] sm:$0xf]
    %v1711 = vld [vmem:[%s5 + $0xc] sm:$0xf]
    %v1712 = vld [vmem:[%s5 + $0x10] sm:$0xf]
    %v1713 = vld [vmem:[%s5 + $0x14] sm:$0xf]
    %v1714 = vld [vmem:[%s5 + $0x18] sm:$0xf]
    %v1715 = vld [vmem:[%s5 + $0x1c] sm:$0xf]
    %v1716 = vld [vmem:[%s5 + $0x20] sm:$0xf]
    %v1717 = vld [vmem:[%s5 + $0x24] sm:$0xf]
    %v1718 = vld [vmem:[%s5 + $0x28] sm:$0xf]
    %v1719 = vld [vmem:[%s5 + $0x2c] sm:$0xf]
    %v1720 = vld [vmem:[%s5 + $0x30] sm:$0xf]
    %v1721 = vld [vmem:[%s5 + $0x34] sm:$0xf]
    %v1722 = vld [vmem:[%s5 + $0x38] sm:$0xf]
    %v1723 = vld [vmem:[%s5 + $0x3c] sm:$0xf]
    %v1724 = vld [vmem:[%s6] sm:$0x1]
    %v1725 = vlaneseq
    %v1726 = vshrl.u32 %v1725, 7
    %v1727 = vsub.s32 0, %v1726
    %v1728 = vrot.slane %v1724, %v1727
    %v1745 = vunpack.c.l.b16 %v1708
    %v1746 = vunpack.c.l.b16 %v1709
    %v1747 = vunpack.c.l.b16 %v1710
    %v1748 = vunpack.c.l.b16 %v1711
    %v1749 = vunpack.c.l.b16 %v1712
    %v1750 = vunpack.c.l.b16 %v1713
    %v1751 = vunpack.c.l.b16 %v1714
    %v1752 = vunpack.c.l.b16 %v1715
    %v1753 = vunpack.c.l.b16 %v1716
    %v1754 = vunpack.c.l.b16 %v1717
    %v1755 = vunpack.c.l.b16 %v1718
    %v1756 = vunpack.c.l.b16 %v1719
    %v1757 = vunpack.c.l.b16 %v1720
    %v1758 = vunpack.c.l.b16 %v1721
    %v1759 = vunpack.c.l.b16 %v1722
    %v1760 = vunpack.c.l.b16 %v1723
    %v1761 = vpack.c.b16 %v1746, %v1745
    %v1762 = vpack.c.b16 %v1748, %v1747
    %v1763 = vpack.c.b16 %v1750, %v1749
    %v1764 = vpack.c.b16 %v1752, %v1751
    %v1765 = vpack.c.b16 %v1754, %v1753
    %v1766 = vpack.c.b16 %v1756, %v1755
    %v1767 = vpack.c.b16 %v1758, %v1757
    %v1768 = vpack.c.b16 %v1760, %v1759
    %1777 = vmatprep.subr.bf16.mxu0 0
    %1778 = vmatpush1.bf16.msra.mxu0 %v1761
    %1779 = vmatprep.subr.bf16.mxu0 0
    %1780 = vmatpush1.bf16.msra.mxu0 %v1762
    %1781 = vmatprep.subr.bf16.mxu0 0
    %1782 = vmatpush1.bf16.msra.mxu0 %v1763
    %1783 = vmatprep.subr.bf16.mxu0 0
    %1784 = vmatpush1.bf16.msra.mxu0 %v1764
    %1785 = vmatprep.subr.bf16.mxu0 0
    %1786 = vmatpush1.bf16.msra.mxu0 %v1765
    %1787 = vmatprep.subr.bf16.mxu0 0
    %1788 = vmatpush1.bf16.msra.mxu0 %v1766
    %1789 = vmatprep.subr.bf16.mxu0 0
    %1790 = vmatpush1.bf16.msra.mxu0 %v1767
    %1791 = vmatprep.subr.bf16.mxu0 0
    %1792 = vmatpush1.bf16.msra.mxu0 %v1768
    %1793 = vmatprep.subr.bf16.mxu0 0
    %1794 = vmatpush1.bf16.msra.mxu0 0
    %1795 = vmatprep.subr.bf16.mxu0 0
    %1796 = vmatpush1.bf16.msra.mxu0 0
    %1797 = vmatprep.subr.bf16.mxu0 0
    %1798 = vmatpush1.bf16.msra.mxu0 0
    %1799 = vmatprep.subr.bf16.mxu0 0
    %1800 = vmatpush1.bf16.msra.mxu0 0
    %1801 = vmatprep.subr.bf16.mxu0 0
    %1802 = vmatpush1.bf16.msra.mxu0 0
    %1803 = vmatprep.subr.bf16.mxu0 0
    %1804 = vmatpush1.bf16.msra.mxu0 0
    %1805 = vmatprep.subr.bf16.mxu0 0
    %1806 = vmatpush1.bf16.msra.mxu0 0
    %1807 = vmatprep.subr.bf16.mxu0 0
    %1808 = vmatpush1.bf16.msra.mxu0 0
    %1809 = vmatprep.mubr.bf16.mxu0 0
    %1810 = vmatmul.mubr.bf16.gmra.mrb[0].mxu0 %v1707
    %v1811 = vpop.f32.mrb[0].mxu0
    %v1812 = vadd.f32 %v1728, %v1811
    %v1813 = vpop.f32.mrb[0].mxu0
    %v1814 = vpop.f32.mrb[0].mxu0
    %v1815 = vadd.f32 %v1728, %v1814
    %v1816 = vpop.f32.mrb[0].mxu0
    %1817 = vdwg.mxu0
    %v1818 = vadd.f32 %v1812, %v1695
    %v1819 = vadd.f32 %v1815, %v1699
    %v1820 = vpack.c.bf16 %v1819, %v1818
    %s1821 = scalar_lea.vmem [#allocation4], 128
    %v1822 = vld [vmem:[%s1821] sm:$0xff]
    %v1823 = vld [vmem:[%s1821 + $0x8] sm:$0xff]
    %v1824 = vld [vmem:[%s1821 + $0x10] sm:$0xff]
    %v1825 = vld [vmem:[%s1821 + $0x18] sm:$0xff]
    %v1826 = vld [vmem:[%s1821 + $0x20] sm:$0xff]
    %v1827 = vld [vmem:[%s1821 + $0x28] sm:$0xff]
    %v1828 = vld [vmem:[%s1821 + $0x30] sm:$0xff]
    %v1829 = vld [vmem:[%s1821 + $0x38] sm:$0xff]
    %v1830 = vld [vmem:[%s1821 + $0x40] sm:$0xff]
    %v1831 = vld [vmem:[%s1821 + $0x48] sm:$0xff]
    %v1832 = vld [vmem:[%s1821 + $0x50] sm:$0xff]
    %v1833 = vld [vmem:[%s1821 + $0x58] sm:$0xff]
    %v1834 = vld [vmem:[%s1821 + $0x60] sm:$0xff]
    %v1835 = vld [vmem:[%s1821 + $0x68] sm:$0xff]
    %v1836 = vld [vmem:[%s1821 + $0x70] sm:$0xff]
    %v1837 = vld [vmem:[%s1821 + $0x78] sm:$0xff]
    %s1838 = scalar_lea.vmem %s4, 1
    %v1839 = vld [vmem:[%s1838] ss:$8 sm:$0x3]
    %v1841 = vlaneseq
    %v1842 = vshrl.u32 %v1841, 7
    %v1843 = vsub.s32 0, %v1842
    %v1844 = vrot.slane %v1839, %v1843
    %v1845 = vlaneseq
    %v1846 = vshrl.u32 %v1845, 7
    %v1847 = vsub.s32 1, %v1846
    %v1848 = vrot.slane %v1839, %v1847
    %v1867 = vunpack.c.l.b16 %v1822
    %v1868 = vunpack.c.h.b16 %v1822
    %v1869 = vunpack.c.l.b16 %v1823
    %v1870 = vunpack.c.h.b16 %v1823
    %v1871 = vunpack.c.l.b16 %v1824
    %v1872 = vunpack.c.h.b16 %v1824
    %v1873 = vunpack.c.l.b16 %v1825
    %v1874 = vunpack.c.h.b16 %v1825
    %v1875 = vunpack.c.l.b16 %v1826
    %v1876 = vunpack.c.h.b16 %v1826
    %v1877 = vunpack.c.l.b16 %v1827
    %v1878 = vunpack.c.h.b16 %v1827
    %v1879 = vunpack.c.l.b16 %v1828
    %v1880 = vunpack.c.h.b16 %v1828
    %v1881 = vunpack.c.l.b16 %v1829
    %v1882 = vunpack.c.h.b16 %v1829
    %v1883 = vunpack.c.l.b16 %v1830
    %v1884 = vunpack.c.h.b16 %v1830
    %v1885 = vunpack.c.l.b16 %v1831
    %v1886 = vunpack.c.h.b16 %v1831
    %v1887 = vunpack.c.l.b16 %v1832
    %v1888 = vunpack.c.h.b16 %v1832
    %v1889 = vunpack.c.l.b16 %v1833
    %v1890 = vunpack.c.h.b16 %v1833
    %v1891 = vunpack.c.l.b16 %v1834
    %v1892 = vunpack.c.h.b16 %v1834
    %v1893 = vunpack.c.l.b16 %v1835
    %v1894 = vunpack.c.h.b16 %v1835
    %v1895 = vunpack.c.l.b16 %v1836
    %v1896 = vunpack.c.h.b16 %v1836
    %v1897 = vunpack.c.l.b16 %v1837
    %v1898 = vunpack.c.h.b16 %v1837
    %v1899 = vpack.c.b16 %v1869, %v1867
    %v1900 = vpack.c.b16 %v1870, %v1868
    %v1901 = vpack.c.b16 %v1873, %v1871
    %v1902 = vpack.c.b16 %v1874, %v1872
    %v1903 = vpack.c.b16 %v1877, %v1875
    %v1904 = vpack.c.b16 %v1878, %v1876
    %v1905 = vpack.c.b16 %v1881, %v1879
    %v1906 = vpack.c.b16 %v1882, %v1880
    %v1907 = vpack.c.b16 %v1885, %v1883
    %v1908 = vpack.c.b16 %v1886, %v1884
    %v1909 = vpack.c.b16 %v1889, %v1887
    %v1910 = vpack.c.b16 %v1890, %v1888
    %v1911 = vpack.c.b16 %v1893, %v1891
    %v1912 = vpack.c.b16 %v1894, %v1892
    %v1913 = vpack.c.b16 %v1897, %v1895
    %v1914 = vpack.c.b16 %v1898, %v1896
    %1931 = vmatprep.subr.bf16.mxu0 %v1900
    %1932 = vmatpush1.bf16.msra.mxu0 %v1899
    %1933 = vmatprep.subr.bf16.mxu0 %v1902
    %1934 = vmatpush1.bf16.msra.mxu0 %v1901
    %1935 = vmatprep.subr.bf16.mxu0 %v1904
    %1936 = vmatpush1.bf16.msra.mxu0 %v1903
    %1937 = vmatprep.subr.bf16.mxu0 %v1906
    %1938 = vmatpush1.bf16.msra.mxu0 %v1905
    %1939 = vmatprep.subr.bf16.mxu0 %v1908
    %1940 = vmatpush1.bf16.msra.mxu0 %v1907
    %1941 = vmatprep.subr.bf16.mxu0 %v1910
    %1942 = vmatpush1.bf16.msra.mxu0 %v1909
    %1943 = vmatprep.subr.bf16.mxu0 %v1912
    %1944 = vmatpush1.bf16.msra.mxu0 %v1911
    %1945 = vmatprep.subr.bf16.mxu0 %v1914
    %1946 = vmatpush1.bf16.msra.mxu0 %v1913
    %1947 = vmatprep.subr.bf16.mxu0 0
    %1948 = vmatpush1.bf16.msra.mxu0 0
    %1949 = vmatprep.subr.bf16.mxu0 0
    %1950 = vmatpush1.bf16.msra.mxu0 0
    %1951 = vmatprep.subr.bf16.mxu0 0
    %1952 = vmatpush1.bf16.msra.mxu0 0
    %1953 = vmatprep.subr.bf16.mxu0 0
    %1954 = vmatpush1.bf16.msra.mxu0 0
    %1955 = vmatprep.subr.bf16.mxu0 0
    %1956 = vmatpush1.bf16.msra.mxu0 0
    %1957 = vmatprep.subr.bf16.mxu0 0
    %1958 = vmatpush1.bf16.msra.mxu0 0
    %1959 = vmatprep.subr.bf16.mxu0 0
    %1960 = vmatpush1.bf16.msra.mxu0 0
    %1961 = vmatprep.subr.bf16.mxu0 0
    %1962 = vmatpush1.bf16.msra.mxu0 0
    %1963 = vmatprep.mubr.bf16.mxu0 0
    %1964 = vmatmul.mubr.bf16.gmra.mrb[0].mxu0 %v1820
    %v1965 = vpop.f32.mrb[0].mxu0
    %v1966 = vadd.f32 %v1844, %v1965
    %v1967 = vpop.f32.mrb[0].mxu0
    %v1968 = vadd.f32 %v1848, %v1967
    %v1969 = vpop.f32.mrb[0].mxu0
    %v1970 = vadd.f32 %v1844, %v1969
    %v1971 = vpop.f32.mrb[0].mxu0
    %v1972 = vadd.f32 %v1848, %v1971
    %1973 = vdwg.mxu0
    %vm1974 = vcmp.gt.f32.partialorder %v1966, 0.0
    %vm1975 = vcmp.gt.f32.partialorder %v1970, 0.0
    %v1976 = vmul.f32 %v1966, 0.01
    %v1977 = vmul.f32 %v1970, 0.01
    %v1978 = vsel %vm1974, %v1966, %v1976
    %v1979 = vsel %vm1975, %v1970, %v1977
    %v1980 = vpack.c.bf16 %v1979, %v1978
    %s1981 = scalar_lea.vmem %s5, 64
    %v1982 = vld [vmem:[%s1981] sm:$0xf]
    %v1983 = vld [vmem:[%s1981 + $0x4] sm:$0xf]
    %v1984 = vld [vmem:[%s1981 + $0x8] sm:$0xf]
    %v1985 = vld [vmem:[%s1981 + $0xc] sm:$0xf]
    %v1986 = vld [vmem:[%s1981 + $0x10] sm:$0xf]
    %v1987 = vld [vmem:[%s1981 + $0x14] sm:$0xf]
    %v1988 = vld [vmem:[%s1981 + $0x18] sm:$0xf]
    %v1989 = vld [vmem:[%s1981 + $0x1c] sm:$0xf]
    %v1990 = vld [vmem:[%s1981 + $0x20] sm:$0xf]
    %v1991 = vld [vmem:[%s1981 + $0x24] sm:$0xf]
    %v1992 = vld [vmem:[%s1981 + $0x28] sm:$0xf]
    %v1993 = vld [vmem:[%s1981 + $0x2c] sm:$0xf]
    %v1994 = vld [vmem:[%s1981 + $0x30] sm:$0xf]
    %v1995 = vld [vmem:[%s1981 + $0x34] sm:$0xf]
    %v1996 = vld [vmem:[%s1981 + $0x38] sm:$0xf]
    %v1997 = vld [vmem:[%s1981 + $0x3c] sm:$0xf]
    %v1998 = vld [vmem:[%s6 + $0x1] sm:$0x1]
    %v1999 = vlaneseq
    %v2000 = vshrl.u32 %v1999, 7
    %v2001 = vsub.s32 0, %v2000
    %v2002 = vrot.slane %v1998, %v2001
    %v2019 = vunpack.c.l.b16 %v1982
    %v2020 = vunpack.c.l.b16 %v1983
    %v2021 = vunpack.c.l.b16 %v1984
    %v2022 = vunpack.c.l.b16 %v1985
    %v2023 = vunpack.c.l.b16 %v1986
    %v2024 = vunpack.c.l.b16 %v1987
    %v2025 = vunpack.c.l.b16 %v1988
    %v2026 = vunpack.c.l.b16 %v1989
    %v2027 = vunpack.c.l.b16 %v1990
    %v2028 = vunpack.c.l.b16 %v1991
    %v2029 = vunpack.c.l.b16 %v1992
    %v2030 = vunpack.c.l.b16 %v1993
    %v2031 = vunpack.c.l.b16 %v1994
    %v2032 = vunpack.c.l.b16 %v1995
    %v2033 = vunpack.c.l.b16 %v1996
    %v2034 = vunpack.c.l.b16 %v1997
    %v2035 = vpack.c.b16 %v2020, %v2019
    %v2036 = vpack.c.b16 %v2022, %v2021
    %v2037 = vpack.c.b16 %v2024, %v2023
    %v2038 = vpack.c.b16 %v2026, %v2025
    %v2039 = vpack.c.b16 %v2028, %v2027
    %v2040 = vpack.c.b16 %v2030, %v2029
    %v2041 = vpack.c.b16 %v2032, %v2031
    %v2042 = vpack.c.b16 %v2034, %v2033
    %2051 = vmatprep.subr.bf16.mxu0 0
    %2052 = vmatpush1.bf16.msra.mxu0 %v2035
    %2053 = vmatprep.subr.bf16.mxu0 0
    %2054 = vmatpush1.bf16.msra.mxu0 %v2036
    %2055 = vmatprep.subr.bf16.mxu0 0
    %2056 = vmatpush1.bf16.msra.mxu0 %v2037
    %2057 = vmatprep.subr.bf16.mxu0 0
    %2058 = vmatpush1.bf16.msra.mxu0 %v2038
    %2059 = vmatprep.subr.bf16.mxu0 0
    %2060 = vmatpush1.bf16.msra.mxu0 %v2039
    %2061 = vmatprep.subr.bf16.mxu0 0
    %2062 = vmatpush1.bf16.msra.mxu0 %v2040
    %2063 = vmatprep.subr.bf16.mxu0 0
    %2064 = vmatpush1.bf16.msra.mxu0 %v2041
    %2065 = vmatprep.subr.bf16.mxu0 0
    %2066 = vmatpush1.bf16.msra.mxu0 %v2042
    %2067 = vmatprep.subr.bf16.mxu0 0
    %2068 = vmatpush1.bf16.msra.mxu0 0
    %2069 = vmatprep.subr.bf16.mxu0 0
    %2070 = vmatpush1.bf16.msra.mxu0 0
    %2071 = vmatprep.subr.bf16.mxu0 0
    %2072 = vmatpush1.bf16.msra.mxu0 0
    %2073 = vmatprep.subr.bf16.mxu0 0
    %2074 = vmatpush1.bf16.msra.mxu0 0
    %2075 = vmatprep.subr.bf16.mxu0 0
    %2076 = vmatpush1.bf16.msra.mxu0 0
    %2077 = vmatprep.subr.bf16.mxu0 0
    %2078 = vmatpush1.bf16.msra.mxu0 0
    %2079 = vmatprep.subr.bf16.mxu0 0
    %2080 = vmatpush1.bf16.msra.mxu0 0
    %2081 = vmatprep.subr.bf16.mxu0 0
    %2082 = vmatpush1.bf16.msra.mxu0 0
    %2083 = vmatprep.mubr.bf16.mxu0 0
    %2084 = vmatmul.mubr.bf16.gmra.mrb[0].mxu0 %v1980
    %v2085 = vpop.f32.mrb[0].mxu0
    %v2086 = vadd.f32 %v2002, %v2085
    %v2087 = vpop.f32.mrb[0].mxu0
    %v2088 = vpop.f32.mrb[0].mxu0
    %v2089 = vadd.f32 %v2002, %v2088
    %v2090 = vpop.f32.mrb[0].mxu0
    %2091 = vdwg.mxu0
    %v2092 = vadd.f32 %v2086, %v1968
    %v2093 = vadd.f32 %v2089, %v1972
    %v2094 = vpack.c.bf16 %v2093, %v2092
    %s2095 = scalar_lea.vmem [#allocation4], 256
    %v2096 = vld [vmem:[%s2095] sm:$0xff]
    %v2097 = vld [vmem:[%s2095 + $0x8] sm:$0xff]
    %v2098 = vld [vmem:[%s2095 + $0x10] sm:$0xff]
    %v2099 = vld [vmem:[%s2095 + $0x18] sm:$0xff]
    %v2100 = vld [vmem:[%s2095 + $0x20] sm:$0xff]
    %v2101 = vld [vmem:[%s2095 + $0x28] sm:$0xff]
    %v2102 = vld [vmem:[%s2095 + $0x30] sm:$0xff]
    %v2103 = vld [vmem:[%s2095 + $0x38] sm:$0xff]
    %v2104 = vld [vmem:[%s2095 + $0x40] sm:$0xff]
    %v2105 = vld [vmem:[%s2095 + $0x48] sm:$0xff]
    %v2106 = vld [vmem:[%s2095 + $0x50] sm:$0xff]
    %v2107 = vld [vmem:[%s2095 + $0x58] sm:$0xff]
    %v2108 = vld [vmem:[%s2095 + $0x60] sm:$0xff]
    %v2109 = vld [vmem:[%s2095 + $0x68] sm:$0xff]
    %v2110 = vld [vmem:[%s2095 + $0x70] sm:$0xff]
    %v2111 = vld [vmem:[%s2095 + $0x78] sm:$0xff]
    %s2112 = scalar_lea.vmem %s4, 2
    %v2113 = vld [vmem:[%s2112] ss:$8 sm:$0x3]
    %v2115 = vlaneseq
    %v2116 = vshrl.u32 %v2115, 7
    %v2117 = vsub.s32 0, %v2116
    %v2118 = vrot.slane %v2113, %v2117
    %v2119 = vlaneseq
    %v2120 = vshrl.u32 %v2119, 7
    %v2121 = vsub.s32 1, %v2120
    %v2122 = vrot.slane %v2113, %v2121
    %v2141 = vunpack.c.l.b16 %v2096
    %v2142 = vunpack.c.h.b16 %v2096
    %v2143 = vunpack.c.l.b16 %v2097
    %v2144 = vunpack.c.h.b16 %v2097
    %v2145 = vunpack.c.l.b16 %v2098
    %v2146 = vunpack.c.h.b16 %v2098
    %v2147 = vunpack.c.l.b16 %v2099
    %v2148 = vunpack.c.h.b16 %v2099
    %v2149 = vunpack.c.l.b16 %v2100
    %v2150 = vunpack.c.h.b16 %v2100
    %v2151 = vunpack.c.l.b16 %v2101
    %v2152 = vunpack.c.h.b16 %v2101
    %v2153 = vunpack.c.l.b16 %v2102
    %v2154 = vunpack.c.h.b16 %v2102
    %v2155 = vunpack.c.l.b16 %v2103
    %v2156 = vunpack.c.h.b16 %v2103
    %v2157 = vunpack.c.l.b16 %v2104
    %v2158 = vunpack.c.h.b16 %v2104
    %v2159 = vunpack.c.l.b16 %v2105
    %v2160 = vunpack.c.h.b16 %v2105
    %v2161 = vunpack.c.l.b16 %v2106
    %v2162 = vunpack.c.h.b16 %v2106
    %v2163 = vunpack.c.l.b16 %v2107
    %v2164 = vunpack.c.h.b16 %v2107
    %v2165 = vunpack.c.l.b16 %v2108
    %v2166 = vunpack.c.h.b16 %v2108
    %v2167 = vunpack.c.l.b16 %v2109
    %v2168 = vunpack.c.h.b16 %v2109
    %v2169 = vunpack.c.l.b16 %v2110
    %v2170 = vunpack.c.h.b16 %v2110
    %v2171 = vunpack.c.l.b16 %v2111
    %v2172 = vunpack.c.h.b16 %v2111
    %v2173 = vpack.c.b16 %v2143, %v2141
    %v2174 = vpack.c.b16 %v2144, %v2142
    %v2175 = vpack.c.b16 %v2147, %v2145
    %v2176 = vpack.c.b16 %v2148, %v2146
    %v2177 = vpack.c.b16 %v2151, %v2149
    %v2178 = vpack.c.b16 %v2152, %v2150
    %v2179 = vpack.c.b16 %v2155, %v2153
    %v2180 = vpack.c.b16 %v2156, %v2154
    %v2181 = vpack.c.b16 %v2159, %v2157
    %v2182 = vpack.c.b16 %v2160, %v2158
    %v2183 = vpack.c.b16 %v2163, %v2161
    %v2184 = vpack.c.b16 %v2164, %v2162
    %v2185 = vpack.c.b16 %v2167, %v2165
    %v2186 = vpack.c.b16 %v2168, %v2166
    %v2187 = vpack.c.b16 %v2171, %v2169
    %v2188 = vpack.c.b16 %v2172, %v2170
    %2205 = vmatprep.subr.bf16.mxu0 %v2174
    %2206 = vmatpush1.bf16.msra.mxu0 %v2173
    %2207 = vmatprep.subr.bf16.mxu0 %v2176
    %2208 = vmatpush1.bf16.msra.mxu0 %v2175
    %2209 = vmatprep.subr.bf16.mxu0 %v2178
    %2210 = vmatpush1.bf16.msra.mxu0 %v2177
    %2211 = vmatprep.subr.bf16.mxu0 %v2180
    %2212 = vmatpush1.bf16.msra.mxu0 %v2179
    %2213 = vmatprep.subr.bf16.mxu0 %v2182
    %2214 = vmatpush1.bf16.msra.mxu0 %v2181
    %2215 = vmatprep.subr.bf16.mxu0 %v2184
    %2216 = vmatpush1.bf16.msra.mxu0 %v2183
    %2217 = vmatprep.subr.bf16.mxu0 %v2186
    %2218 = vmatpush1.bf16.msra.mxu0 %v2185
    %2219 = vmatprep.subr.bf16.mxu0 %v2188
    %2220 = vmatpush1.bf16.msra.mxu0 %v2187
    %2221 = vmatprep.subr.bf16.mxu0 0
    %2222 = vmatpush1.bf16.msra.mxu0 0
    %2223 = vmatprep.subr.bf16.mxu0 0
    %2224 = vmatpush1.bf16.msra.mxu0 0
    %2225 = vmatprep.subr.bf16.mxu0 0
    %2226 = vmatpush1.bf16.msra.mxu0 0
    %2227 = vmatprep.subr.bf16.mxu0 0
    %2228 = vmatpush1.bf16.msra.mxu0 0
    %2229 = vmatprep.subr.bf16.mxu0 0
    %2230 = vmatpush1.bf16.msra.mxu0 0
    %2231 = vmatprep.subr.bf16.mxu0 0
    %2232 = vmatpush1.bf16.msra.mxu0 0
    %2233 = vmatprep.subr.bf16.mxu0 0
    %2234 = vmatpush1.bf16.msra.mxu0 0
    %2235 = vmatprep.subr.bf16.mxu0 0
    %2236 = vmatpush1.bf16.msra.mxu0 0
    %2237 = vmatprep.mubr.bf16.mxu0 0
    %2238 = vmatmul.mubr.bf16.gmra.mrb[0].mxu0 %v2094
    %v2239 = vpop.f32.mrb[0].mxu0
    %v2240 = vadd.f32 %v2118, %v2239
    %v2241 = vpop.f32.mrb[0].mxu0
    %v2242 = vadd.f32 %v2122, %v2241
    %v2243 = vpop.f32.mrb[0].mxu0
    %v2244 = vadd.f32 %v2118, %v2243
    %v2245 = vpop.f32.mrb[0].mxu0
    %v2246 = vadd.f32 %v2122, %v2245
    %2247 = vdwg.mxu0
    %vm2248 = vcmp.gt.f32.partialorder %v2240, 0.0
    %vm2249 = vcmp.gt.f32.partialorder %v2244, 0.0
    %v2250 = vmul.f32 %v2240, 0.01
    %v2251 = vmul.f32 %v2244, 0.01
    %v2252 = vsel %vm2248, %v2240, %v2250
    %v2253 = vsel %vm2249, %v2244, %v2251
    %v2254 = vpack.c.bf16 %v2253, %v2252
    %s2255 = scalar_lea.vmem %s5, 128
    %v2256 = vld [vmem:[%s2255] sm:$0xf]
    %v2257 = vld [vmem:[%s2255 + $0x4] sm:$0xf]
    %v2258 = vld [vmem:[%s2255 + $0x8] sm:$0xf]
    %v2259 = vld [vmem:[%s2255 + $0xc] sm:$0xf]
    %v2260 = vld [vmem:[%s2255 + $0x10] sm:$0xf]
    %v2261 = vld [vmem:[%s2255 + $0x14] sm:$0xf]
    %v2262 = vld [vmem:[%s2255 + $0x18] sm:$0xf]
    %v2263 = vld [vmem:[%s2255 + $0x1c] sm:$0xf]
    %v2264 = vld [vmem:[%s2255 + $0x20] sm:$0xf]
    %v2265 = vld [vmem:[%s2255 + $0x24] sm:$0xf]
    %v2266 = vld [vmem:[%s2255 + $0x28] sm:$0xf]
    %v2267 = vld [vmem:[%s2255 + $0x2c] sm:$0xf]
    %v2268 = vld [vmem:[%s2255 + $0x30] sm:$0xf]
    %v2269 = vld [vmem:[%s2255 + $0x34] sm:$0xf]
    %v2270 = vld [vmem:[%s2255 + $0x38] sm:$0xf]
    %v2271 = vld [vmem:[%s2255 + $0x3c] sm:$0xf]
    %v2272 = vld [vmem:[%s6 + $0x2] sm:$0x1]
    %v2273 = vlaneseq
    %v2274 = vshrl.u32 %v2273, 7
    %v2275 = vsub.s32 0, %v2274
    %v2276 = vrot.slane %v2272, %v2275
    %v2293 = vunpack.c.l.b16 %v2256
    %v2294 = vunpack.c.l.b16 %v2257
    %v2295 = vunpack.c.l.b16 %v2258
    %v2296 = vunpack.c.l.b16 %v2259
    %v2297 = vunpack.c.l.b16 %v2260
    %v2298 = vunpack.c.l.b16 %v2261
    %v2299 = vunpack.c.l.b16 %v2262
    %v2300 = vunpack.c.l.b16 %v2263
    %v2301 = vunpack.c.l.b16 %v2264
    %v2302 = vunpack.c.l.b16 %v2265
    %v2303 = vunpack.c.l.b16 %v2266
    %v2304 = vunpack.c.l.b16 %v2267
    %v2305 = vunpack.c.l.b16 %v2268
    %v2306 = vunpack.c.l.b16 %v2269
    %v2307 = vunpack.c.l.b16 %v2270
    %v2308 = vunpack.c.l.b16 %v2271
    %v2309 = vpack.c.b16 %v2294, %v2293
    %v2310 = vpack.c.b16 %v2296, %v2295
    %v2311 = vpack.c.b16 %v2298, %v2297
    %v2312 = vpack.c.b16 %v2300, %v2299
    %v2313 = vpack.c.b16 %v2302, %v2301
    %v2314 = vpack.c.b16 %v2304, %v2303
    %v2315 = vpack.c.b16 %v2306, %v2305
    %v2316 = vpack.c.b16 %v2308, %v2307
    %2325 = vmatprep.subr.bf16.mxu0 0
    %2326 = vmatpush1.bf16.msra.mxu0 %v2309
    %2327 = vmatprep.subr.bf16.mxu0 0
    %2328 = vmatpush1.bf16.msra.mxu0 %v2310
    %2329 = vmatprep.subr.bf16.mxu0 0
    %2330 = vmatpush1.bf16.msra.mxu0 %v2311
    %2331 = vmatprep.subr.bf16.mxu0 0
    %2332 = vmatpush1.bf16.msra.mxu0 %v2312
    %2333 = vmatprep.subr.bf16.mxu0 0
    %2334 = vmatpush1.bf16.msra.mxu0 %v2313
    %2335 = vmatprep.subr.bf16.mxu0 0
    %2336 = vmatpush1.bf16.msra.mxu0 %v2314
    %2337 = vmatprep.subr.bf16.mxu0 0
    %2338 = vmatpush1.bf16.msra.mxu0 %v2315
    %2339 = vmatprep.subr.bf16.mxu0 0
    %2340 = vmatpush1.bf16.msra.mxu0 %v2316
    %2341 = vmatprep.subr.bf16.mxu0 0
    %2342 = vmatpush1.bf16.msra.mxu0 0
    %2343 = vmatprep.subr.bf16.mxu0 0
    %2344 = vmatpush1.bf16.msra.mxu0 0
    %2345 = vmatprep.subr.bf16.mxu0 0
    %2346 = vmatpush1.bf16.msra.mxu0 0
    %2347 = vmatprep.subr.bf16.mxu0 0
    %2348 = vmatpush1.bf16.msra.mxu0 0
    %2349 = vmatprep.subr.bf16.mxu0 0
    %2350 = vmatpush1.bf16.msra.mxu0 0
    %2351 = vmatprep.subr.bf16.mxu0 0
    %2352 = vmatpush1.bf16.msra.mxu0 0
    %2353 = vmatprep.subr.bf16.mxu0 0
    %2354 = vmatpush1.bf16.msra.mxu0 0
    %2355 = vmatprep.subr.bf16.mxu0 0
    %2356 = vmatpush1.bf16.msra.mxu0 0
    %2357 = vmatprep.mubr.bf16.mxu0 0
    %2358 = vmatmul.mubr.bf16.gmra.mrb[0].mxu0 %v2254
    %v2359 = vpop.f32.mrb[0].mxu0
    %v2360 = vadd.f32 %v2276, %v2359
    %v2361 = vpop.f32.mrb[0].mxu0
    %v2362 = vpop.f32.mrb[0].mxu0
    %v2363 = vadd.f32 %v2276, %v2362
    %v2364 = vpop.f32.mrb[0].mxu0
    %2365 = vdwg.mxu0
    %v2366 = vadd.f32 %v2360, %v2242
    %v2367 = vadd.f32 %v2363, %v2246
    %v2368 = vpack.c.bf16 %v2367, %v2366
    %s2369 = scalar_lea.vmem [#allocation4], 384
    %v2370 = vld [vmem:[%s2369] sm:$0xff]
    %v2371 = vld [vmem:[%s2369 + $0x8] sm:$0xff]
    %v2372 = vld [vmem:[%s2369 + $0x10] sm:$0xff]
    %v2373 = vld [vmem:[%s2369 + $0x18] sm:$0xff]
    %v2374 = vld [vmem:[%s2369 + $0x20] sm:$0xff]
    %v2375 = vld [vmem:[%s2369 + $0x28] sm:$0xff]
    %v2376 = vld [vmem:[%s2369 + $0x30] sm:$0xff]
    %v2377 = vld [vmem:[%s2369 + $0x38] sm:$0xff]
    %v2378 = vld [vmem:[%s2369 + $0x40] sm:$0xff]
    %v2379 = vld [vmem:[%s2369 + $0x48] sm:$0xff]
    %v2380 = vld [vmem:[%s2369 + $0x50] sm:$0xff]
    %v2381 = vld [vmem:[%s2369 + $0x58] sm:$0xff]
    %v2382 = vld [vmem:[%s2369 + $0x60] sm:$0xff]
    %v2383 = vld [vmem:[%s2369 + $0x68] sm:$0xff]
    %v2384 = vld [vmem:[%s2369 + $0x70] sm:$0xff]
    %v2385 = vld [vmem:[%s2369 + $0x78] sm:$0xff]
    %s2386 = scalar_lea.vmem %s4, 3
    %v2387 = vld [vmem:[%s2386] ss:$8 sm:$0x3]
    %v2389 = vlaneseq
    %v2390 = vshrl.u32 %v2389, 7
    %v2391 = vsub.s32 0, %v2390
    %v2392 = vrot.slane %v2387, %v2391
    %v2393 = vlaneseq
    %v2394 = vshrl.u32 %v2393, 7
    %v2395 = vsub.s32 1, %v2394
    %v2396 = vrot.slane %v2387, %v2395
    %v2415 = vunpack.c.l.b16 %v2370
    %v2416 = vunpack.c.h.b16 %v2370
    %v2417 = vunpack.c.l.b16 %v2371
    %v2418 = vunpack.c.h.b16 %v2371
    %v2419 = vunpack.c.l.b16 %v2372
    %v2420 = vunpack.c.h.b16 %v2372
    %v2421 = vunpack.c.l.b16 %v2373
    %v2422 = vunpack.c.h.b16 %v2373
    %v2423 = vunpack.c.l.b16 %v2374
    %v2424 = vunpack.c.h.b16 %v2374
    %v2425 = vunpack.c.l.b16 %v2375
    %v2426 = vunpack.c.h.b16 %v2375
    %v2427 = vunpack.c.l.b16 %v2376
    %v2428 = vunpack.c.h.b16 %v2376
    %v2429 = vunpack.c.l.b16 %v2377
    %v2430 = vunpack.c.h.b16 %v2377
    %v2431 = vunpack.c.l.b16 %v2378
    %v2432 = vunpack.c.h.b16 %v2378
    %v2433 = vunpack.c.l.b16 %v2379
    %v2434 = vunpack.c.h.b16 %v2379
    %v2435 = vunpack.c.l.b16 %v2380
    %v2436 = vunpack.c.h.b16 %v2380
    %v2437 = vunpack.c.l.b16 %v2381
    %v2438 = vunpack.c.h.b16 %v2381
    %v2439 = vunpack.c.l.b16 %v2382
    %v2440 = vunpack.c.h.b16 %v2382
    %v2441 = vunpack.c.l.b16 %v2383
    %v2442 = vunpack.c.h.b16 %v2383
    %v2443 = vunpack.c.l.b16 %v2384
    %v2444 = vunpack.c.h.b16 %v2384
    %v2445 = vunpack.c.l.b16 %v2385
    %v2446 = vunpack.c.h.b16 %v2385
    %v2447 = vpack.c.b16 %v2417, %v2415
    %v2448 = vpack.c.b16 %v2418, %v2416
    %v2449 = vpack.c.b16 %v2421, %v2419
    %v2450 = vpack.c.b16 %v2422, %v2420
    %v2451 = vpack.c.b16 %v2425, %v2423
    %v2452 = vpack.c.b16 %v2426, %v2424
    %v2453 = vpack.c.b16 %v2429, %v2427
    %v2454 = vpack.c.b16 %v2430, %v2428
    %v2455 = vpack.c.b16 %v2433, %v2431
    %v2456 = vpack.c.b16 %v2434, %v2432
    %v2457 = vpack.c.b16 %v2437, %v2435
    %v2458 = vpack.c.b16 %v2438, %v2436
    %v2459 = vpack.c.b16 %v2441, %v2439
    %v2460 = vpack.c.b16 %v2442, %v2440
    %v2461 = vpack.c.b16 %v2445, %v2443
    %v2462 = vpack.c.b16 %v2446, %v2444
    %2479 = vmatprep.subr.bf16.mxu0 %v2448
    %2480 = vmatpush1.bf16.msra.mxu0 %v2447
    %2481 = vmatprep.subr.bf16.mxu0 %v2450
    %2482 = vmatpush1.bf16.msra.mxu0 %v2449
    %2483 = vmatprep.subr.bf16.mxu0 %v2452
    %2484 = vmatpush1.bf16.msra.mxu0 %v2451
    %2485 = vmatprep.subr.bf16.mxu0 %v2454
    %2486 = vmatpush1.bf16.msra.mxu0 %v2453
    %2487 = vmatprep.subr.bf16.mxu0 %v2456
    %2488 = vmatpush1.bf16.msra.mxu0 %v2455
    %2489 = vmatprep.subr.bf16.mxu0 %v2458
    %2490 = vmatpush1.bf16.msra.mxu0 %v2457
    %2491 = vmatprep.subr.bf16.mxu0 %v2460
    %2492 = vmatpush1.bf16.msra.mxu0 %v2459
    %2493 = vmatprep.subr.bf16.mxu0 %v2462
    %2494 = vmatpush1.bf16.msra.mxu0 %v2461
    %2495 = vmatprep.subr.bf16.mxu0 0
    %2496 = vmatpush1.bf16.msra.mxu0 0
    %2497 = vmatprep.subr.bf16.mxu0 0
    %2498 = vmatpush1.bf16.msra.mxu0 0
    %2499 = vmatprep.subr.bf16.mxu0 0
    %2500 = vmatpush1.bf16.msra.mxu0 0
    %2501 = vmatprep.subr.bf16.mxu0 0
    %2502 = vmatpush1.bf16.msra.mxu0 0
    %2503 = vmatprep.subr.bf16.mxu0 0
    %2504 = vmatpush1.bf16.msra.mxu0 0
    %2505 = vmatprep.subr.bf16.mxu0 0
    %2506 = vmatpush1.bf16.msra.mxu0 0
    %2507 = vmatprep.subr.bf16.mxu0 0
    %2508 = vmatpush1.bf16.msra.mxu0 0
    %2509 = vmatprep.subr.bf16.mxu0 0
    %2510 = vmatpush1.bf16.msra.mxu0 0
    %2511 = vmatprep.mubr.bf16.mxu0 0
    %2512 = vmatmul.mubr.bf16.gmra.mrb[0].mxu0 %v2368
    %v2513 = vpop.f32.mrb[0].mxu0
    %v2514 = vadd.f32 %v2392, %v2513
    %v2515 = vpop.f32.mrb[0].mxu0
    %v2516 = vadd.f32 %v2396, %v2515
    %v2517 = vpop.f32.mrb[0].mxu0
    %v2518 = vadd.f32 %v2392, %v2517
    %v2519 = vpop.f32.mrb[0].mxu0
    %v2520 = vadd.f32 %v2396, %v2519
    %2521 = vdwg.mxu0
    %vm2522 = vcmp.gt.f32.partialorder %v2514, 0.0
    %vm2523 = vcmp.gt.f32.partialorder %v2518, 0.0
    %v2524 = vmul.f32 %v2514, 0.01
    %v2525 = vmul.f32 %v2518, 0.01
    %v2526 = vsel %vm2522, %v2514, %v2524
    %v2527 = vsel %vm2523, %v2518, %v2525
    %v2528 = vpack.c.bf16 %v2527, %v2526
    %s2529 = scalar_lea.vmem %s5, 192
    %v2530 = vld [vmem:[%s2529] sm:$0xf]
    %v2531 = vld [vmem:[%s2529 + $0x4] sm:$0xf]
    %v2532 = vld [vmem:[%s2529 + $0x8] sm:$0xf]
    %v2533 = vld [vmem:[%s2529 + $0xc] sm:$0xf]
    %v2534 = vld [vmem:[%s2529 + $0x10] sm:$0xf]
    %v2535 = vld [vmem:[%s2529 + $0x14] sm:$0xf]
    %v2536 = vld [vmem:[%s2529 + $0x18] sm:$0xf]
    %v2537 = vld [vmem:[%s2529 + $0x1c] sm:$0xf]
    %v2538 = vld [vmem:[%s2529 + $0x20] sm:$0xf]
    %v2539 = vld [vmem:[%s2529 + $0x24] sm:$0xf]
    %v2540 = vld [vmem:[%s2529 + $0x28] sm:$0xf]
    %v2541 = vld [vmem:[%s2529 + $0x2c] sm:$0xf]
    %v2542 = vld [vmem:[%s2529 + $0x30] sm:$0xf]
    %v2543 = vld [vmem:[%s2529 + $0x34] sm:$0xf]
    %v2544 = vld [vmem:[%s2529 + $0x38] sm:$0xf]
    %v2545 = vld [vmem:[%s2529 + $0x3c] sm:$0xf]
    %v2546 = vld [vmem:[%s6 + $0x3] sm:$0x1]
    %v2547 = vlaneseq
    %v2548 = vshrl.u32 %v2547, 7
    %v2549 = vsub.s32 0, %v2548
    %v2550 = vrot.slane %v2546, %v2549
    %v2567 = vunpack.c.l.b16 %v2530
    %v2568 = vunpack.c.l.b16 %v2531
    %v2569 = vunpack.c.l.b16 %v2532
    %v2570 = vunpack.c.l.b16 %v2533
    %v2571 = vunpack.c.l.b16 %v2534
    %v2572 = vunpack.c.l.b16 %v2535
    %v2573 = vunpack.c.l.b16 %v2536
    %v2574 = vunpack.c.l.b16 %v2537
    %v2575 = vunpack.c.l.b16 %v2538
    %v2576 = vunpack.c.l.b16 %v2539
    %v2577 = vunpack.c.l.b16 %v2540
    %v2578 = vunpack.c.l.b16 %v2541
    %v2579 = vunpack.c.l.b16 %v2542
    %v2580 = vunpack.c.l.b16 %v2543
    %v2581 = vunpack.c.l.b16 %v2544
    %v2582 = vunpack.c.l.b16 %v2545
    %v2583 = vpack.c.b16 %v2568, %v2567
    %v2584 = vpack.c.b16 %v2570, %v2569
    %v2585 = vpack.c.b16 %v2572, %v2571
    %v2586 = vpack.c.b16 %v2574, %v2573
    %v2587 = vpack.c.b16 %v2576, %v2575
    %v2588 = vpack.c.b16 %v2578, %v2577
    %v2589 = vpack.c.b16 %v2580, %v2579
    %v2590 = vpack.c.b16 %v2582, %v2581
    %2599 = vmatprep.subr.bf16.mxu0 0
    %2600 = vmatpush1.bf16.msra.mxu0 %v2583
    %2601 = vmatprep.subr.bf16.mxu0 0
    %2602 = vmatpush1.bf16.msra.mxu0 %v2584
    %2603 = vmatprep.subr.bf16.mxu0 0
    %2604 = vmatpush1.bf16.msra.mxu0 %v2585
    %2605 = vmatprep.subr.bf16.mxu0 0
    %2606 = vmatpush1.bf16.msra.mxu0 %v2586
    %2607 = vmatprep.subr.bf16.mxu0 0
    %2608 = vmatpush1.bf16.msra.mxu0 %v2587
    %2609 = vmatprep.subr.bf16.mxu0 0
    %2610 = vmatpush1.bf16.msra.mxu0 %v2588
    %2611 = vmatprep.subr.bf16.mxu0 0
    %2612 = vmatpush1.bf16.msra.mxu0 %v2589
    %2613 = vmatprep.subr.bf16.mxu0 0
    %2614 = vmatpush1.bf16.msra.mxu0 %v2590
    %2615 = vmatprep.subr.bf16.mxu0 0
    %2616 = vmatpush1.bf16.msra.mxu0 0
    %2617 = vmatprep.subr.bf16.mxu0 0
    %2618 = vmatpush1.bf16.msra.mxu0 0
    %2619 = vmatprep.subr.bf16.mxu0 0
    %2620 = vmatpush1.bf16.msra.mxu0 0
    %2621 = vmatprep.subr.bf16.mxu0 0
    %2622 = vmatpush1.bf16.msra.mxu0 0
    %2623 = vmatprep.subr.bf16.mxu0 0
    %2624 = vmatpush1.bf16.msra.mxu0 0
    %2625 = vmatprep.subr.bf16.mxu0 0
    %2626 = vmatpush1.bf16.msra.mxu0 0
    %2627 = vmatprep.subr.bf16.mxu0 0
    %2628 = vmatpush1.bf16.msra.mxu0 0
    %2629 = vmatprep.subr.bf16.mxu0 0
    %2630 = vmatpush1.bf16.msra.mxu0 0
    %2631 = vmatprep.mubr.bf16.mxu0 0
    %2632 = vmatmul.mubr.bf16.gmra.mrb[0].mxu0 %v2528
    %v2633 = vpop.f32.mrb[0].mxu0
    %v2634 = vadd.f32 %v2550, %v2633
    %v2635 = vpop.f32.mrb[0].mxu0
    %v2636 = vpop.f32.mrb[0].mxu0
    %v2637 = vadd.f32 %v2550, %v2636
    %v2638 = vpop.f32.mrb[0].mxu0
    %2639 = vdwg.mxu0
    %v2640 = vadd.f32 %v2634, %v2516
    %v2641 = vadd.f32 %v2637, %v2520
    %v2642 = vpack.c.bf16 %v2641, %v2640
    %s2643 = scalar_lea.vmem [#allocation4], 512
    %v2644 = vld [vmem:[%s2643] sm:$0xff]
    %v2645 = vld [vmem:[%s2643 + $0x8] sm:$0xff]
    %v2646 = vld [vmem:[%s2643 + $0x10] sm:$0xff]
    %v2647 = vld [vmem:[%s2643 + $0x18] sm:$0xff]
    %v2648 = vld [vmem:[%s2643 + $0x20] sm:$0xff]
    %v2649 = vld [vmem:[%s2643 + $0x28] sm:$0xff]
    %v2650 = vld [vmem:[%s2643 + $0x30] sm:$0xff]
    %v2651 = vld [vmem:[%s2643 + $0x38] sm:$0xff]
    %v2652 = vld [vmem:[%s2643 + $0x40] sm:$0xff]
    %v2653 = vld [vmem:[%s2643 + $0x48] sm:$0xff]
    %v2654 = vld [vmem:[%s2643 + $0x50] sm:$0xff]
    %v2655 = vld [vmem:[%s2643 + $0x58] sm:$0xff]
    %v2656 = vld [vmem:[%s2643 + $0x60] sm:$0xff]
    %v2657 = vld [vmem:[%s2643 + $0x68] sm:$0xff]
    %v2658 = vld [vmem:[%s2643 + $0x70] sm:$0xff]
    %v2659 = vld [vmem:[%s2643 + $0x78] sm:$0xff]
    %s2660 = scalar_lea.vmem %s4, 4
    %v2661 = vld [vmem:[%s2660] ss:$8 sm:$0x3]
    %v2663 = vlaneseq
    %v2664 = vshrl.u32 %v2663, 7
    %v2665 = vsub.s32 0, %v2664
    %v2666 = vrot.slane %v2661, %v2665
    %v2667 = vlaneseq
    %v2668 = vshrl.u32 %v2667, 7
    %v2669 = vsub.s32 1, %v2668
    %v2670 = vrot.slane %v2661, %v2669
    %v2689 = vunpack.c.l.b16 %v2644
    %v2690 = vunpack.c.h.b16 %v2644
    %v2691 = vunpack.c.l.b16 %v2645
    %v2692 = vunpack.c.h.b16 %v2645
    %v2693 = vunpack.c.l.b16 %v2646
    %v2694 = vunpack.c.h.b16 %v2646
    %v2695 = vunpack.c.l.b16 %v2647
    %v2696 = vunpack.c.h.b16 %v2647
    %v2697 = vunpack.c.l.b16 %v2648
    %v2698 = vunpack.c.h.b16 %v2648
    %v2699 = vunpack.c.l.b16 %v2649
    %v2700 = vunpack.c.h.b16 %v2649
    %v2701 = vunpack.c.l.b16 %v2650
    %v2702 = vunpack.c.h.b16 %v2650
    %v2703 = vunpack.c.l.b16 %v2651
    %v2704 = vunpack.c.h.b16 %v2651
    %v2705 = vunpack.c.l.b16 %v2652
    %v2706 = vunpack.c.h.b16 %v2652
    %v2707 = vunpack.c.l.b16 %v2653
    %v2708 = vunpack.c.h.b16 %v2653
    %v2709 = vunpack.c.l.b16 %v2654
    %v2710 = vunpack.c.h.b16 %v2654
    %v2711 = vunpack.c.l.b16 %v2655
    %v2712 = vunpack.c.h.b16 %v2655
    %v2713 = vunpack.c.l.b16 %v2656
    %v2714 = vunpack.c.h.b16 %v2656
    %v2715 = vunpack.c.l.b16 %v2657
    %v2716 = vunpack.c.h.b16 %v2657
    %v2717 = vunpack.c.l.b16 %v2658
    %v2718 = vunpack.c.h.b16 %v2658
    %v2719 = vunpack.c.l.b16 %v2659
    %v2720 = vunpack.c.h.b16 %v2659
    %v2721 = vpack.c.b16 %v2691, %v2689
    %v2722 = vpack.c.b16 %v2692, %v2690
    %v2723 = vpack.c.b16 %v2695, %v2693
    %v2724 = vpack.c.b16 %v2696, %v2694
    %v2725 = vpack.c.b16 %v2699, %v2697
    %v2726 = vpack.c.b16 %v2700, %v2698
    %v2727 = vpack.c.b16 %v2703, %v2701
    %v2728 = vpack.c.b16 %v2704, %v2702
    %v2729 = vpack.c.b16 %v2707, %v2705
    %v2730 = vpack.c.b16 %v2708, %v2706
    %v2731 = vpack.c.b16 %v2711, %v2709
    %v2732 = vpack.c.b16 %v2712, %v2710
    %v2733 = vpack.c.b16 %v2715, %v2713
    %v2734 = vpack.c.b16 %v2716, %v2714
    %v2735 = vpack.c.b16 %v2719, %v2717
    %v2736 = vpack.c.b16 %v2720, %v2718
    %2753 = vmatprep.subr.bf16.mxu0 %v2722
    %2754 = vmatpush1.bf16.msra.mxu0 %v2721
    %2755 = vmatprep.subr.bf16.mxu0 %v2724
    %2756 = vmatpush1.bf16.msra.mxu0 %v2723
    %2757 = vmatprep.subr.bf16.mxu0 %v2726
    %2758 = vmatpush1.bf16.msra.mxu0 %v2725
    %2759 = vmatprep.subr.bf16.mxu0 %v2728
    %2760 = vmatpush1.bf16.msra.mxu0 %v2727
    %2761 = vmatprep.subr.bf16.mxu0 %v2730
    %2762 = vmatpush1.bf16.msra.mxu0 %v2729
    %2763 = vmatprep.subr.bf16.mxu0 %v2732
    %2764 = vmatpush1.bf16.msra.mxu0 %v2731
    %2765 = vmatprep.subr.bf16.mxu0 %v2734
    %2766 = vmatpush1.bf16.msra.mxu0 %v2733
    %2767 = vmatprep.subr.bf16.mxu0 %v2736
    %2768 = vmatpush1.bf16.msra.mxu0 %v2735
    %2769 = vmatprep.subr.bf16.mxu0 0
    %2770 = vmatpush1.bf16.msra.mxu0 0
    %2771 = vmatprep.subr.bf16.mxu0 0
    %2772 = vmatpush1.bf16.msra.mxu0 0
    %2773 = vmatprep.subr.bf16.mxu0 0
    %2774 = vmatpush1.bf16.msra.mxu0 0
    %2775 = vmatprep.subr.bf16.mxu0 0
    %2776 = vmatpush1.bf16.msra.mxu0 0
    %2777 = vmatprep.subr.bf16.mxu0 0
    %2778 = vmatpush1.bf16.msra.mxu0 0
    %2779 = vmatprep.subr.bf16.mxu0 0
    %2780 = vmatpush1.bf16.msra.mxu0 0
    %2781 = vmatprep.subr.bf16.mxu0 0
    %2782 = vmatpush1.bf16.msra.mxu0 0
    %2783 = vmatprep.subr.bf16.mxu0 0
    %2784 = vmatpush1.bf16.msra.mxu0 0
    %2785 = vmatprep.mubr.bf16.mxu0 0
    %2786 = vmatmul.mubr.bf16.gmra.mrb[0].mxu0 %v2642
    %v2787 = vpop.f32.mrb[0].mxu0
    %v2788 = vadd.f32 %v2666, %v2787
    %v2789 = vpop.f32.mrb[0].mxu0
    %v2790 = vadd.f32 %v2670, %v2789
    %v2791 = vpop.f32.mrb[0].mxu0
    %v2792 = vadd.f32 %v2666, %v2791
    %v2793 = vpop.f32.mrb[0].mxu0
    %v2794 = vadd.f32 %v2670, %v2793
    %2795 = vdwg.mxu0
    %vm2796 = vcmp.gt.f32.partialorder %v2788, 0.0
    %vm2797 = vcmp.gt.f32.partialorder %v2792, 0.0
    %v2798 = vmul.f32 %v2788, 0.01
    %v2799 = vmul.f32 %v2792, 0.01
    %v2800 = vsel %vm2796, %v2788, %v2798
    %v2801 = vsel %vm2797, %v2792, %v2799
    %v2802 = vpack.c.bf16 %v2801, %v2800
    %s2803 = scalar_lea.vmem %s5, 256
    %v2804 = vld [vmem:[%s2803] sm:$0xf]
    %v2805 = vld [vmem:[%s2803 + $0x4] sm:$0xf]
    %v2806 = vld [vmem:[%s2803 + $0x8] sm:$0xf]
    %v2807 = vld [vmem:[%s2803 + $0xc] sm:$0xf]
    %v2808 = vld [vmem:[%s2803 + $0x10] sm:$0xf]
    %v2809 = vld [vmem:[%s2803 + $0x14] sm:$0xf]
    %v2810 = vld [vmem:[%s2803 + $0x18] sm:$0xf]
    %v2811 = vld [vmem:[%s2803 + $0x1c] sm:$0xf]
    %v2812 = vld [vmem:[%s2803 + $0x20] sm:$0xf]
    %v2813 = vld [vmem:[%s2803 + $0x24] sm:$0xf]
    %v2814 = vld [vmem:[%s2803 + $0x28] sm:$0xf]
    %v2815 = vld [vmem:[%s2803 + $0x2c] sm:$0xf]
    %v2816 = vld [vmem:[%s2803 + $0x30] sm:$0xf]
    %v2817 = vld [vmem:[%s2803 + $0x34] sm:$0xf]
    %v2818 = vld [vmem:[%s2803 + $0x38] sm:$0xf]
    %v2819 = vld [vmem:[%s2803 + $0x3c] sm:$0xf]
    %v2820 = vld [vmem:[%s6 + $0x4] sm:$0x1]
    %v2821 = vlaneseq
    %v2822 = vshrl.u32 %v2821, 7
    %v2823 = vsub.s32 0, %v2822
    %v2824 = vrot.slane %v2820, %v2823
    %v2841 = vunpack.c.l.b16 %v2804
    %v2842 = vunpack.c.l.b16 %v2805
    %v2843 = vunpack.c.l.b16 %v2806
    %v2844 = vunpack.c.l.b16 %v2807
    %v2845 = vunpack.c.l.b16 %v2808
    %v2846 = vunpack.c.l.b16 %v2809
    %v2847 = vunpack.c.l.b16 %v2810
    %v2848 = vunpack.c.l.b16 %v2811
    %v2849 = vunpack.c.l.b16 %v2812
    %v2850 = vunpack.c.l.b16 %v2813
    %v2851 = vunpack.c.l.b16 %v2814
    %v2852 = vunpack.c.l.b16 %v2815
    %v2853 = vunpack.c.l.b16 %v2816
    %v2854 = vunpack.c.l.b16 %v2817
    %v2855 = vunpack.c.l.b16 %v2818
    %v2856 = vunpack.c.l.b16 %v2819
    %v2857 = vpack.c.b16 %v2842, %v2841
    %v2858 = vpack.c.b16 %v2844, %v2843
    %v2859 = vpack.c.b16 %v2846, %v2845
    %v2860 = vpack.c.b16 %v2848, %v2847
    %v2861 = vpack.c.b16 %v2850, %v2849
    %v2862 = vpack.c.b16 %v2852, %v2851
    %v2863 = vpack.c.b16 %v2854, %v2853
    %v2864 = vpack.c.b16 %v2856, %v2855
    %2873 = vmatprep.subr.bf16.mxu0 0
    %2874 = vmatpush1.bf16.msra.mxu0 %v2857
    %2875 = vmatprep.subr.bf16.mxu0 0
    %2876 = vmatpush1.bf16.msra.mxu0 %v2858
    %2877 = vmatprep.subr.bf16.mxu0 0
    %2878 = vmatpush1.bf16.msra.mxu0 %v2859
    %2879 = vmatprep.subr.bf16.mxu0 0
    %2880 = vmatpush1.bf16.msra.mxu0 %v2860
    %2881 = vmatprep.subr.bf16.mxu0 0
    %2882 = vmatpush1.bf16.msra.mxu0 %v2861
    %2883 = vmatprep.subr.bf16.mxu0 0
    %2884 = vmatpush1.bf16.msra.mxu0 %v2862
    %2885 = vmatprep.subr.bf16.mxu0 0
    %2886 = vmatpush1.bf16.msra.mxu0 %v2863
    %2887 = vmatprep.subr.bf16.mxu0 0
    %2888 = vmatpush1.bf16.msra.mxu0 %v2864
    %2889 = vmatprep.subr.bf16.mxu0 0
    %2890 = vmatpush1.bf16.msra.mxu0 0
    %2891 = vmatprep.subr.bf16.mxu0 0
    %2892 = vmatpush1.bf16.msra.mxu0 0
    %2893 = vmatprep.subr.bf16.mxu0 0
    %2894 = vmatpush1.bf16.msra.mxu0 0
    %2895 = vmatprep.subr.bf16.mxu0 0
    %2896 = vmatpush1.bf16.msra.mxu0 0
    %2897 = vmatprep.subr.bf16.mxu0 0
    %2898 = vmatpush1.bf16.msra.mxu0 0
    %2899 = vmatprep.subr.bf16.mxu0 0
    %2900 = vmatpush1.bf16.msra.mxu0 0
    %2901 = vmatprep.subr.bf16.mxu0 0
    %2902 = vmatpush1.bf16.msra.mxu0 0
    %2903 = vmatprep.subr.bf16.mxu0 0
    %2904 = vmatpush1.bf16.msra.mxu0 0
    %2905 = vmatprep.mubr.bf16.mxu0 0
    %2906 = vmatmul.mubr.bf16.gmra.mrb[0].mxu0 %v2802
    %v2907 = vpop.f32.mrb[0].mxu0
    %v2908 = vadd.f32 %v2824, %v2907
    %v2909 = vpop.f32.mrb[0].mxu0
    %v2910 = vpop.f32.mrb[0].mxu0
    %v2911 = vadd.f32 %v2824, %v2910
    %v2912 = vpop.f32.mrb[0].mxu0
    %2913 = vdwg.mxu0
    %v2914 = vadd.f32 %v2908, %v2790
    %v2915 = vadd.f32 %v2911, %v2794
    %v2916 = vpack.c.bf16 %v2915, %v2914
    %s2917 = scalar_lea.vmem [#allocation4], 640
    %v2918 = vld [vmem:[%s2917] sm:$0xff]
    %v2919 = vld [vmem:[%s2917 + $0x8] sm:$0xff]
    %v2920 = vld [vmem:[%s2917 + $0x10] sm:$0xff]
    %v2921 = vld [vmem:[%s2917 + $0x18] sm:$0xff]
    %v2922 = vld [vmem:[%s2917 + $0x20] sm:$0xff]
    %v2923 = vld [vmem:[%s2917 + $0x28] sm:$0xff]
    %v2924 = vld [vmem:[%s2917 + $0x30] sm:$0xff]
    %v2925 = vld [vmem:[%s2917 + $0x38] sm:$0xff]
    %v2926 = vld [vmem:[%s2917 + $0x40] sm:$0xff]
    %v2927 = vld [vmem:[%s2917 + $0x48] sm:$0xff]
    %v2928 = vld [vmem:[%s2917 + $0x50] sm:$0xff]
    %v2929 = vld [vmem:[%s2917 + $0x58] sm:$0xff]
    %v2930 = vld [vmem:[%s2917 + $0x60] sm:$0xff]
    %v2931 = vld [vmem:[%s2917 + $0x68] sm:$0xff]
    %v2932 = vld [vmem:[%s2917 + $0x70] sm:$0xff]
    %v2933 = vld [vmem:[%s2917 + $0x78] sm:$0xff]
    %s2934 = scalar_lea.vmem %s4, 5
    %v2935 = vld [vmem:[%s2934] ss:$8 sm:$0x3]
    %v2937 = vlaneseq
    %v2938 = vshrl.u32 %v2937, 7
    %v2939 = vsub.s32 0, %v2938
    %v2940 = vrot.slane %v2935, %v2939
    %v2941 = vlaneseq
    %v2942 = vshrl.u32 %v2941, 7
    %v2943 = vsub.s32 1, %v2942
    %v2944 = vrot.slane %v2935, %v2943
    %v2963 = vunpack.c.l.b16 %v2918
    %v2964 = vunpack.c.h.b16 %v2918
    %v2965 = vunpack.c.l.b16 %v2919
    %v2966 = vunpack.c.h.b16 %v2919
    %v2967 = vunpack.c.l.b16 %v2920
    %v2968 = vunpack.c.h.b16 %v2920
    %v2969 = vunpack.c.l.b16 %v2921
    %v2970 = vunpack.c.h.b16 %v2921
    %v2971 = vunpack.c.l.b16 %v2922
    %v2972 = vunpack.c.h.b16 %v2922
    %v2973 = vunpack.c.l.b16 %v2923
    %v2974 = vunpack.c.h.b16 %v2923
    %v2975 = vunpack.c.l.b16 %v2924
    %v2976 = vunpack.c.h.b16 %v2924
    %v2977 = vunpack.c.l.b16 %v2925
    %v2978 = vunpack.c.h.b16 %v2925
    %v2979 = vunpack.c.l.b16 %v2926
    %v2980 = vunpack.c.h.b16 %v2926
    %v2981 = vunpack.c.l.b16 %v2927
    %v2982 = vunpack.c.h.b16 %v2927
    %v2983 = vunpack.c.l.b16 %v2928
    %v2984 = vunpack.c.h.b16 %v2928
    %v2985 = vunpack.c.l.b16 %v2929
    %v2986 = vunpack.c.h.b16 %v2929
    %v2987 = vunpack.c.l.b16 %v2930
    %v2988 = vunpack.c.h.b16 %v2930
    %v2989 = vunpack.c.l.b16 %v2931
    %v2990 = vunpack.c.h.b16 %v2931
    %v2991 = vunpack.c.l.b16 %v2932
    %v2992 = vunpack.c.h.b16 %v2932
    %v2993 = vunpack.c.l.b16 %v2933
    %v2994 = vunpack.c.h.b16 %v2933
    %v2995 = vpack.c.b16 %v2965, %v2963
    %v2996 = vpack.c.b16 %v2966, %v2964
    %v2997 = vpack.c.b16 %v2969, %v2967
    %v2998 = vpack.c.b16 %v2970, %v2968
    %v2999 = vpack.c.b16 %v2973, %v2971
    %v3000 = vpack.c.b16 %v2974, %v2972
    %v3001 = vpack.c.b16 %v2977, %v2975
    %v3002 = vpack.c.b16 %v2978, %v2976
    %v3003 = vpack.c.b16 %v2981, %v2979
    %v3004 = vpack.c.b16 %v2982, %v2980
    %v3005 = vpack.c.b16 %v2985, %v2983
    %v3006 = vpack.c.b16 %v2986, %v2984
    %v3007 = vpack.c.b16 %v2989, %v2987
    %v3008 = vpack.c.b16 %v2990, %v2988
    %v3009 = vpack.c.b16 %v2993, %v2991
    %v3010 = vpack.c.b16 %v2994, %v2992
    %3027 = vmatprep.subr.bf16.mxu0 %v2996
    %3028 = vmatpush1.bf16.msra.mxu0 %v2995
    %3029 = vmatprep.subr.bf16.mxu0 %v2998
    %3030 = vmatpush1.bf16.msra.mxu0 %v2997
    %3031 = vmatprep.subr.bf16.mxu0 %v3000
    %3032 = vmatpush1.bf16.msra.mxu0 %v2999
    %3033 = vmatprep.subr.bf16.mxu0 %v3002
    %3034 = vmatpush1.bf16.msra.mxu0 %v3001
    %3035 = vmatprep.subr.bf16.mxu0 %v3004
    %3036 = vmatpush1.bf16.msra.mxu0 %v3003
    %3037 = vmatprep.subr.bf16.mxu0 %v3006
    %3038 = vmatpush1.bf16.msra.mxu0 %v3005
    %3039 = vmatprep.subr.bf16.mxu0 %v3008
    %3040 = vmatpush1.bf16.msra.mxu0 %v3007
    %3041 = vmatprep.subr.bf16.mxu0 %v3010
    %3042 = vmatpush1.bf16.msra.mxu0 %v3009
    %3043 = vmatprep.subr.bf16.mxu0 0
    %3044 = vmatpush1.bf16.msra.mxu0 0
    %3045 = vmatprep.subr.bf16.mxu0 0
    %3046 = vmatpush1.bf16.msra.mxu0 0
    %3047 = vmatprep.subr.bf16.mxu0 0
    %3048 = vmatpush1.bf16.msra.mxu0 0
    %3049 = vmatprep.subr.bf16.mxu0 0
    %3050 = vmatpush1.bf16.msra.mxu0 0
    %3051 = vmatprep.subr.bf16.mxu0 0
    %3052 = vmatpush1.bf16.msra.mxu0 0
    %3053 = vmatprep.subr.bf16.mxu0 0
    %3054 = vmatpush1.bf16.msra.mxu0 0
    %3055 = vmatprep.subr.bf16.mxu0 0
    %3056 = vmatpush1.bf16.msra.mxu0 0
    %3057 = vmatprep.subr.bf16.mxu0 0
    %3058 = vmatpush1.bf16.msra.mxu0 0
    %3059 = vmatprep.mubr.bf16.mxu0 0
    %3060 = vmatmul.mubr.bf16.gmra.mrb[0].mxu0 %v2916
    %v3061 = vpop.f32.mrb[0].mxu0
    %v3062 = vadd.f32 %v2940, %v3061
    %v3063 = vpop.f32.mrb[0].mxu0
    %v3064 = vadd.f32 %v2944, %v3063
    %v3065 = vpop.f32.mrb[0].mxu0
    %v3066 = vadd.f32 %v2940, %v3065
    %v3067 = vpop.f32.mrb[0].mxu0
    %v3068 = vadd.f32 %v2944, %v3067
    %3069 = vdwg.mxu0
    %vm3070 = vcmp.gt.f32.partialorder %v3062, 0.0
    %vm3071 = vcmp.gt.f32.partialorder %v3066, 0.0
    %v3072 = vmul.f32 %v3062, 0.01
    %v3073 = vmul.f32 %v3066, 0.01
    %v3074 = vsel %vm3070, %v3062, %v3072
    %v3075 = vsel %vm3071, %v3066, %v3073
    %v3076 = vpack.c.bf16 %v3075, %v3074
    %s3077 = scalar_lea.vmem %s5, 320
    %v3078 = vld [vmem:[%s3077] sm:$0xf]
    %v3079 = vld [vmem:[%s3077 + $0x4] sm:$0xf]
    %v3080 = vld [vmem:[%s3077 + $0x8] sm:$0xf]
    %v3081 = vld [vmem:[%s3077 + $0xc] sm:$0xf]
    %v3082 = vld [vmem:[%s3077 + $0x10] sm:$0xf]
    %v3083 = vld [vmem:[%s3077 + $0x14] sm:$0xf]
    %v3084 = vld [vmem:[%s3077 + $0x18] sm:$0xf]
    %v3085 = vld [vmem:[%s3077 + $0x1c] sm:$0xf]
    %v3086 = vld [vmem:[%s3077 + $0x20] sm:$0xf]
    %v3087 = vld [vmem:[%s3077 + $0x24] sm:$0xf]
    %v3088 = vld [vmem:[%s3077 + $0x28] sm:$0xf]
    %v3089 = vld [vmem:[%s3077 + $0x2c] sm:$0xf]
    %v3090 = vld [vmem:[%s3077 + $0x30] sm:$0xf]
    %v3091 = vld [vmem:[%s3077 + $0x34] sm:$0xf]
    %v3092 = vld [vmem:[%s3077 + $0x38] sm:$0xf]
    %v3093 = vld [vmem:[%s3077 + $0x3c] sm:$0xf]
    %v3094 = vld [vmem:[%s6 + $0x5] sm:$0x1]
    %v3095 = vlaneseq
    %v3096 = vshrl.u32 %v3095, 7
    %v3097 = vsub.s32 0, %v3096
    %v3098 = vrot.slane %v3094, %v3097
    %v3115 = vunpack.c.l.b16 %v3078
    %v3116 = vunpack.c.l.b16 %v3079
    %v3117 = vunpack.c.l.b16 %v3080
    %v3118 = vunpack.c.l.b16 %v3081
    %v3119 = vunpack.c.l.b16 %v3082
    %v3120 = vunpack.c.l.b16 %v3083
    %v3121 = vunpack.c.l.b16 %v3084
    %v3122 = vunpack.c.l.b16 %v3085
    %v3123 = vunpack.c.l.b16 %v3086
    %v3124 = vunpack.c.l.b16 %v3087
    %v3125 = vunpack.c.l.b16 %v3088
    %v3126 = vunpack.c.l.b16 %v3089
    %v3127 = vunpack.c.l.b16 %v3090
    %v3128 = vunpack.c.l.b16 %v3091
    %v3129 = vunpack.c.l.b16 %v3092
    %v3130 = vunpack.c.l.b16 %v3093
    %v3131 = vpack.c.b16 %v3116, %v3115
    %v3132 = vpack.c.b16 %v3118, %v3117
    %v3133 = vpack.c.b16 %v3120, %v3119
    %v3134 = vpack.c.b16 %v3122, %v3121
    %v3135 = vpack.c.b16 %v3124, %v3123
    %v3136 = vpack.c.b16 %v3126, %v3125
    %v3137 = vpack.c.b16 %v3128, %v3127
    %v3138 = vpack.c.b16 %v3130, %v3129
    %3147 = vmatprep.subr.bf16.mxu0 0
    %3148 = vmatpush1.bf16.msra.mxu0 %v3131
    %3149 = vmatprep.subr.bf16.mxu0 0
    %3150 = vmatpush1.bf16.msra.mxu0 %v3132
    %3151 = vmatprep.subr.bf16.mxu0 0
    %3152 = vmatpush1.bf16.msra.mxu0 %v3133
    %3153 = vmatprep.subr.bf16.mxu0 0
    %3154 = vmatpush1.bf16.msra.mxu0 %v3134
    %3155 = vmatprep.subr.bf16.mxu0 0
    %3156 = vmatpush1.bf16.msra.mxu0 %v3135
    %3157 = vmatprep.subr.bf16.mxu0 0
    %3158 = vmatpush1.bf16.msra.mxu0 %v3136
    %3159 = vmatprep.subr.bf16.mxu0 0
    %3160 = vmatpush1.bf16.msra.mxu0 %v3137
    %3161 = vmatprep.subr.bf16.mxu0 0
    %3162 = vmatpush1.bf16.msra.mxu0 %v3138
    %3163 = vmatprep.subr.bf16.mxu0 0
    %3164 = vmatpush1.bf16.msra.mxu0 0
    %3165 = vmatprep.subr.bf16.mxu0 0
    %3166 = vmatpush1.bf16.msra.mxu0 0
    %3167 = vmatprep.subr.bf16.mxu0 0
    %3168 = vmatpush1.bf16.msra.mxu0 0
    %3169 = vmatprep.subr.bf16.mxu0 0
    %3170 = vmatpush1.bf16.msra.mxu0 0
    %3171 = vmatprep.subr.bf16.mxu0 0
    %3172 = vmatpush1.bf16.msra.mxu0 0
    %3173 = vmatprep.subr.bf16.mxu0 0
    %3174 = vmatpush1.bf16.msra.mxu0 0
    %3175 = vmatprep.subr.bf16.mxu0 0
    %3176 = vmatpush1.bf16.msra.mxu0 0
    %3177 = vmatprep.subr.bf16.mxu0 0
    %3178 = vmatpush1.bf16.msra.mxu0 0
    %3179 = vmatprep.mubr.bf16.mxu0 0
    %3180 = vmatmul.mubr.bf16.gmra.mrb[0].mxu0 %v3076
    %v3181 = vpop.f32.mrb[0].mxu0
    %v3182 = vadd.f32 %v3098, %v3181
    %v3183 = vpop.f32.mrb[0].mxu0
    %v3184 = vpop.f32.mrb[0].mxu0
    %v3185 = vadd.f32 %v3098, %v3184
    %v3186 = vpop.f32.mrb[0].mxu0
    %3187 = vdwg.mxu0
    %v3188 = vadd.f32 %v3182, %v3064
    %v3189 = vadd.f32 %v3185, %v3068
    %vm3190 = vcmp.gt.f32.partialorder %v3188, 0.0
    %vm3191 = vcmp.gt.f32.partialorder %v3189, 0.0
    %v3192 = vmul.f32 %v3188, 0.01
    %v3193 = vmul.f32 %v3189, 0.01
    %v3194 = vsel %vm3190, %v3188, %v3192
    %v3195 = vsel %vm3191, %v3189, %v3193
    %v3196 = vpack.c.bf16 %v3195, %v3194
    %v3197 = vld [vmem:[#allocation6] sm:$0xff]
    %v3198 = vld [vmem:[#allocation6 + $0x8] sm:$0xff]
    %v3199 = vld [vmem:[#allocation6 + $0x10] sm:$0xff]
    %v3200 = vld [vmem:[#allocation6 + $0x18] sm:$0xff]
    %v3201 = vld [vmem:[#allocation6 + $0x20] sm:$0xff]
    %v3202 = vld [vmem:[#allocation6 + $0x28] sm:$0xff]
    %v3203 = vld [vmem:[#allocation6 + $0x30] sm:$0xff]
    %v3204 = vld [vmem:[#allocation6 + $0x38] sm:$0xff]
    %v3205 = vld [vmem:[#allocation6 + $0x40] sm:$0xff]
    %v3206 = vld [vmem:[#allocation6 + $0x48] sm:$0xff]
    %v3207 = vld [vmem:[#allocation6 + $0x50] sm:$0xff]
    %v3208 = vld [vmem:[#allocation6 + $0x58] sm:$0xff]
    %v3209 = vld [vmem:[#allocation6 + $0x60] sm:$0xff]
    %v3210 = vld [vmem:[#allocation6 + $0x68] sm:$0xff]
    %v3211 = vld [vmem:[#allocation6 + $0x70] sm:$0xff]
    %v3212 = vld [vmem:[#allocation6 + $0x78] sm:$0xff]
    %v3213 = vld [vmem:[#allocation6 + $0x80] sm:$0xff]
    %v3214 = vld [vmem:[#allocation6 + $0x88] sm:$0xff]
    %v3215 = vld [vmem:[#allocation6 + $0x90] sm:$0xff]
    %v3216 = vld [vmem:[#allocation6 + $0x98] sm:$0xff]
    %v3217 = vld [vmem:[#allocation6 + $0xa0] sm:$0xff]
    %v3218 = vld [vmem:[#allocation6 + $0xa8] sm:$0xff]
    %v3219 = vld [vmem:[#allocation6 + $0xb0] sm:$0xff]
    %v3220 = vld [vmem:[#allocation6 + $0xb8] sm:$0xff]
    %v3221 = vld [vmem:[#allocation6 + $0xc0] sm:$0xff]
    %v3222 = vld [vmem:[#allocation6 + $0xc8] sm:$0xff]
    %v3223 = vld [vmem:[#allocation6 + $0xd0] sm:$0xff]
    %v3224 = vld [vmem:[#allocation6 + $0xd8] sm:$0xff]
    %v3225 = vld [vmem:[#allocation6 + $0xe0] sm:$0xff]
    %v3226 = vld [vmem:[#allocation6 + $0xe8] sm:$0xff]
    %v3227 = vld [vmem:[#allocation6 + $0xf0] sm:$0xff]
    %v3228 = vld [vmem:[#allocation6 + $0xf8] sm:$0xff]
    %v3229 = vld [vmem:[%s8] sm:$0xf]
    %v3231 = vlaneseq
    %v3232 = vshrl.u32 %v3231, 7
    %v3233 = vsub.s32 0, %v3232
    %v3234 = vrot.slane %v3229, %v3233
    %v3235 = vlaneseq
    %v3236 = vshrl.u32 %v3235, 7
    %v3237 = vsub.s32 1, %v3236
    %v3238 = vrot.slane %v3229, %v3237
    %v3239 = vlaneseq
    %v3240 = vshrl.u32 %v3239, 7
    %v3241 = vsub.s32 2, %v3240
    %v3242 = vrot.slane %v3229, %v3241
    %v3243 = vlaneseq
    %v3244 = vshrl.u32 %v3243, 7
    %v3245 = vsub.s32 3, %v3244
    %v3246 = vrot.slane %v3229, %v3245
    %v3283 = vunpack.c.l.b16 %v3197
    %v3284 = vunpack.c.h.b16 %v3197
    %v3285 = vunpack.c.l.b16 %v3198
    %v3286 = vunpack.c.h.b16 %v3198
    %v3287 = vunpack.c.l.b16 %v3199
    %v3288 = vunpack.c.h.b16 %v3199
    %v3289 = vunpack.c.l.b16 %v3200
    %v3290 = vunpack.c.h.b16 %v3200
    %v3291 = vunpack.c.l.b16 %v3201
    %v3292 = vunpack.c.h.b16 %v3201
    %v3293 = vunpack.c.l.b16 %v3202
    %v3294 = vunpack.c.h.b16 %v3202
    %v3295 = vunpack.c.l.b16 %v3203
    %v3296 = vunpack.c.h.b16 %v3203
    %v3297 = vunpack.c.l.b16 %v3204
    %v3298 = vunpack.c.h.b16 %v3204
    %v3299 = vunpack.c.l.b16 %v3205
    %v3300 = vunpack.c.h.b16 %v3205
    %v3301 = vunpack.c.l.b16 %v3206
    %v3302 = vunpack.c.h.b16 %v3206
    %v3303 = vunpack.c.l.b16 %v3207
    %v3304 = vunpack.c.h.b16 %v3207
    %v3305 = vunpack.c.l.b16 %v3208
    %v3306 = vunpack.c.h.b16 %v3208
    %v3307 = vunpack.c.l.b16 %v3209
    %v3308 = vunpack.c.h.b16 %v3209
    %v3309 = vunpack.c.l.b16 %v3210
    %v3310 = vunpack.c.h.b16 %v3210
    %v3311 = vunpack.c.l.b16 %v3211
    %v3312 = vunpack.c.h.b16 %v3211
    %v3313 = vunpack.c.l.b16 %v3212
    %v3314 = vunpack.c.h.b16 %v3212
    %v3315 = vunpack.c.l.b16 %v3213
    %v3316 = vunpack.c.h.b16 %v3213
    %v3317 = vunpack.c.l.b16 %v3214
    %v3318 = vunpack.c.h.b16 %v3214
    %v3319 = vunpack.c.l.b16 %v3215
    %v3320 = vunpack.c.h.b16 %v3215
    %v3321 = vunpack.c.l.b16 %v3216
    %v3322 = vunpack.c.h.b16 %v3216
    %v3323 = vunpack.c.l.b16 %v3217
    %v3324 = vunpack.c.h.b16 %v3217
    %v3325 = vunpack.c.l.b16 %v3218
    %v3326 = vunpack.c.h.b16 %v3218
    %v3327 = vunpack.c.l.b16 %v3219
    %v3328 = vunpack.c.h.b16 %v3219
    %v3329 = vunpack.c.l.b16 %v3220
    %v3330 = vunpack.c.h.b16 %v3220
    %v3331 = vunpack.c.l.b16 %v3221
    %v3332 = vunpack.c.h.b16 %v3221
    %v3333 = vunpack.c.l.b16 %v3222
    %v3334 = vunpack.c.h.b16 %v3222
    %v3335 = vunpack.c.l.b16 %v3223
    %v3336 = vunpack.c.h.b16 %v3223
    %v3337 = vunpack.c.l.b16 %v3224
    %v3338 = vunpack.c.h.b16 %v3224
    %v3339 = vunpack.c.l.b16 %v3225
    %v3340 = vunpack.c.h.b16 %v3225
    %v3341 = vunpack.c.l.b16 %v3226
    %v3342 = vunpack.c.h.b16 %v3226
    %v3343 = vunpack.c.l.b16 %v3227
    %v3344 = vunpack.c.h.b16 %v3227
    %v3345 = vunpack.c.l.b16 %v3228
    %v3346 = vunpack.c.h.b16 %v3228
    %v3347 = vpack.c.b16 %v3287, %v3283
    %v3348 = vpack.c.b16 %v3288, %v3284
    %v3349 = vpack.c.b16 %v3289, %v3285
    %v3350 = vpack.c.b16 %v3290, %v3286
    %v3351 = vpack.c.b16 %v3295, %v3291
    %v3352 = vpack.c.b16 %v3296, %v3292
    %v3353 = vpack.c.b16 %v3297, %v3293
    %v3354 = vpack.c.b16 %v3298, %v3294
    %v3355 = vpack.c.b16 %v3303, %v3299
    %v3356 = vpack.c.b16 %v3304, %v3300
    %v3357 = vpack.c.b16 %v3305, %v3301
    %v3358 = vpack.c.b16 %v3306, %v3302
    %v3359 = vpack.c.b16 %v3311, %v3307
    %v3360 = vpack.c.b16 %v3312, %v3308
    %v3361 = vpack.c.b16 %v3313, %v3309
    %v3362 = vpack.c.b16 %v3314, %v3310
    %v3363 = vpack.c.b16 %v3319, %v3315
    %v3364 = vpack.c.b16 %v3320, %v3316
    %v3365 = vpack.c.b16 %v3321, %v3317
    %v3366 = vpack.c.b16 %v3322, %v3318
    %v3367 = vpack.c.b16 %v3327, %v3323
    %v3368 = vpack.c.b16 %v3328, %v3324
    %v3369 = vpack.c.b16 %v3329, %v3325
    %v3370 = vpack.c.b16 %v3330, %v3326
    %v3371 = vpack.c.b16 %v3335, %v3331
    %v3372 = vpack.c.b16 %v3336, %v3332
    %v3373 = vpack.c.b16 %v3337, %v3333
    %v3374 = vpack.c.b16 %v3338, %v3334
    %v3375 = vpack.c.b16 %v3343, %v3339
    %v3376 = vpack.c.b16 %v3344, %v3340
    %v3377 = vpack.c.b16 %v3345, %v3341
    %v3378 = vpack.c.b16 %v3346, %v3342
    %3411 = vmatprep.subr.bf16.mxu0 %v3348
    %3412 = vmatpush1.bf16.msra.mxu0 %v3347
    %3413 = vmatprep.subr.bf16.mxu0 %v3352
    %3414 = vmatpush1.bf16.msra.mxu0 %v3351
    %3415 = vmatprep.subr.bf16.mxu0 %v3356
    %3416 = vmatpush1.bf16.msra.mxu0 %v3355
    %3417 = vmatprep.subr.bf16.mxu0 %v3360
    %3418 = vmatpush1.bf16.msra.mxu0 %v3359
    %3419 = vmatprep.subr.bf16.mxu0 %v3364
    %3420 = vmatpush1.bf16.msra.mxu0 %v3363
    %3421 = vmatprep.subr.bf16.mxu0 %v3368
    %3422 = vmatpush1.bf16.msra.mxu0 %v3367
    %3423 = vmatprep.subr.bf16.mxu0 %v3372
    %3424 = vmatpush1.bf16.msra.mxu0 %v3371
    %3425 = vmatprep.subr.bf16.mxu0 %v3376
    %3426 = vmatpush1.bf16.msra.mxu0 %v3375
    %3427 = vmatprep.subr.bf16.mxu0 0
    %3428 = vmatpush1.bf16.msra.mxu0 0
    %3429 = vmatprep.subr.bf16.mxu0 0
    %3430 = vmatpush1.bf16.msra.mxu0 0
    %3431 = vmatprep.subr.bf16.mxu0 0
    %3432 = vmatpush1.bf16.msra.mxu0 0
    %3433 = vmatprep.subr.bf16.mxu0 0
    %3434 = vmatpush1.bf16.msra.mxu0 0
    %3435 = vmatprep.subr.bf16.mxu0 0
    %3436 = vmatpush1.bf16.msra.mxu0 0
    %3437 = vmatprep.subr.bf16.mxu0 0
    %3438 = vmatpush1.bf16.msra.mxu0 0
    %3439 = vmatprep.subr.bf16.mxu0 0
    %3440 = vmatpush1.bf16.msra.mxu0 0
    %3441 = vmatprep.subr.bf16.mxu0 0
    %3442 = vmatpush1.bf16.msra.mxu0 0
    %3443 = vmatprep.mubr.bf16.mxu0 0
    %3444 = vmatmul.mubr.bf16.gmra.mrb[0].mxu0 %v3196
    %v3445 = vpop.f32.mrb[0].mxu0
    %v3446 = vadd.f32 %v3234, %v3445
    %v3447 = vpop.f32.mrb[0].mxu0
    %v3448 = vadd.f32 %v3238, %v3447
    %v3449 = vpop.f32.mrb[0].mxu0
    %v3450 = vadd.f32 %v3234, %v3449
    %v3451 = vpop.f32.mrb[0].mxu0
    %v3452 = vadd.f32 %v3238, %v3451
    %3453 = vdwg.mxu0
    %3454 = vmatprep.subr.bf16.mxu0 %v3350
    %3455 = vmatpush1.bf16.msra.mxu0 %v3349
    %3456 = vmatprep.subr.bf16.mxu0 %v3354
    %3457 = vmatpush1.bf16.msra.mxu0 %v3353
    %3458 = vmatprep.subr.bf16.mxu0 %v3358
    %3459 = vmatpush1.bf16.msra.mxu0 %v3357
    %3460 = vmatprep.subr.bf16.mxu0 %v3362
    %3461 = vmatpush1.bf16.msra.mxu0 %v3361
    %3462 = vmatprep.subr.bf16.mxu0 %v3366
    %3463 = vmatpush1.bf16.msra.mxu0 %v3365
    %3464 = vmatprep.subr.bf16.mxu0 %v3370
    %3465 = vmatpush1.bf16.msra.mxu0 %v3369
    %3466 = vmatprep.subr.bf16.mxu0 %v3374
    %3467 = vmatpush1.bf16.msra.mxu0 %v3373
    %3468 = vmatprep.subr.bf16.mxu0 %v3378
    %3469 = vmatpush1.bf16.msra.mxu0 %v3377
    %3470 = vmatprep.subr.bf16.mxu0 0
    %3471 = vmatpush1.bf16.msra.mxu0 0
    %3472 = vmatprep.subr.bf16.mxu0 0
    %3473 = vmatpush1.bf16.msra.mxu0 0
    %3474 = vmatprep.subr.bf16.mxu0 0
    %3475 = vmatpush1.bf16.msra.mxu0 0
    %3476 = vmatprep.subr.bf16.mxu0 0
    %3477 = vmatpush1.bf16.msra.mxu0 0
    %3478 = vmatprep.subr.bf16.mxu0 0
    %3479 = vmatpush1.bf16.msra.mxu0 0
    %3480 = vmatprep.subr.bf16.mxu0 0
    %3481 = vmatpush1.bf16.msra.mxu0 0
    %3482 = vmatprep.subr.bf16.mxu0 0
    %3483 = vmatpush1.bf16.msra.mxu0 0
    %3484 = vmatprep.subr.bf16.mxu0 0
    %3485 = vmatpush1.bf16.msra.mxu0 0
    %3486 = vmatprep.mubr.bf16.mxu0 0
    %3487 = vmatmul.mubr.bf16.gmra.mrb[0].mxu0 %v3196
    %v3488 = vpop.f32.mrb[0].mxu0
    %v3489 = vadd.f32 %v3242, %v3488
    %v3490 = vpop.f32.mrb[0].mxu0
    %v3491 = vadd.f32 %v3246, %v3490
    %v3492 = vpop.f32.mrb[0].mxu0
    %v3493 = vadd.f32 %v3242, %v3492
    %v3494 = vpop.f32.mrb[0].mxu0
    %v3495 = vadd.f32 %v3246, %v3494
    %3496 = vdwg.mxu0
    %vm3497 = vcmp.gt.f32.partialorder %v3446, 0.0
    %vm3498 = vcmp.gt.f32.partialorder %v3448, 0.0
    %vm3499 = vcmp.gt.f32.partialorder %v3489, 0.0
    %vm3500 = vcmp.gt.f32.partialorder %v3491, 0.0
    %vm3501 = vcmp.gt.f32.partialorder %v3450, 0.0
    %vm3502 = vcmp.gt.f32.partialorder %v3452, 0.0
    %vm3503 = vcmp.gt.f32.partialorder %v3493, 0.0
    %vm3504 = vcmp.gt.f32.partialorder %v3495, 0.0
    %v3505 = vmul.f32 %v3446, 0.01
    %v3506 = vmul.f32 %v3448, 0.01
    %v3507 = vmul.f32 %v3489, 0.01
    %v3508 = vmul.f32 %v3491, 0.01
    %v3509 = vmul.f32 %v3450, 0.01
    %v3510 = vmul.f32 %v3452, 0.01
    %v3511 = vmul.f32 %v3493, 0.01
    %v3512 = vmul.f32 %v3495, 0.01
    %v3513 = vsel %vm3497, %v3446, %v3505
    %v3514 = vsel %vm3498, %v3448, %v3506
    %v3515 = vsel %vm3499, %v3489, %v3507
    %v3516 = vsel %vm3500, %v3491, %v3508
    %v3517 = vsel %vm3501, %v3450, %v3509
    %v3518 = vsel %vm3502, %v3452, %v3510
    %v3519 = vsel %vm3503, %v3493, %v3511
    %v3520 = vsel %vm3504, %v3495, %v3512
    %v3521 = vpack.c.bf16 %v3517, %v3513
    %v3522 = vpack.c.bf16 %v3518, %v3514
    %v3523 = vpack.c.bf16 %v3519, %v3515
    %v3524 = vpack.c.bf16 %v3520, %v3516
    %v3525 = vld [vmem:[#allocation7] sm:$0xf]
    %v3526 = vld [vmem:[#allocation7 + $0x4] sm:$0xf]
    %v3527 = vld [vmem:[#allocation7 + $0x8] sm:$0xf]
    %v3528 = vld [vmem:[#allocation7 + $0xc] sm:$0xf]
    %v3529 = vld [vmem:[#allocation7 + $0x10] sm:$0xf]
    %v3530 = vld [vmem:[#allocation7 + $0x14] sm:$0xf]
    %v3531 = vld [vmem:[#allocation7 + $0x18] sm:$0xf]
    %v3532 = vld [vmem:[#allocation7 + $0x1c] sm:$0xf]
    %v3533 = vld [vmem:[#allocation7 + $0x20] sm:$0xf]
    %v3534 = vld [vmem:[#allocation7 + $0x24] sm:$0xf]
    %v3535 = vld [vmem:[#allocation7 + $0x28] sm:$0xf]
    %v3536 = vld [vmem:[#allocation7 + $0x2c] sm:$0xf]
    %v3537 = vld [vmem:[#allocation7 + $0x30] sm:$0xf]
    %v3538 = vld [vmem:[#allocation7 + $0x34] sm:$0xf]
    %v3539 = vld [vmem:[#allocation7 + $0x38] sm:$0xf]
    %v3540 = vld [vmem:[#allocation7 + $0x3c] sm:$0xf]
    %v3541 = vld [vmem:[#allocation7 + $0x40] sm:$0xf]
    %v3542 = vld [vmem:[#allocation7 + $0x44] sm:$0xf]
    %v3543 = vld [vmem:[#allocation7 + $0x48] sm:$0xf]
    %v3544 = vld [vmem:[#allocation7 + $0x4c] sm:$0xf]
    %v3545 = vld [vmem:[#allocation7 + $0x50] sm:$0xf]
    %v3546 = vld [vmem:[#allocation7 + $0x54] sm:$0xf]
    %v3547 = vld [vmem:[#allocation7 + $0x58] sm:$0xf]
    %v3548 = vld [vmem:[#allocation7 + $0x5c] sm:$0xf]
    %v3549 = vld [vmem:[#allocation7 + $0x60] sm:$0xf]
    %v3550 = vld [vmem:[#allocation7 + $0x64] sm:$0xf]
    %v3551 = vld [vmem:[#allocation7 + $0x68] sm:$0xf]
    %v3552 = vld [vmem:[#allocation7 + $0x6c] sm:$0xf]
    %v3553 = vld [vmem:[#allocation7 + $0x70] sm:$0xf]
    %v3554 = vld [vmem:[#allocation7 + $0x74] sm:$0xf]
    %v3555 = vld [vmem:[#allocation7 + $0x78] sm:$0xf]
    %v3556 = vld [vmem:[#allocation7 + $0x7c] sm:$0xf]
    %v3557 = vld [vmem:[#allocation7 + $0x80] sm:$0xf]
    %v3558 = vld [vmem:[#allocation7 + $0x84] sm:$0xf]
    %v3559 = vld [vmem:[#allocation7 + $0x88] sm:$0xf]
    %v3560 = vld [vmem:[#allocation7 + $0x8c] sm:$0xf]
    %v3561 = vld [vmem:[#allocation7 + $0x90] sm:$0xf]
    %v3562 = vld [vmem:[#allocation7 + $0x94] sm:$0xf]
    %v3563 = vld [vmem:[#allocation7 + $0x98] sm:$0xf]
    %v3564 = vld [vmem:[#allocation7 + $0x9c] sm:$0xf]
    %v3565 = vld [vmem:[#allocation7 + $0xa0] sm:$0xf]
    %v3566 = vld [vmem:[#allocation7 + $0xa4] sm:$0xf]
    %v3567 = vld [vmem:[#allocation7 + $0xa8] sm:$0xf]
    %v3568 = vld [vmem:[#allocation7 + $0xac] sm:$0xf]
    %v3569 = vld [vmem:[#allocation7 + $0xb0] sm:$0xf]
    %v3570 = vld [vmem:[#allocation7 + $0xb4] sm:$0xf]
    %v3571 = vld [vmem:[#allocation7 + $0xb8] sm:$0xf]
    %v3572 = vld [vmem:[#allocation7 + $0xbc] sm:$0xf]
    %v3573 = vld [vmem:[#allocation7 + $0xc0] sm:$0xf]
    %v3574 = vld [vmem:[#allocation7 + $0xc4] sm:$0xf]
    %v3575 = vld [vmem:[#allocation7 + $0xc8] sm:$0xf]
    %v3576 = vld [vmem:[#allocation7 + $0xcc] sm:$0xf]
    %v3577 = vld [vmem:[#allocation7 + $0xd0] sm:$0xf]
    %v3578 = vld [vmem:[#allocation7 + $0xd4] sm:$0xf]
    %v3579 = vld [vmem:[#allocation7 + $0xd8] sm:$0xf]
    %v3580 = vld [vmem:[#allocation7 + $0xdc] sm:$0xf]
    %v3581 = vld [vmem:[#allocation7 + $0xe0] sm:$0xf]
    %v3582 = vld [vmem:[#allocation7 + $0xe4] sm:$0xf]
    %v3583 = vld [vmem:[#allocation7 + $0xe8] sm:$0xf]
    %v3584 = vld [vmem:[#allocation7 + $0xec] sm:$0xf]
    %v3585 = vld [vmem:[#allocation7 + $0xf0] sm:$0xf]
    %v3586 = vld [vmem:[#allocation7 + $0xf4] sm:$0xf]
    %v3587 = vld [vmem:[#allocation7 + $0xf8] sm:$0xf]
    %v3588 = vld [vmem:[#allocation7 + $0xfc] sm:$0xf]
    %v3589 = vld [vmem:[%s10] sm:$0x1]
    %v3591 = vlaneseq
    %v3592 = vshrl.u32 %v3591, 7
    %v3593 = vsub.s32 0, %v3592
    %v3594 = vrot.slane %v3589, %v3593
    %v3660 = vunpack.c.l.b16 %v3525
    %v3661 = vunpack.c.l.b16 %v3526
    %v3662 = vunpack.c.l.b16 %v3527
    %v3663 = vunpack.c.l.b16 %v3528
    %v3664 = vunpack.c.l.b16 %v3529
    %v3665 = vunpack.c.l.b16 %v3530
    %v3666 = vunpack.c.l.b16 %v3531
    %v3667 = vunpack.c.l.b16 %v3532
    %v3668 = vunpack.c.l.b16 %v3533
    %v3669 = vunpack.c.l.b16 %v3534
    %v3670 = vunpack.c.l.b16 %v3535
    %v3671 = vunpack.c.l.b16 %v3536
    %v3672 = vunpack.c.l.b16 %v3537
    %v3673 = vunpack.c.l.b16 %v3538
    %v3674 = vunpack.c.l.b16 %v3539
    %v3675 = vunpack.c.l.b16 %v3540
    %v3676 = vunpack.c.l.b16 %v3541
    %v3677 = vunpack.c.l.b16 %v3542
    %v3678 = vunpack.c.l.b16 %v3543
    %v3679 = vunpack.c.l.b16 %v3544
    %v3680 = vunpack.c.l.b16 %v3545
    %v3681 = vunpack.c.l.b16 %v3546
    %v3682 = vunpack.c.l.b16 %v3547
    %v3683 = vunpack.c.l.b16 %v3548
    %v3684 = vunpack.c.l.b16 %v3549
    %v3685 = vunpack.c.l.b16 %v3550
    %v3686 = vunpack.c.l.b16 %v3551
    %v3687 = vunpack.c.l.b16 %v3552
    %v3688 = vunpack.c.l.b16 %v3553
    %v3689 = vunpack.c.l.b16 %v3554
    %v3690 = vunpack.c.l.b16 %v3555
    %v3691 = vunpack.c.l.b16 %v3556
    %v3692 = vunpack.c.l.b16 %v3557
    %v3693 = vunpack.c.l.b16 %v3558
    %v3694 = vunpack.c.l.b16 %v3559
    %v3695 = vunpack.c.l.b16 %v3560
    %v3696 = vunpack.c.l.b16 %v3561
    %v3697 = vunpack.c.l.b16 %v3562
    %v3698 = vunpack.c.l.b16 %v3563
    %v3699 = vunpack.c.l.b16 %v3564
    %v3700 = vunpack.c.l.b16 %v3565
    %v3701 = vunpack.c.l.b16 %v3566
    %v3702 = vunpack.c.l.b16 %v3567
    %v3703 = vunpack.c.l.b16 %v3568
    %v3704 = vunpack.c.l.b16 %v3569
    %v3705 = vunpack.c.l.b16 %v3570
    %v3706 = vunpack.c.l.b16 %v3571
    %v3707 = vunpack.c.l.b16 %v3572
    %v3708 = vunpack.c.l.b16 %v3573
    %v3709 = vunpack.c.l.b16 %v3574
    %v3710 = vunpack.c.l.b16 %v3575
    %v3711 = vunpack.c.l.b16 %v3576
    %v3712 = vunpack.c.l.b16 %v3577
    %v3713 = vunpack.c.l.b16 %v3578
    %v3714 = vunpack.c.l.b16 %v3579
    %v3715 = vunpack.c.l.b16 %v3580
    %v3716 = vunpack.c.l.b16 %v3581
    %v3717 = vunpack.c.l.b16 %v3582
    %v3718 = vunpack.c.l.b16 %v3583
    %v3719 = vunpack.c.l.b16 %v3584
    %v3720 = vunpack.c.l.b16 %v3585
    %v3721 = vunpack.c.l.b16 %v3586
    %v3722 = vunpack.c.l.b16 %v3587
    %v3723 = vunpack.c.l.b16 %v3588
    %v3724 = vpack.c.b16 %v3661, %v3660
    %v3725 = vpack.c.b16 %v3663, %v3662
    %v3726 = vpack.c.b16 %v3665, %v3664
    %v3727 = vpack.c.b16 %v3667, %v3666
    %v3728 = vpack.c.b16 %v3669, %v3668
    %v3729 = vpack.c.b16 %v3671, %v3670
    %v3730 = vpack.c.b16 %v3673, %v3672
    %v3731 = vpack.c.b16 %v3675, %v3674
    %v3732 = vpack.c.b16 %v3677, %v3676
    %v3733 = vpack.c.b16 %v3679, %v3678
    %v3734 = vpack.c.b16 %v3681, %v3680
    %v3735 = vpack.c.b16 %v3683, %v3682
    %v3736 = vpack.c.b16 %v3685, %v3684
    %v3737 = vpack.c.b16 %v3687, %v3686
    %v3738 = vpack.c.b16 %v3689, %v3688
    %v3739 = vpack.c.b16 %v3691, %v3690
    %v3740 = vpack.c.b16 %v3693, %v3692
    %v3741 = vpack.c.b16 %v3695, %v3694
    %v3742 = vpack.c.b16 %v3697, %v3696
    %v3743 = vpack.c.b16 %v3699, %v3698
    %v3744 = vpack.c.b16 %v3701, %v3700
    %v3745 = vpack.c.b16 %v3703, %v3702
    %v3746 = vpack.c.b16 %v3705, %v3704
    %v3747 = vpack.c.b16 %v3707, %v3706
    %v3748 = vpack.c.b16 %v3709, %v3708
    %v3749 = vpack.c.b16 %v3711, %v3710
    %v3750 = vpack.c.b16 %v3713, %v3712
    %v3751 = vpack.c.b16 %v3715, %v3714
    %v3752 = vpack.c.b16 %v3717, %v3716
    %v3753 = vpack.c.b16 %v3719, %v3718
    %v3754 = vpack.c.b16 %v3721, %v3720
    %v3755 = vpack.c.b16 %v3723, %v3722
    %3788 = vmatprep.subr.bf16.mxu0 0
    %3789 = vmatpush1.bf16.msra.mxu0 %v3724
    %3790 = vmatprep.subr.bf16.mxu0 0
    %3791 = vmatpush1.bf16.msra.mxu0 %v3725
    %3792 = vmatprep.subr.bf16.mxu0 0
    %3793 = vmatpush1.bf16.msra.mxu0 %v3726
    %3794 = vmatprep.subr.bf16.mxu0 0
    %3795 = vmatpush1.bf16.msra.mxu0 %v3727
    %3796 = vmatprep.subr.bf16.mxu0 0
    %3797 = vmatpush1.bf16.msra.mxu0 %v3728
    %3798 = vmatprep.subr.bf16.mxu0 0
    %3799 = vmatpush1.bf16.msra.mxu0 %v3729
    %3800 = vmatprep.subr.bf16.mxu0 0
    %3801 = vmatpush1.bf16.msra.mxu0 %v3730
    %3802 = vmatprep.subr.bf16.mxu0 0
    %3803 = vmatpush1.bf16.msra.mxu0 %v3731
    %3804 = vmatprep.subr.bf16.mxu0 0
    %3805 = vmatpush1.bf16.msra.mxu0 %v3732
    %3806 = vmatprep.subr.bf16.mxu0 0
    %3807 = vmatpush1.bf16.msra.mxu0 %v3733
    %3808 = vmatprep.subr.bf16.mxu0 0
    %3809 = vmatpush1.bf16.msra.mxu0 %v3734
    %3810 = vmatprep.subr.bf16.mxu0 0
    %3811 = vmatpush1.bf16.msra.mxu0 %v3735
    %3812 = vmatprep.subr.bf16.mxu0 0
    %3813 = vmatpush1.bf16.msra.mxu0 %v3736
    %3814 = vmatprep.subr.bf16.mxu0 0
    %3815 = vmatpush1.bf16.msra.mxu0 %v3737
    %3816 = vmatprep.subr.bf16.mxu0 0
    %3817 = vmatpush1.bf16.msra.mxu0 %v3738
    %3818 = vmatprep.subr.bf16.mxu0 0
    %3819 = vmatpush1.bf16.msra.mxu0 %v3739
    %3820 = vmatprep.mubr.bf16.mxu0 %v3522
    %3821 = vmatmul.mubr.bf16.gmra.mrb[0].mxu0 %v3521
    %v3822 = vpop.f32.mrb[0].mxu0
    %v3823 = vadd.f32 %v3594, %v3822
    %v3824 = vpop.f32.mrb[0].mxu0
    %v3825 = vpop.f32.mrb[0].mxu0
    %v3826 = vadd.f32 %v3594, %v3825
    %v3827 = vpop.f32.mrb[0].mxu0
    %3828 = vdwg.mxu0
    %3829 = vmatprep.subr.bf16.mxu0 0
    %3830 = vmatpush1.bf16.msra.mxu0 %v3740
    %3831 = vmatprep.subr.bf16.mxu0 0
    %3832 = vmatpush1.bf16.msra.mxu0 %v3741
    %3833 = vmatprep.subr.bf16.mxu0 0
    %3834 = vmatpush1.bf16.msra.mxu0 %v3742
    %3835 = vmatprep.subr.bf16.mxu0 0
    %3836 = vmatpush1.bf16.msra.mxu0 %v3743
    %3837 = vmatprep.subr.bf16.mxu0 0
    %3838 = vmatpush1.bf16.msra.mxu0 %v3744
    %3839 = vmatprep.subr.bf16.mxu0 0
    %3840 = vmatpush1.bf16.msra.mxu0 %v3745
    %3841 = vmatprep.subr.bf16.mxu0 0
    %3842 = vmatpush1.bf16.msra.mxu0 %v3746
    %3843 = vmatprep.subr.bf16.mxu0 0
    %3844 = vmatpush1.bf16.msra.mxu0 %v3747
    %3845 = vmatprep.subr.bf16.mxu0 0
    %3846 = vmatpush1.bf16.msra.mxu0 %v3748
    %3847 = vmatprep.subr.bf16.mxu0 0
    %3848 = vmatpush1.bf16.msra.mxu0 %v3749
    %3849 = vmatprep.subr.bf16.mxu0 0
    %3850 = vmatpush1.bf16.msra.mxu0 %v3750
    %3851 = vmatprep.subr.bf16.mxu0 0
    %3852 = vmatpush1.bf16.msra.mxu0 %v3751
    %3853 = vmatprep.subr.bf16.mxu0 0
    %3854 = vmatpush1.bf16.msra.mxu0 %v3752
    %3855 = vmatprep.subr.bf16.mxu0 0
    %3856 = vmatpush1.bf16.msra.mxu0 %v3753
    %3857 = vmatprep.subr.bf16.mxu0 0
    %3858 = vmatpush1.bf16.msra.mxu0 %v3754
    %3859 = vmatprep.subr.bf16.mxu0 0
    %3860 = vmatpush1.bf16.msra.mxu0 %v3755
    %3861 = vmatprep.mubr.bf16.mxu0 %v3524
    %3862 = vmatmul.mubr.bf16.gmra.mrb[0].mxu0 %v3523
    %v3863 = vpop.f32.mrb[0].mxu0
    %v3864 = vadd.f32 %v3823, %v3863
    %v3865 = vpop.f32.mrb[0].mxu0
    %v3866 = vpop.f32.mrb[0].mxu0
    %v3867 = vadd.f32 %v3826, %v3866
    %v3868 = vpop.f32.mrb[0].mxu0
    %3869 = vdwg.mxu0
    %v3870 = vmax.f32 %v3864, 0.0
    %v3871 = vmax.f32 %v3867, 0.0
    %v3872 = vand.u32 2147483647, %v3864
    %v3873 = vand.u32 2147483647, %v3867
    %v3874 = vsub.f32 0.0, %v3872
    %v3875 = vsub.f32 0.0, %v3873
    %v3876 = vmul.f32 %v3874, 1.442695
    %v3877 = vpow.pop %v3876
    %v3878 = vmul.f32 %v3875, 1.442695
    %v3879 = vpow.pop %v3878
    %v3880 = vadd.f32 %v3877, 1.0
    %v3881 = vadd.f32 %v3879, 1.0
    %v3882 = vlog2.pop %v3880
    %v3883 = vmul.f32 %v3882, 0.6931472
    %v3884 = vlog2.pop %v3881
    %v3885 = vmul.f32 %v3884, 0.6931472
    %v3886 = vadd.f32 %v3870, %v3883
    %v3887 = vadd.f32 %v3871, %v3885
    %v3888 = vlaneseq
    %v3889 = vand.u32 %v3888, 127
    %vm3890 = vcmp.lt.s32.totalorder %v3889, 0
    %v3891 = vsub.s32 0, %v3889
    %v3892 = vsel %vm3890, %v3891, %v3889
    %v3893 = vshrl.u32 %v3892, 5
    %v3894 = vand.u32 %v3892, 31
    %v3895 = vsub.s32 0, %v3894
    %v3896 = vsel %vm3890, %v3895, %v3894
    %vm3897 = vcmp.ne.s32.totalorder %v3896, 0
    %vm3898 = vcmp.lt.s32.totalorder %v3896, 0
    %vm3899 = vmand %vm3898, %vm3897
    %v3900 = vadd.s32 %v3896, 32
    %v3901 = vsel %vm3899, %v3900, %v3896
    %vm3902 = vcmp.eq.s32.totalorder %v3901, 1
    %v3903 = vsub.f32 %v3864, %v3886
    %v3904 = vsub.f32 %v3867, %v3887
    %v3905 = vsub.f32 0.0, %v3886
    %v3906 = vsub.f32 0.0, %v3887
    %v3907 = vsel %vm3902, %v3903, %v3905
    %v3908 = vsel %vm3902, %v3904, %v3906
    %3909 = vst [vmem:[%s11] sm:$0xff] %v3907
    %3910 = vst [vmem:[%s11 + $0x8] sm:$0xff] %v3908
    // Predicated region
    $region62: #{spectrogram_model_head.1} parent=1 // pred_check
      _
    $region63: #{spectrogram_model_head.1} parent=1 // pred_check_branch
      %3912 = sbr.rel (0) target = $region65
    $region64: #{spectrogram_model_head.1} parent=1 // pred_region
      _
    $region65: #{spectrogram_model_head.1} parent=1 // pred_fallthru
      _
    // Predicated region
    $region66: #{spectrogram_model_head.1} parent=1 // pred_check
      _
    $region67: #{spectrogram_model_head.1} parent=1 // pred_check_branch
      %3914 = sbr.rel (0) target = $region69
    $region68: #{spectrogram_model_head.1} parent=1 // pred_region
      _
    $region69: #{spectrogram_model_head.1} parent=1 // pred_fallthru
      _
    %3915 = vsyncpa [#allocation3], 1
    %3916 = vsyncpa [#allocation5], 1
    %3917 = vsyncpa [#allocation8], 1

</llo_original>
